<compile_context>
chip_gen: v7x
topology: tpu7x:2x2x1
jax: 0.10.0
libtpu: 0.0.40
codegen_flags: <defaults>
</compile_context>

<pallas_src>
import functools
import math

import jax
import jax.numpy as jnp
from jax.experimental import pallas as pl
from jax.experimental.pallas import tpu as pltpu


# ----------------------------------------------------------------------------
# helpers
# ----------------------------------------------------------------------------
def _compiler_params():
    # single parallel grid axis -> v7x dual-TC can split it; explicit VMEM
    # budget keeps the tiling portable to v7x's 64 MiB physical VMEM.
    return pltpu.CompilerParams(
        dimension_semantics=("parallel",),
        vmem_limit_bytes=48 * 1024 * 1024,
    )


def _row_tile(m, target=256):
    for t in (target, 128, 64, 32, 16, 8):
        if t <= m and m % t == 0:
            return t
    return m


def _pad_to_128(n):
    return ((n + 127) // 128) * 128


# ----------------------------------------------------------------------------
# Pallas kernels
# ----------------------------------------------------------------------------
def _posenc_kernel(x_ref, pe_ref, o_ref, *, scale):
    # x: (S, D) slice of one batch element; pe: (S, D) broadcast in-kernel.
    o_ref[...] = (x_ref[...] * scale + pe_ref[...]).astype(o_ref.dtype)


def _layernorm(x, g, b, eps):
    mu = jnp.mean(x, axis=-1, keepdims=True)
    var = jnp.mean(jnp.square(x - mu), axis=-1, keepdims=True)
    return (x - mu) * jax.lax.rsqrt(var + eps) * g + b


def _ffn_kernel(x_ref, g_ref, b_ref, w1_ref, b1_ref, w2_ref, b2_ref, o_ref,
                *, eps, res_scale):
    # fused: LayerNorm -> Linear + Swish -> Linear -> residual add (epilogue)
    x = x_ref[...].astype(jnp.float32)
    h = _layernorm(x, g_ref[...], b_ref[...], eps)
    h = jnp.dot(h, w1_ref[...], preferred_element_type=jnp.float32) + b1_ref[...]
    h = h * jax.nn.sigmoid(h)                                   # Swish
    h = jnp.dot(h, w2_ref[...], preferred_element_type=jnp.float32) + b2_ref[...]
    o_ref[...] = (x + res_scale * h).astype(o_ref.dtype)


def _ln_matmul_kernel(x_ref, g_ref, b_ref, w_ref, wb_ref, o_ref, *, eps):
    # fused: LayerNorm -> matmul (used for the concatenated QKV projection)
    x = x_ref[...].astype(jnp.float32)
    h = _layernorm(x, g_ref[...], b_ref[...], eps)
    y = jnp.dot(h, w_ref[...], preferred_element_type=jnp.float32) + wb_ref[...]
    o_ref[...] = y.astype(o_ref.dtype)


def _matmul_res_kernel(a_ref, x_ref, w_ref, b_ref, o_ref):
    # fused: matmul + bias + residual add (out-projection / pointwise conv 2)
    a = a_ref[...].astype(jnp.float32)
    y = jnp.dot(a, w_ref[...], preferred_element_type=jnp.float32) + b_ref[...]
    o_ref[...] = (x_ref[...].astype(jnp.float32) + y).astype(o_ref.dtype)


def _ln_glu_kernel(x_ref, g_ref, b_ref, wa_ref, ba_ref, wg_ref, bg_ref, o_ref,
                   *, eps):
    # fused: LayerNorm -> pointwise conv1 emitted as (value, gate) -> GLU.
    # Emitting two lane-dense matmuls avoids a lane-dim split for GLU.
    x = x_ref[...].astype(jnp.float32)
    h = _layernorm(x, g_ref[...], b_ref[...], eps)
    val = jnp.dot(h, wa_ref[...], preferred_element_type=jnp.float32) + ba_ref[...]
    gate = jnp.dot(h, wg_ref[...], preferred_element_type=jnp.float32) + bg_ref[...]
    o_ref[...] = (val * jax.nn.sigmoid(gate)).astype(o_ref.dtype)


def _dwconv_bn_swish_kernel(x_ref, w_ref, cb_ref, bng_ref, bnb_ref, bnm_ref,
                            bnv_ref, o_ref, *, K, eps):
    # fused: depthwise temporal conv (zero pad done in-VMEM, no wrapper pad)
    #        + eval-mode BatchNorm + Swish, per batch element (grid over B).
    x = x_ref[...].astype(jnp.float32)            # (S, D)
    S = x.shape[0]
    pad = (K - 1) // 2
    zeros = jnp.zeros((pad, x.shape[1]), jnp.float32)
    xp = jnp.concatenate([zeros, x, zeros], axis=0)   # (S + K - 1, D)
    w = w_ref[...].astype(jnp.float32)            # (K, D), loaded once (hoisted)
    acc = jnp.zeros_like(x)
    for k in range(K):                            # static unrolled taps
        acc = acc + xp[k:k + S, :] * w[k]
    acc = acc + cb_ref[...]
    y = (acc - bnm_ref[...]) * jax.lax.rsqrt(bnv_ref[...] + eps)
    y = y * bng_ref[...] + bnb_ref[...]
    o_ref[...] = (y * jax.nn.sigmoid(y)).astype(o_ref.dtype)


def _attn_kernel(qkv_ref, o_ref, *, H, dh, scale):
    # Per-batch multi-head self-attention on fused QKV input (S, 3D).
    # TODO(synk): flash-style KV tiling for very long sequences not implemented
    #             (full-S scores per head are held in VMEM, per batch element).
    qkv = qkv_ref[...].astype(jnp.float32)
    S = qkv.shape[0]
    D = H * dh
    outs = []
    for h in range(H):                            # small static head loop
        q = qkv[:, h * dh:(h + 1) * dh] * scale
        k = qkv[:, D + h * dh:D + (h + 1) * dh]
        v = qkv[:, 2 * D + h * dh:2 * D + (h + 1) * dh]
        s = jax.lax.dot_general(q, k, (((1,), (1,)), ((), ())),
                                preferred_element_type=jnp.float32)   # (S, S)
        s = s - jnp.max(s, axis=-1, keepdims=True)
        p = jnp.exp(s)
        p = p * pl.reciprocal(jnp.sum(p, axis=-1, keepdims=True), approx=True)
        outs.append(jnp.dot(p, v, preferred_element_type=jnp.float32))
    o_ref[...] = jnp.concatenate(outs, axis=-1).astype(o_ref.dtype)


def _layernorm_kernel(x_ref, g_ref, b_ref, o_ref, *, eps):
    x = x_ref[...].astype(jnp.float32)
    o_ref[...] = _layernorm(x, g_ref[...], b_ref[...], eps).astype(o_ref.dtype)


def _matmul_bias_kernel(x_ref, w_ref, b_ref, o_ref):
    y = jnp.dot(x_ref[...], w_ref[...], preferred_element_type=jnp.float32)
    o_ref[...] = (y + b_ref[...]).astype(o_ref.dtype)


# ----------------------------------------------------------------------------
# pallas_call wrappers
# ----------------------------------------------------------------------------
def posenc(x_bsd, pe_sd, scale):
    B, S, D = x_bsd.shape
    return pl.pallas_call(
        functools.partial(_posenc_kernel, scale=scale),
        out_shape=jax.ShapeDtypeStruct((B, S, D), x_bsd.dtype),
        grid=(B,),
        in_specs=[pl.BlockSpec((None, S, D), lambda b: (b, 0, 0)),
                  pl.BlockSpec((S, D), lambda b: (0, 0))],
        out_specs=pl.BlockSpec((None, S, D), lambda b: (b, 0, 0)),
        compiler_params=_compiler_params(),
    )(x_bsd, pe_sd)


def ffn(x, ln_g, ln_b, w1, b1, w2, b2, eps, res_scale):
    M, D = x.shape
    F = w1.shape[1]
    TM = _row_tile(M)
    return pl.pallas_call(
        functools.partial(_ffn_kernel, eps=eps, res_scale=res_scale),
        out_shape=jax.ShapeDtypeStruct((M, D), x.dtype),
        grid=(M // TM,),
        in_specs=[
            pl.BlockSpec((TM, D), lambda i: (i, 0)),
            pl.BlockSpec((1, D), lambda i: (0, 0)),
            pl.BlockSpec((1, D), lambda i: (0, 0)),
            pl.BlockSpec((D, F), lambda i: (0, 0)),
            pl.BlockSpec((1, F), lambda i: (0, 0)),
            pl.BlockSpec((F, D), lambda i: (0, 0)),
            pl.BlockSpec((1, D), lambda i: (0, 0)),
        ],
        out_specs=pl.BlockSpec((TM, D), lambda i: (i, 0)),
        compiler_params=_compiler_params(),
    )(x, ln_g, ln_b, w1, b1, w2, b2)


def ln_matmul(x, ln_g, ln_b, w, b, eps):
    M, D = x.shape
    N = w.shape[1]
    TM = _row_tile(M)
    return pl.pallas_call(
        functools.partial(_ln_matmul_kernel, eps=eps),
        out_shape=jax.ShapeDtypeStruct((M, N), x.dtype),
        grid=(M // TM,),
        in_specs=[
            pl.BlockSpec((TM, D), lambda i: (i, 0)),
            pl.BlockSpec((1, D), lambda i: (0, 0)),
            pl.BlockSpec((1, D), lambda i: (0, 0)),
            pl.BlockSpec((D, N), lambda i: (0, 0)),
            pl.BlockSpec((1, N), lambda i: (0, 0)),
        ],
        out_specs=pl.BlockSpec((TM, N), lambda i: (i, 0)),
        compiler_params=_compiler_params(),
    )(x, ln_g, ln_b, w, b)


def matmul_residual(a, x, w, b):
    M, Da = a.shape
    D = w.shape[1]
    TM = _row_tile(M)
    return pl.pallas_call(
        _matmul_res_kernel,
        out_shape=jax.ShapeDtypeStruct((M, D), x.dtype),
        grid=(M // TM,),
        in_specs=[
            pl.BlockSpec((TM, Da), lambda i: (i, 0)),
            pl.BlockSpec((TM, D), lambda i: (i, 0)),
            pl.BlockSpec((Da, D), lambda i: (0, 0)),
            pl.BlockSpec((1, D), lambda i: (0, 0)),
        ],
        out_specs=pl.BlockSpec((TM, D), lambda i: (i, 0)),
        compiler_params=_compiler_params(),
    )(a, x, w, b)


def ln_glu(x, ln_g, ln_b, wa, ba, wg, bg, eps):
    M, D = x.shape
    Dg = wa.shape[1]
    TM = _row_tile(M)
    return pl.pallas_call(
        functools.partial(_ln_glu_kernel, eps=eps),
        out_shape=jax.ShapeDtypeStruct((M, Dg), x.dtype),
        grid=(M // TM,),
        in_specs=[
            pl.BlockSpec((TM, D), lambda i: (i, 0)),
            pl.BlockSpec((1, D), lambda i: (0, 0)),
            pl.BlockSpec((1, D), lambda i: (0, 0)),
            pl.BlockSpec((D, Dg), lambda i: (0, 0)),
            pl.BlockSpec((1, Dg), lambda i: (0, 0)),
            pl.BlockSpec((D, Dg), lambda i: (0, 0)),
            pl.BlockSpec((1, Dg), lambda i: (0, 0)),
        ],
        out_specs=pl.BlockSpec((TM, Dg), lambda i: (i, 0)),
        compiler_params=_compiler_params(),
    )(x, ln_g, ln_b, wa, ba, wg, bg)


def conv_dw_bn_swish(h_bsd, dw_w, dw_b, bn_g, bn_b, bn_m, bn_v, K, bn_eps):
    B, S, D = h_bsd.shape
    return pl.pallas_call(
        functools.partial(_dwconv_bn_swish_kernel, K=K, eps=bn_eps),
        out_shape=jax.ShapeDtypeStruct((B, S, D), h_bsd.dtype),
        grid=(B,),
        in_specs=[
            pl.BlockSpec((None, S, D), lambda b: (b, 0, 0)),
            pl.BlockSpec((K, D), lambda b: (0, 0)),
            pl.BlockSpec((1, D), lambda b: (0, 0)),
            pl.BlockSpec((1, D), lambda b: (0, 0)),
            pl.BlockSpec((1, D), lambda b: (0, 0)),
            pl.BlockSpec((1, D), lambda b: (0, 0)),
            pl.BlockSpec((1, D), lambda b: (0, 0)),
        ],
        out_specs=pl.BlockSpec((None, S, D), lambda b: (b, 0, 0)),
        compiler_params=_compiler_params(),
    )(h_bsd, dw_w, dw_b, bn_g, bn_b, bn_m, bn_v)


def attention(qkv_bsd, H, dh, scale):
    B, S, D3 = qkv_bsd.shape
    D = H * dh
    return pl.pallas_call(
        functools.partial(_attn_kernel, H=H, dh=dh, scale=scale),
        out_shape=jax.ShapeDtypeStruct((B, S, D), qkv_bsd.dtype),
        grid=(B,),
        in_specs=[pl.BlockSpec((None, S, D3), lambda b: (b, 0, 0))],
        out_specs=pl.BlockSpec((None, S, D), lambda b: (b, 0, 0)),
        compiler_params=_compiler_params(),
    )(qkv_bsd)


def layernorm(x, g, b, eps):
    M, D = x.shape
    TM = _row_tile(M)
    return pl.pallas_call(
        functools.partial(_layernorm_kernel, eps=eps),
        out_shape=jax.ShapeDtypeStruct((M, D), x.dtype),
        grid=(M // TM,),
        in_specs=[
            pl.BlockSpec((TM, D), lambda i: (i, 0)),
            pl.BlockSpec((1, D), lambda i: (0, 0)),
            pl.BlockSpec((1, D), lambda i: (0, 0)),
        ],
        out_specs=pl.BlockSpec((TM, D), lambda i: (i, 0)),
        compiler_params=_compiler_params(),
    )(x, g, b)


def matmul_bias(x, w, b):
    M, D = x.shape
    N = w.shape[1]
    TM = _row_tile(M)
    return pl.pallas_call(
        _matmul_bias_kernel,
        out_shape=jax.ShapeDtypeStruct((M, N), x.dtype),
        grid=(M // TM,),
        in_specs=[
            pl.BlockSpec((TM, D), lambda i: (i, 0)),
            pl.BlockSpec((D, N), lambda i: (0, 0)),
            pl.BlockSpec((1, N), lambda i: (0, 0)),
        ],
        out_specs=pl.BlockSpec((TM, N), lambda i: (i, 0)),
        compiler_params=_compiler_params(),
    )(x, w, b)


# ----------------------------------------------------------------------------
# Model: parameter init + forward
# ----------------------------------------------------------------------------
def init_params(key, cfg):
    D, F, K, V = cfg["d_model"], cfg["d_ff"], cfg["kernel"], cfg["vocab"]
    E, max_len = cfg["expansion"], cfg["max_len"]
    Dg = E * D // 2                      # GLU output channels
    keys = iter(jax.random.split(key, 1024))

    def xav(shape):
        lim = math.sqrt(6.0 / (shape[0] + shape[-1]))
        return jax.random.uniform(next(keys), shape, jnp.float32, -lim, lim)

    layers = []
    for _ in range(cfg["n_layers"]):
        layers.append(dict(
            ff1_ln_g=jnp.ones((1, D)), ff1_ln_b=jnp.zeros((1, D)),
            ff1_w1=xav((D, F)), ff1_b1=jnp.zeros((1, F)),
            ff1_w2=xav((F, D)), ff1_b2=jnp.zeros((1, D)),
            mhsa_ln_g=jnp.ones((1, D)), mhsa_ln_b=jnp.zeros((1, D)),
            wqkv=jnp.concatenate([xav((D, D)), xav((D, D)), xav((D, D))], axis=1),
            bqkv=jnp.zeros((1, 3 * D)),
            wo=xav((D, D)), bo=jnp.zeros((1, D)),
            conv_ln_g=jnp.ones((1, D)), conv_ln_b=jnp.zeros((1, D)),
            pw1_wa=xav((D, Dg)), pw1_ba=jnp.zeros((1, Dg)),   # GLU value branch
            pw1_wg=xav((D, Dg)), pw1_bg=jnp.zeros((1, Dg)),   # GLU gate branch
            dw_w=xav((K, Dg)), dw_b=jnp.zeros((1, Dg)),
            bn_g=jnp.ones((1, Dg)), bn_b=jnp.zeros((1, Dg)),
            bn_m=jnp.zeros((1, Dg)), bn_v=jnp.ones((1, Dg)),
            pw2_w=xav((Dg, D)), pw2_b=jnp.zeros((1, D)),
            ff2_ln_g=jnp.ones((1, D)), ff2_ln_b=jnp.zeros((1, D)),
            ff2_w1=xav((D, F)), ff2_b1=jnp.zeros((1, F)),
            ff2_w2=xav((F, D)), ff2_b2=jnp.zeros((1, D)),
            fin_ln_g=jnp.ones((1, D)), fin_ln_b=jnp.zeros((1, D)),
        ))

    # sinusoidal positional encoding table (max_len, D)
    pos = jnp.arange(max_len, dtype=jnp.float32)[:, None]
    div = jnp.exp(jnp.arange(0, D, 2, dtype=jnp.float32) * (-math.log(10000.0) / D))
    pe = jnp.zeros((max_len, D), jnp.float32)
    pe = pe.at[:, 0::2].set(jnp.sin(pos * div))
    pe = pe.at[:, 1::2].set(jnp.cos(pos * div))

    # final fc with vocab padded to a 128-lane multiple (lane-dense stores)
    Vp = _pad_to_128(V)
    fc_w = jnp.zeros((D, Vp), jnp.float32).at[:, :V].set(xav((D, V)))
    fc_b = jnp.zeros((1, Vp), jnp.float32)

    return dict(layers=layers, pe=pe, fc_w=fc_w, fc_b=fc_b)


def conformer_encoder(x_sbd, params, cfg):
    S, B, D = x_sbd.shape
    H = cfg["n_head"]
    dh = D // H
    eps = cfg["eps"]
    bn_eps = 1e-5                       # PyTorch BatchNorm1d default
    half = 0.5 if cfg["half_step"] else 1.0
    K = cfg["kernel"]
    V = cfg["vocab"]

    # (S, B, D) -> (B, S, D) once; all later kernels are batch-major so no
    # further wrapper transposes are needed (reshapes below are contiguous).
    x = jnp.transpose(x_sbd, (1, 0, 2))

    # positional encoding: x * sqrt(d_model) + pe  (dropouts = identity)
    x = posenc(x, params["pe"][:S], math.sqrt(D) if cfg["scale"] else 1.0)

    M = B * S
    xf = x.reshape(M, D)
    for lp in params["layers"]:
        # ---- Macaron FFN #1 (fused LN -> Linear+Swish -> Linear -> 0.5*res) ----
        xf = ffn(xf, lp["ff1_ln_g"], lp["ff1_ln_b"],
                 lp["ff1_w1"], lp["ff1_b1"], lp["ff1_w2"], lp["ff1_b2"],
                 eps, half)

        # ---- Multi-head self-attention ----
        # TODO(synk): relative-positional self-attention variant (self_attn_type)
        # not implemented; absolute scaled-dot-product attention is used.
        qkv = ln_matmul(xf, lp["mhsa_ln_g"], lp["mhsa_ln_b"],
                        lp["wqkv"], lp["bqkv"], eps)
        a = attention(qkv.reshape(B, S, 3 * D), H, dh, 1.0 / math.sqrt(dh))
        xf = matmul_residual(a.reshape(M, D), xf, lp["wo"], lp["bo"])

        # ---- Convolution module ----
        h = ln_glu(xf, lp["conv_ln_g"], lp["conv_ln_b"],
                   lp["pw1_wa"], lp["pw1_ba"], lp["pw1_wg"], lp["pw1_bg"], eps)
        Dg = h.shape[1]
        # TODO(synk): training-mode BatchNorm batch statistics not implemented
        # (eval-mode running stats fused into the depthwise-conv kernel).
        hb = conv_dw_bn_swish(h.reshape(B, S, Dg), lp["dw_w"], lp["dw_b"],
                              lp["bn_g"], lp["bn_b"], lp["bn_m"], lp["bn_v"],
                              K, bn_eps)
        xf = matmul_residual(hb.reshape(M, Dg), xf, lp["pw2_w"], lp["pw2_b"])

        # ---- Macaron FFN #2 ----
        xf = ffn(xf, lp["ff2_ln_g"], lp["ff2_ln_b"],
                 lp["ff2_w1"], lp["ff2_b1"], lp["ff2_w2"], lp["ff2_b2"],
                 eps, half)

        # ---- final LayerNorm of the Conformer block ----
        xf = layernorm(xf, lp["fin_ln_g"], lp["fin_ln_b"], eps)

    # output.transpose(0, 1) then fc: x is already (B, S, D) -> (B, S, vocab)
    y = matmul_bias(xf, params["fc_w"], params["fc_b"])   # vocab padded to 128
    return y[:, :V].reshape(B, S, V)


# ----------------------------------------------------------------------------
if __name__ == "__main__":
    cfg = dict(
        vocab=16, max_len=64, n_layers=2, scale=True,
        d_model=32, n_head=4, d_ff=64, eps=1e-5,
        half_step=True, kernel=7, expansion=2,
    )
    key = jax.random.PRNGKey(0)
    pkey, xkey = jax.random.split(key)
    params = init_params(pkey, cfg)

    S, B, D = 8, 2, cfg["d_model"]
    x = jax.random.normal(xkey, (S, B, D), jnp.float32)   # (seq, batch, d_model)

    fwd = jax.jit(lambda xx, pp: conformer_encoder(xx, pp, cfg))
    out = fwd(x, params)
    out = jax.block_until_ready(out)

    assert out.shape == (B, S, cfg["vocab"]), out.shape
    assert bool(jnp.all(jnp.isfinite(out)))
    print("KERNEL_OK")
</pallas_src>

<mosaic_0001>
module attributes {stable_mosaic.version = 11 : i64} {
  func.func @_posenc_kernel(%arg0: i32, %arg1: memref<1x8x32xf32, #tpu.memory_space<vmem>>, %arg2: memref<8x32xf32, #tpu.memory_space<vmem>>, %arg3: memref<1x8x32xf32, #tpu.memory_space<vmem>>) attributes {dimension_semantics = [#tpu.dimension_semantics<parallel>], iteration_bounds = array<i64: 2>, scalar_prefetch = 0 : i64, scratch_operands = 0 : i64, tpu.core_type = #tpu.core_type<tc>, window_params = [{transform_indices = @transform_0, window_bounds = array<i64: 1, 8, 32>}, {pipeline_mode = #tpu.pipeline_mode<synchronous>, transform_indices = @transform_1, window_bounds = array<i64: 8, 32>}, {transform_indices = @transform_2, window_bounds = array<i64: 1, 8, 32>}]} {
    %c0 = arith.constant 0 : index
    %c0_0 = arith.constant 0 : index
    %c0_1 = arith.constant 0 : index
    %0 = vector.load %arg1[%c0, %c0_0, %c0_1] : memref<1x8x32xf32, #tpu.memory_space<vmem>>, vector<1x8x32xf32>
    %1 = vector.shape_cast %0 : vector<1x8x32xf32> to vector<8x32xf32>
    %cst = arith.constant 5.65685415 : f32
    %2 = vector.broadcast %cst : f32 to vector<8x32xf32>
    %3 = arith.mulf %1, %2 : vector<8x32xf32>
    %c0_2 = arith.constant 0 : index
    %c0_3 = arith.constant 0 : index
    %4 = vector.load %arg2[%c0_2, %c0_3] : memref<8x32xf32, #tpu.memory_space<vmem>>, vector<8x32xf32>
    %5 = arith.addf %3, %4 : vector<8x32xf32>
    %c0_4 = arith.constant 0 : index
    %c0_5 = arith.constant 0 : index
    %c0_6 = arith.constant 0 : index
    %6 = vector.load %arg3[%c0_4, %c0_5, %c0_6] : memref<1x8x32xf32, #tpu.memory_space<vmem>>, vector<1x8x32xf32>
    %7 = vector.shape_cast %6 : vector<1x8x32xf32> to vector<8x32xf32>
    %8 = vector.shape_cast %5 : vector<8x32xf32> to vector<1x8x32xf32>
    tpu.vector_store %arg3[%c0_4, %c0_5, %c0_6], %8 {strides = array<i32>} : memref<1x8x32xf32, #tpu.memory_space<vmem>>, vector<1x8x32xf32>,
    return
  }
  func.func @transform_0(%arg0: i32) -> (i32, i32, i32) {
    %c0_i32 = arith.constant 0 : i32
    %c0_i32_0 = arith.constant 0 : i32
    %c0_i32_1 = arith.constant 0 : i32
    return %arg0, %c0_i32, %c0_i32_0 : i32, i32, i32
  }
  func.func @transform_1(%arg0: i32) -> (i32, i32) {
    %c0_i32 = arith.constant 0 : i32
    %c0_i32_0 = arith.constant 0 : i32
    %c0_i32_1 = arith.constant 0 : i32
    return %c0_i32, %c0_i32_0 : i32, i32
  }
  func.func @transform_2(%arg0: i32) -> (i32, i32, i32) {
    %c0_i32 = arith.constant 0 : i32
    %c0_i32_0 = arith.constant 0 : i32
    %c0_i32_1 = arith.constant 0 : i32
    return %arg0, %c0_i32, %c0_i32_0 : i32, i32, i32
  }
}

module attributes {stable_mosaic.version = 11 : i64} {
  func.func @_ffn_kernel(%arg0: i32, %arg1: memref<16x32xf32, #tpu.memory_space<vmem>>, %arg2: memref<1x32xf32, #tpu.memory_space<vmem>>, %arg3: memref<1x32xf32, #tpu.memory_space<vmem>>, %arg4: memref<32x64xf32, #tpu.memory_space<vmem>>, %arg5: memref<1x64xf32, #tpu.memory_space<vmem>>, %arg6: memref<64x32xf32, #tpu.memory_space<vmem>>, %arg7: memref<1x32xf32, #tpu.memory_space<vmem>>, %arg8: memref<16x32xf32, #tpu.memory_space<vmem>>) attributes {dimension_semantics = [#tpu.dimension_semantics<parallel>], iteration_bounds = array<i64: 1>, scalar_prefetch = 0 : i64, scratch_operands = 0 : i64, tpu.core_type = #tpu.core_type<tc>, window_params = [{transform_indices = @transform_0, window_bounds = array<i64: 16, 32>}, {pipeline_mode = #tpu.pipeline_mode<synchronous>, transform_indices = @transform_1, window_bounds = array<i64: 1, 32>}, {pipeline_mode = #tpu.pipeline_mode<synchronous>, transform_indices = @transform_2, window_bounds = array<i64: 1, 32>}, {pipeline_mode = #tpu.pipeline_mode<synchronous>, transform_indices = @transform_3, window_bounds = array<i64: 32, 64>}, {pipeline_mode = #tpu.pipeline_mode<synchronous>, transform_indices = @transform_4, window_bounds = array<i64: 1, 64>}, {pipeline_mode = #tpu.pipeline_mode<synchronous>, transform_indices = @transform_5, window_bounds = array<i64: 64, 32>}, {pipeline_mode = #tpu.pipeline_mode<synchronous>, transform_indices = @transform_6, window_bounds = array<i64: 1, 32>}, {transform_indices = @transform_7, window_bounds = array<i64: 16, 32>}]} {
    %c0 = arith.constant 0 : index
    %c0_0 = arith.constant 0 : index
    %0 = vector.load %arg1[%c0, %c0_0] : memref<16x32xf32, #tpu.memory_space<vmem>>, vector<16x32xf32>
    %c0_1 = arith.constant 0 : index
    %c0_2 = arith.constant 0 : index
    %1 = vector.load %arg2[%c0_1, %c0_2] : memref<1x32xf32, #tpu.memory_space<vmem>>, vector<1x32xf32>
    %c0_3 = arith.constant 0 : index
    %c0_4 = arith.constant 0 : index
    %2 = vector.load %arg3[%c0_3, %c0_4] : memref<1x32xf32, #tpu.memory_space<vmem>>, vector<1x32xf32>
    %cst = arith.constant dense<0.000000e+00> : vector<16xf32>
    %3 = vector.multi_reduction <add>, %0, %cst [1] : vector<16x32xf32> to vector<16xf32>
    %4 = vector.shape_cast %3 : vector<16xf32> to vector<16x1xf32>
    %cst_5 = arith.constant 3.200000e+01 : f32
    %5 = vector.broadcast %cst_5 : f32 to vector<16x1xf32>
    %6 = arith.divf %4, %5 : vector<16x1xf32>
    %7 = vector.broadcast %6 : vector<16x1xf32> to vector<16x32xf32>
    %8 = arith.subf %0, %7 : vector<16x32xf32>
    %9 = arith.mulf %8, %8 : vector<16x32xf32>
    %cst_6 = arith.constant dense<0.000000e+00> : vector<16xf32>
    %10 = vector.multi_reduction <add>, %9, %cst_6 [1] : vector<16x32xf32> to vector<16xf32>
    %11 = vector.shape_cast %10 : vector<16xf32> to vector<16x1xf32>
    %cst_7 = arith.constant 3.200000e+01 : f32
    %12 = vector.broadcast %cst_7 : f32 to vector<16x1xf32>
    %13 = arith.divf %11, %12 : vector<16x1xf32>
    %14 = vector.broadcast %6 : vector<16x1xf32> to vector<16x32xf32>
    %15 = arith.subf %0, %14 : vector<16x32xf32>
    %cst_8 = arith.constant 9.99999974E-6 : f32
    %16 = vector.broadcast %cst_8 : f32 to vector<16x1xf32>
    %17 = arith.addf %13, %16 : vector<16x1xf32>
    %18 = math.rsqrt %17 : vector<16x1xf32>
    %19 = vector.broadcast %18 : vector<16x1xf32> to vector<16x32xf32>
    %20 = arith.mulf %15, %19 : vector<16x32xf32>
    %21 = vector.broadcast %1 : vector<1x32xf32> to vector<16x32xf32>
    %22 = arith.mulf %20, %21 : vector<16x32xf32>
    %23 = vector.broadcast %2 : vector<1x32xf32> to vector<16x32xf32>
    %24 = arith.addf %22, %23 : vector<16x32xf32>
    %c0_9 = arith.constant 0 : index
    %c0_10 = arith.constant 0 : index
    %25 = vector.load %arg4[%c0_9, %c0_10] : memref<32x64xf32, #tpu.memory_space<vmem>>, vector<32x64xf32>
    %cst_11 = arith.constant dense<0.000000e+00> : vector<16x64xf32>
    %26 = tpu.matmul %24, %25, %cst_11 {dimension_numbers = #tpu.dot_dimension_numbers<[1], [0], [0], [1], [0, 0, 1, 1], [], []>} : vector<16x32xf32>, vector<32x64xf32>, vector<16x64xf32> -> vector<16x64xf32>
    %c0_12 = arith.constant 0 : index
    %c0_13 = arith.constant 0 : index
    %27 = vector.load %arg5[%c0_12, %c0_13] : memref<1x64xf32, #tpu.memory_space<vmem>>, vector<1x64xf32>
    %28 = vector.broadcast %27 : vector<1x64xf32> to vector<16x64xf32>
    %29 = arith.addf %26, %28 : vector<16x64xf32>
    %30 = arith.negf %29 : vector<16x64xf32>
    %31 = math.exp %30 : vector<16x64xf32>
    %cst_14 = arith.constant 1.000000e+00 : f32
    %32 = vector.broadcast %cst_14 : f32 to vector<16x64xf32>
    %33 = arith.addf %32, %31 : vector<16x64xf32>
    %34 = arith.divf %32, %33 : vector<16x64xf32>
    %35 = arith.mulf %29, %34 : vector<16x64xf32>
    %c0_15 = arith.constant 0 : index
    %c0_16 = arith.constant 0 : index
    %36 = vector.load %arg6[%c0_15, %c0_16] : memref<64x32xf32, #tpu.memory_space<vmem>>, vector<64x32xf32>
    %cst_17 = arith.constant dense<0.000000e+00> : vector<16x32xf32>
    %37 = tpu.matmul %35, %36, %cst_17 {dimension_numbers = #tpu.dot_dimension_numbers<[1], [0], [0], [1], [0, 0, 1, 1], [], []>} : vector<16x64xf32>, vector<64x32xf32>, vector<16x32xf32> -> vector<16x32xf32>
    %c0_18 = arith.constant 0 : index
    %c0_19 = arith.constant 0 : index
    %38 = vector.load %arg7[%c0_18, %c0_19] : memref<1x32xf32, #tpu.memory_space<vmem>>, vector<1x32xf32>
    %39 = vector.broadcast %38 : vector<1x32xf32> to vector<16x32xf32>
    %40 = arith.addf %37, %39 : vector<16x32xf32>
    %cst_20 = arith.constant 5.000000e-01 : f32
    %41 = vector.broadcast %cst_20 : f32 to vector<16x32xf32>
    %42 = arith.mulf %41, %40 : vector<16x32xf32>
    %43 = arith.addf %0, %42 : vector<16x32xf32>
    %c0_21 = arith.constant 0 : index
    %c0_22 = arith.constant 0 : index
    %44 = vector.load %arg8[%c0_21, %c0_22] : memref<16x32xf32, #tpu.memory_space<vmem>>, vector<16x32xf32>
    tpu.vector_store %arg8[%c0_21, %c0_22], %43 {strides = array<i32>} : memref<16x32xf32, #tpu.memory_space<vmem>>, vector<16x32xf32>,
    return
  }
  func.func @transform_0(%arg0: i32) -> (i32, i32) {
    %c0_i32 = arith.constant 0 : i32
    %c0_i32_0 = arith.constant 0 : i32
    return %arg0, %c0_i32 : i32, i32
  }
  func.func @transform_1(%arg0: i32) -> (i32, i32) {
    %c0_i32 = arith.constant 0 : i32
    %c0_i32_0 = arith.constant 0 : i32
    %c0_i32_1 = arith.constant 0 : i32
    return %c0_i32, %c0_i32_0 : i32, i32
  }
  func.func @transform_2(%arg0: i32) -> (i32, i32) {
    %c0_i32 = arith.constant 0 : i32
    %c0_i32_0 = arith.constant 0 : i32
    %c0_i32_1 = arith.constant 0 : i32
    return %c0_i32, %c0_i32_0 : i32, i32
  }
  func.func @transform_3(%arg0: i32) -> (i32, i32) {
    %c0_i32 = arith.constant 0 : i32
    %c0_i32_0 = arith.constant 0 : i32
    %c0_i32_1 = arith.constant 0 : i32
    return %c0_i32, %c0_i32_0 : i32, i32
  }
  func.func @transform_4(%arg0: i32) -> (i32, i32) {
    %c0_i32 = arith.constant 0 : i32
    %c0_i32_0 = arith.constant 0 : i32
    %c0_i32_1 = arith.constant 0 : i32
    return %c0_i32, %c0_i32_0 : i32, i32
  }
  func.func @transform_5(%arg0: i32) -> (i32, i32) {
    %c0_i32 = arith.constant 0 : i32
    %c0_i32_0 = arith.constant 0 : i32
    %c0_i32_1 = arith.constant 0 : i32
    return %c0_i32, %c0_i32_0 : i32, i32
  }
  func.func @transform_6(%arg0: i32) -> (i32, i32) {
    %c0_i32 = arith.constant 0 : i32
    %c0_i32_0 = arith.constant 0 : i32
    %c0_i32_1 = arith.constant 0 : i32
    return %c0_i32, %c0_i32_0 : i32, i32
  }
  func.func @transform_7(%arg0: i32) -> (i32, i32) {
    %c0_i32 = arith.constant 0 : i32
    %c0_i32_0 = arith.constant 0 : i32
    return %arg0, %c0_i32 : i32, i32
  }
}

module attributes {stable_mosaic.version = 11 : i64} {
  func.func @_ln_matmul_kernel(%arg0: i32, %arg1: memref<16x32xf32, #tpu.memory_space<vmem>>, %arg2: memref<1x32xf32, #tpu.memory_space<vmem>>, %arg3: memref<1x32xf32, #tpu.memory_space<vmem>>, %arg4: memref<32x96xf32, #tpu.memory_space<vmem>>, %arg5: memref<1x96xf32, #tpu.memory_space<vmem>>, %arg6: memref<16x96xf32, #tpu.memory_space<vmem>>) attributes {dimension_semantics = [#tpu.dimension_semantics<parallel>], iteration_bounds = array<i64: 1>, scalar_prefetch = 0 : i64, scratch_operands = 0 : i64, tpu.core_type = #tpu.core_type<tc>, window_params = [{transform_indices = @transform_0, window_bounds = array<i64: 16, 32>}, {pipeline_mode = #tpu.pipeline_mode<synchronous>, transform_indices = @transform_1, window_bounds = array<i64: 1, 32>}, {pipeline_mode = #tpu.pipeline_mode<synchronous>, transform_indices = @transform_2, window_bounds = array<i64: 1, 32>}, {pipeline_mode = #tpu.pipeline_mode<synchronous>, transform_indices = @transform_3, window_bounds = array<i64: 32, 96>}, {pipeline_mode = #tpu.pipeline_mode<synchronous>, transform_indices = @transform_4, window_bounds = array<i64: 1, 96>}, {transform_indices = @transform_5, window_bounds = array<i64: 16, 96>}]} {
    %c0 = arith.constant 0 : index
    %c0_0 = arith.constant 0 : index
    %0 = vector.load %arg1[%c0, %c0_0] : memref<16x32xf32, #tpu.memory_space<vmem>>, vector<16x32xf32>
    %c0_1 = arith.constant 0 : index
    %c0_2 = arith.constant 0 : index
    %1 = vector.load %arg2[%c0_1, %c0_2] : memref<1x32xf32, #tpu.memory_space<vmem>>, vector<1x32xf32>
    %c0_3 = arith.constant 0 : index
    %c0_4 = arith.constant 0 : index
    %2 = vector.load %arg3[%c0_3, %c0_4] : memref<1x32xf32, #tpu.memory_space<vmem>>, vector<1x32xf32>
    %cst = arith.constant dense<0.000000e+00> : vector<16xf32>
    %3 = vector.multi_reduction <add>, %0, %cst [1] : vector<16x32xf32> to vector<16xf32>
    %4 = vector.shape_cast %3 : vector<16xf32> to vector<16x1xf32>
    %cst_5 = arith.constant 3.200000e+01 : f32
    %5 = vector.broadcast %cst_5 : f32 to vector<16x1xf32>
    %6 = arith.divf %4, %5 : vector<16x1xf32>
    %7 = vector.broadcast %6 : vector<16x1xf32> to vector<16x32xf32>
    %8 = arith.subf %0, %7 : vector<16x32xf32>
    %9 = arith.mulf %8, %8 : vector<16x32xf32>
    %cst_6 = arith.constant dense<0.000000e+00> : vector<16xf32>
    %10 = vector.multi_reduction <add>, %9, %cst_6 [1] : vector<16x32xf32> to vector<16xf32>
    %11 = vector.shape_cast %10 : vector<16xf32> to vector<16x1xf32>
    %cst_7 = arith.constant 3.200000e+01 : f32
    %12 = vector.broadcast %cst_7 : f32 to vector<16x1xf32>
    %13 = arith.divf %11, %12 : vector<16x1xf32>
    %14 = vector.broadcast %6 : vector<16x1xf32> to vector<16x32xf32>
    %15 = arith.subf %0, %14 : vector<16x32xf32>
    %cst_8 = arith.constant 9.99999974E-6 : f32
    %16 = vector.broadcast %cst_8 : f32 to vector<16x1xf32>
    %17 = arith.addf %13, %16 : vector<16x1xf32>
    %18 = math.rsqrt %17 : vector<16x1xf32>
    %19 = vector.broadcast %18 : vector<16x1xf32> to vector<16x32xf32>
    %20 = arith.mulf %15, %19 : vector<16x32xf32>
    %21 = vector.broadcast %1 : vector<1x32xf32> to vector<16x32xf32>
    %22 = arith.mulf %20, %21 : vector<16x32xf32>
    %23 = vector.broadcast %2 : vector<1x32xf32> to vector<16x32xf32>
    %24 = arith.addf %22, %23 : vector<16x32xf32>
    %c0_9 = arith.constant 0 : index
    %c0_10 = arith.constant 0 : index
    %25 = vector.load %arg4[%c0_9, %c0_10] : memref<32x96xf32, #tpu.memory_space<vmem>>, vector<32x96xf32>
    %cst_11 = arith.constant dense<0.000000e+00> : vector<16x96xf32>
    %26 = tpu.matmul %24, %25, %cst_11 {dimension_numbers = #tpu.dot_dimension_numbers<[1], [0], [0], [1], [0, 0, 1, 1], [], []>} : vector<16x32xf32>, vector<32x96xf32>, vector<16x96xf32> -> vector<16x96xf32>
    %c0_12 = arith.constant 0 : index
    %c0_13 = arith.constant 0 : index
    %27 = vector.load %arg5[%c0_12, %c0_13] : memref<1x96xf32, #tpu.memory_space<vmem>>, vector<1x96xf32>
    %28 = vector.broadcast %27 : vector<1x96xf32> to vector<16x96xf32>
    %29 = arith.addf %26, %28 : vector<16x96xf32>
    %c0_14 = arith.constant 0 : index
    %c0_15 = arith.constant 0 : index
    %30 = vector.load %arg6[%c0_14, %c0_15] : memref<16x96xf32, #tpu.memory_space<vmem>>, vector<16x96xf32>
    tpu.vector_store %arg6[%c0_14, %c0_15], %29 {strides = array<i32>} : memref<16x96xf32, #tpu.memory_space<vmem>>, vector<16x96xf32>,
    return
  }
  func.func @transform_0(%arg0: i32) -> (i32, i32) {
    %c0_i32 = arith.constant 0 : i32
    %c0_i32_0 = arith.constant 0 : i32
    return %arg0, %c0_i32 : i32, i32
  }
  func.func @transform_1(%arg0: i32) -> (i32, i32) {
    %c0_i32 = arith.constant 0 : i32
    %c0_i32_0 = arith.constant 0 : i32
    %c0_i32_1 = arith.constant 0 : i32
    return %c0_i32, %c0_i32_0 : i32, i32
  }
  func.func @transform_2(%arg0: i32) -> (i32, i32) {
    %c0_i32 = arith.constant 0 : i32
    %c0_i32_0 = arith.constant 0 : i32
    %c0_i32_1 = arith.constant 0 : i32
    return %c0_i32, %c0_i32_0 : i32, i32
  }
  func.func @transform_3(%arg0: i32) -> (i32, i32) {
    %c0_i32 = arith.constant 0 : i32
    %c0_i32_0 = arith.constant 0 : i32
    %c0_i32_1 = arith.constant 0 : i32
    return %c0_i32, %c0_i32_0 : i32, i32
  }
  func.func @transform_4(%arg0: i32) -> (i32, i32) {
    %c0_i32 = arith.constant 0 : i32
    %c0_i32_0 = arith.constant 0 : i32
    %c0_i32_1 = arith.constant 0 : i32
    return %c0_i32, %c0_i32_0 : i32, i32
  }
  func.func @transform_5(%arg0: i32) -> (i32, i32) {
    %c0_i32 = arith.constant 0 : i32
    %c0_i32_0 = arith.constant 0 : i32
    return %arg0, %c0_i32 : i32, i32
  }
}

module attributes {stable_mosaic.version = 11 : i64} {
  func.func @_attn_kernel(%arg0: i32, %arg1: memref<1x8x96xf32, #tpu.memory_space<vmem>>, %arg2: memref<1x8x32xf32, #tpu.memory_space<vmem>>) attributes {dimension_semantics = [#tpu.dimension_semantics<parallel>], iteration_bounds = array<i64: 2>, scalar_prefetch = 0 : i64, scratch_operands = 0 : i64, tpu.core_type = #tpu.core_type<tc>, window_params = [{transform_indices = @transform_0, window_bounds = array<i64: 1, 8, 96>}, {transform_indices = @transform_1, window_bounds = array<i64: 1, 8, 32>}]} {
    %c0 = arith.constant 0 : index
    %c0_0 = arith.constant 0 : index
    %c0_1 = arith.constant 0 : index
    %0 = vector.load %arg1[%c0, %c0_0, %c0_1] : memref<1x8x96xf32, #tpu.memory_space<vmem>>, vector<1x8x96xf32>
    %1 = vector.shape_cast %0 : vector<1x8x96xf32> to vector<8x96xf32>
    %2 = vector.extract_strided_slice %1 {offsets = [0, 0], sizes = [8, 8], strides = [1, 1]} : vector<8x96xf32> to vector<8x8xf32>
    %cst = arith.constant 0.353553385 : f32
    %3 = vector.broadcast %cst : f32 to vector<8x8xf32>
    %4 = arith.mulf %2, %3 : vector<8x8xf32>
    %5 = vector.extract_strided_slice %1 {offsets = [0, 32], sizes = [8, 8], strides = [1, 1]} : vector<8x96xf32> to vector<8x8xf32>
    %6 = vector.extract_strided_slice %1 {offsets = [0, 64], sizes = [8, 8], strides = [1, 1]} : vector<8x96xf32> to vector<8x8xf32>
    %cst_2 = arith.constant dense<0.000000e+00> : vector<8x8xf32>
    %7 = tpu.matmul %4, %5, %cst_2 {dimension_numbers = #tpu.dot_dimension_numbers<[1], [1], [0], [0], [0, 0, 1, 0], [], []>} : vector<8x8xf32>, vector<8x8xf32>, vector<8x8xf32> -> vector<8x8xf32>
    %cst_3 = arith.constant dense<0xFF800000> : vector<8xf32>
    %8 = vector.multi_reduction <maximumf>, %7, %cst_3 [1] : vector<8x8xf32> to vector<8xf32>
    %9 = vector.shape_cast %8 : vector<8xf32> to vector<8x1xf32>
    %10 = vector.broadcast %9 : vector<8x1xf32> to vector<8x8xf32>
    %11 = arith.subf %7, %10 : vector<8x8xf32>
    %12 = math.exp %11 : vector<8x8xf32>
    %cst_4 = arith.constant dense<0.000000e+00> : vector<8xf32>
    %13 = vector.multi_reduction <add>, %12, %cst_4 [1] : vector<8x8xf32> to vector<8xf32>
    %14 = vector.shape_cast %13 : vector<8xf32> to vector<8x1xf32>
    %15 = tpu.reciprocal %14 {approx = true} : vector<8x1xf32> -> vector<8x1xf32>
    %16 = vector.broadcast %15 : vector<8x1xf32> to vector<8x8xf32>
    %17 = arith.mulf %12, %16 : vector<8x8xf32>
    %cst_5 = arith.constant dense<0.000000e+00> : vector<8x8xf32>
    %18 = tpu.matmul %17, %6, %cst_5 {dimension_numbers = #tpu.dot_dimension_numbers<[1], [0], [0], [1], [0, 0, 1, 1], [], []>} : vector<8x8xf32>, vector<8x8xf32>, vector<8x8xf32> -> vector<8x8xf32>
    %19 = vector.extract_strided_slice %1 {offsets = [0, 8], sizes = [8, 8], strides = [1, 1]} : vector<8x96xf32> to vector<8x8xf32>
    %cst_6 = arith.constant 0.353553385 : f32
    %20 = vector.broadcast %cst_6 : f32 to vector<8x8xf32>
    %21 = arith.mulf %19, %20 : vector<8x8xf32>
    %22 = vector.extract_strided_slice %1 {offsets = [0, 40], sizes = [8, 8], strides = [1, 1]} : vector<8x96xf32> to vector<8x8xf32>
    %23 = vector.extract_strided_slice %1 {offsets = [0, 72], sizes = [8, 8], strides = [1, 1]} : vector<8x96xf32> to vector<8x8xf32>
    %cst_7 = arith.constant dense<0.000000e+00> : vector<8x8xf32>
    %24 = tpu.matmul %21, %22, %cst_7 {dimension_numbers = #tpu.dot_dimension_numbers<[1], [1], [0], [0], [0, 0, 1, 0], [], []>} : vector<8x8xf32>, vector<8x8xf32>, vector<8x8xf32> -> vector<8x8xf32>
    %cst_8 = arith.constant dense<0xFF800000> : vector<8xf32>
    %25 = vector.multi_reduction <maximumf>, %24, %cst_8 [1] : vector<8x8xf32> to vector<8xf32>
    %26 = vector.shape_cast %25 : vector<8xf32> to vector<8x1xf32>
    %27 = vector.broadcast %26 : vector<8x1xf32> to vector<8x8xf32>
    %28 = arith.subf %24, %27 : vector<8x8xf32>
    %29 = math.exp %28 : vector<8x8xf32>
    %cst_9 = arith.constant dense<0.000000e+00> : vector<8xf32>
    %30 = vector.multi_reduction <add>, %29, %cst_9 [1] : vector<8x8xf32> to vector<8xf32>
    %31 = vector.shape_cast %30 : vector<8xf32> to vector<8x1xf32>
    %32 = tpu.reciprocal %31 {approx = true} : vector<8x1xf32> -> vector<8x1xf32>
    %33 = vector.broadcast %32 : vector<8x1xf32> to vector<8x8xf32>
    %34 = arith.mulf %29, %33 : vector<8x8xf32>
    %cst_10 = arith.constant dense<0.000000e+00> : vector<8x8xf32>
    %35 = tpu.matmul %34, %23, %cst_10 {dimension_numbers = #tpu.dot_dimension_numbers<[1], [0], [0], [1], [0, 0, 1, 1], [], []>} : vector<8x8xf32>, vector<8x8xf32>, vector<8x8xf32> -> vector<8x8xf32>
    %36 = vector.extract_strided_slice %1 {offsets = [0, 16], sizes = [8, 8], strides = [1, 1]} : vector<8x96xf32> to vector<8x8xf32>
    %cst_11 = arith.constant 0.353553385 : f32
    %37 = vector.broadcast %cst_11 : f32 to vector<8x8xf32>
    %38 = arith.mulf %36, %37 : vector<8x8xf32>
    %39 = vector.extract_strided_slice %1 {offsets = [0, 48], sizes = [8, 8], strides = [1, 1]} : vector<8x96xf32> to vector<8x8xf32>
    %40 = vector.extract_strided_slice %1 {offsets = [0, 80], sizes = [8, 8], strides = [1, 1]} : vector<8x96xf32> to vector<8x8xf32>
    %cst_12 = arith.constant dense<0.000000e+00> : vector<8x8xf32>
    %41 = tpu.matmul %38, %39, %cst_12 {dimension_numbers = #tpu.dot_dimension_numbers<[1], [1], [0], [0], [0, 0, 1, 0], [], []>} : vector<8x8xf32>, vector<8x8xf32>, vector<8x8xf32> -> vector<8x8xf32>
    %cst_13 = arith.constant dense<0xFF800000> : vector<8xf32>
    %42 = vector.multi_reduction <maximumf>, %41, %cst_13 [1] : vector<8x8xf32> to vector<8xf32>
    %43 = vector.shape_cast %42 : vector<8xf32> to vector<8x1xf32>
    %44 = vector.broadcast %43 : vector<8x1xf32> to vector<8x8xf32>
    %45 = arith.subf %41, %44 : vector<8x8xf32>
    %46 = math.exp %45 : vector<8x8xf32>
    %cst_14 = arith.constant dense<0.000000e+00> : vector<8xf32>
    %47 = vector.multi_reduction <add>, %46, %cst_14 [1] : vector<8x8xf32> to vector<8xf32>
    %48 = vector.shape_cast %47 : vector<8xf32> to vector<8x1xf32>
    %49 = tpu.reciprocal %48 {approx = true} : vector<8x1xf32> -> vector<8x1xf32>
    %50 = vector.broadcast %49 : vector<8x1xf32> to vector<8x8xf32>
    %51 = arith.mulf %46, %50 : vector<8x8xf32>
    %cst_15 = arith.constant dense<0.000000e+00> : vector<8x8xf32>
    %52 = tpu.matmul %51, %40, %cst_15 {dimension_numbers = #tpu.dot_dimension_numbers<[1], [0], [0], [1], [0, 0, 1, 1], [], []>} : vector<8x8xf32>, vector<8x8xf32>, vector<8x8xf32> -> vector<8x8xf32>
    %53 = vector.extract_strided_slice %1 {offsets = [0, 24], sizes = [8, 8], strides = [1, 1]} : vector<8x96xf32> to vector<8x8xf32>
    %cst_16 = arith.constant 0.353553385 : f32
    %54 = vector.broadcast %cst_16 : f32 to vector<8x8xf32>
    %55 = arith.mulf %53, %54 : vector<8x8xf32>
    %56 = vector.extract_strided_slice %1 {offsets = [0, 56], sizes = [8, 8], strides = [1, 1]} : vector<8x96xf32> to vector<8x8xf32>
    %57 = vector.extract_strided_slice %1 {offsets = [0, 88], sizes = [8, 8], strides = [1, 1]} : vector<8x96xf32> to vector<8x8xf32>
    %cst_17 = arith.constant dense<0.000000e+00> : vector<8x8xf32>
    %58 = tpu.matmul %55, %56, %cst_17 {dimension_numbers = #tpu.dot_dimension_numbers<[1], [1], [0], [0], [0, 0, 1, 0], [], []>} : vector<8x8xf32>, vector<8x8xf32>, vector<8x8xf32> -> vector<8x8xf32>
    %cst_18 = arith.constant dense<0xFF800000> : vector<8xf32>
    %59 = vector.multi_reduction <maximumf>, %58, %cst_18 [1] : vector<8x8xf32> to vector<8xf32>
    %60 = vector.shape_cast %59 : vector<8xf32> to vector<8x1xf32>
    %61 = vector.broadcast %60 : vector<8x1xf32> to vector<8x8xf32>
    %62 = arith.subf %58, %61 : vector<8x8xf32>
    %63 = math.exp %62 : vector<8x8xf32>
    %cst_19 = arith.constant dense<0.000000e+00> : vector<8xf32>
    %64 = vector.multi_reduction <add>, %63, %cst_19 [1] : vector<8x8xf32> to vector<8xf32>
    %65 = vector.shape_cast %64 : vector<8xf32> to vector<8x1xf32>
    %66 = tpu.reciprocal %65 {approx = true} : vector<8x1xf32> -> vector<8x1xf32>
    %67 = vector.broadcast %66 : vector<8x1xf32> to vector<8x8xf32>
    %68 = arith.mulf %63, %67 : vector<8x8xf32>
    %cst_20 = arith.constant dense<0.000000e+00> : vector<8x8xf32>
    %69 = tpu.matmul %68, %57, %cst_20 {dimension_numbers = #tpu.dot_dimension_numbers<[1], [0], [0], [1], [0, 0, 1, 1], [], []>} : vector<8x8xf32>, vector<8x8xf32>, vector<8x8xf32> -> vector<8x8xf32>
    %70 = tpu.concatenate %18, %35, %52, %69 in 1 : vector<8x8xf32>, vector<8x8xf32>, vector<8x8xf32>, vector<8x8xf32> -> vector<8x32xf32>
    %c0_21 = arith.constant 0 : index
    %c0_22 = arith.constant 0 : index
    %c0_23 = arith.constant 0 : index
    %71 = vector.load %arg2[%c0_21, %c0_22, %c0_23] : memref<1x8x32xf32, #tpu.memory_space<vmem>>, vector<1x8x32xf32>
    %72 = vector.shape_cast %71 : vector<1x8x32xf32> to vector<8x32xf32>
    %73 = vector.shape_cast %70 : vector<8x32xf32> to vector<1x8x32xf32>
    tpu.vector_store %arg2[%c0_21, %c0_22, %c0_23], %73 {strides = array<i32>} : memref<1x8x32xf32, #tpu.memory_space<vmem>>, vector<1x8x32xf32>,
    return
  }
  func.func @transform_0(%arg0: i32) -> (i32, i32, i32) {
    %c0_i32 = arith.constant 0 : i32
    %c0_i32_0 = arith.constant 0 : i32
    %c0_i32_1 = arith.constant 0 : i32
    return %arg0, %c0_i32, %c0_i32_0 : i32, i32, i32
  }
  func.func @transform_1(%arg0: i32) -> (i32, i32, i32) {
    %c0_i32 = arith.constant 0 : i32
    %c0_i32_0 = arith.constant 0 : i32
    %c0_i32_1 = arith.constant 0 : i32
    return %arg0, %c0_i32, %c0_i32_0 : i32, i32, i32
  }
}

module attributes {stable_mosaic.version = 11 : i64} {
  func.func @_matmul_res_kernel(%arg0: i32, %arg1: memref<16x32xf32, #tpu.memory_space<vmem>>, %arg2: memref<16x32xf32, #tpu.memory_space<vmem>>, %arg3: memref<32x32xf32, #tpu.memory_space<vmem>>, %arg4: memref<1x32xf32, #tpu.memory_space<vmem>>, %arg5: memref<16x32xf32, #tpu.memory_space<vmem>>) attributes {dimension_semantics = [#tpu.dimension_semantics<parallel>], iteration_bounds = array<i64: 1>, scalar_prefetch = 0 : i64, scratch_operands = 0 : i64, tpu.core_type = #tpu.core_type<tc>, window_params = [{transform_indices = @transform_0, window_bounds = array<i64: 16, 32>}, {transform_indices = @transform_1, window_bounds = array<i64: 16, 32>}, {pipeline_mode = #tpu.pipeline_mode<synchronous>, transform_indices = @transform_2, window_bounds = array<i64: 32, 32>}, {pipeline_mode = #tpu.pipeline_mode<synchronous>, transform_indices = @transform_3, window_bounds = array<i64: 1, 32>}, {transform_indices = @transform_4, window_bounds = array<i64: 16, 32>}]} {
    %c0 = arith.constant 0 : index
    %c0_0 = arith.constant 0 : index
    %0 = vector.load %arg1[%c0, %c0_0] : memref<16x32xf32, #tpu.memory_space<vmem>>, vector<16x32xf32>
    %c0_1 = arith.constant 0 : index
    %c0_2 = arith.constant 0 : index
    %1 = vector.load %arg3[%c0_1, %c0_2] : memref<32x32xf32, #tpu.memory_space<vmem>>, vector<32x32xf32>
    %cst = arith.constant dense<0.000000e+00> : vector<16x32xf32>
    %2 = tpu.matmul %0, %1, %cst {dimension_numbers = #tpu.dot_dimension_numbers<[1], [0], [0], [1], [0, 0, 1, 1], [], []>} : vector<16x32xf32>, vector<32x32xf32>, vector<16x32xf32> -> vector<16x32xf32>
    %c0_3 = arith.constant 0 : index
    %c0_4 = arith.constant 0 : index
    %3 = vector.load %arg4[%c0_3, %c0_4] : memref<1x32xf32, #tpu.memory_space<vmem>>, vector<1x32xf32>
    %4 = vector.broadcast %3 : vector<1x32xf32> to vector<16x32xf32>
    %5 = arith.addf %2, %4 : vector<16x32xf32>
    %c0_5 = arith.constant 0 : index
    %c0_6 = arith.constant 0 : index
    %6 = vector.load %arg2[%c0_5, %c0_6] : memref<16x32xf32, #tpu.memory_space<vmem>>, vector<16x32xf32>
    %7 = arith.addf %6, %5 : vector<16x32xf32>
    %c0_7 = arith.constant 0 : index
    %c0_8 = arith.constant 0 : index
    %8 = vector.load %arg5[%c0_7, %c0_8] : memref<16x32xf32, #tpu.memory_space<vmem>>, vector<16x32xf32>
    tpu.vector_store %arg5[%c0_7, %c0_8], %7 {strides = array<i32>} : memref<16x32xf32, #tpu.memory_space<vmem>>, vector<16x32xf32>,
    return
  }
  func.func @transform_0(%arg0: i32) -> (i32, i32) {
    %c0_i32 = arith.constant 0 : i32
    %c0_i32_0 = arith.constant 0 : i32
    return %arg0, %c0_i32 : i32, i32
  }
  func.func @transform_1(%arg0: i32) -> (i32, i32) {
    %c0_i32 = arith.constant 0 : i32
    %c0_i32_0 = arith.constant 0 : i32
    return %arg0, %c0_i32 : i32, i32
  }
  func.func @transform_2(%arg0: i32) -> (i32, i32) {
    %c0_i32 = arith.constant 0 : i32
    %c0_i32_0 = arith.constant 0 : i32
    %c0_i32_1 = arith.constant 0 : i32
    return %c0_i32, %c0_i32_0 : i32, i32
  }
  func.func @transform_3(%arg0: i32) -> (i32, i32) {
    %c0_i32 = arith.constant 0 : i32
    %c0_i32_0 = arith.constant 0 : i32
    %c0_i32_1 = arith.constant 0 : i32
    return %c0_i32, %c0_i32_0 : i32, i32
  }
  func.func @transform_4(%arg0: i32) -> (i32, i32) {
    %c0_i32 = arith.constant 0 : i32
    %c0_i32_0 = arith.constant 0 : i32
    return %arg0, %c0_i32 : i32, i32
  }
}

module attributes {stable_mosaic.version = 11 : i64} {
  func.func @_dwconv_bn_swish_kernel(%arg0: i32, %arg1: memref<1x8x32xf32, #tpu.memory_space<vmem>>, %arg2: memref<7x32xf32, #tpu.memory_space<vmem>>, %arg3: memref<1x32xf32, #tpu.memory_space<vmem>>, %arg4: memref<1x32xf32, #tpu.memory_space<vmem>>, %arg5: memref<1x32xf32, #tpu.memory_space<vmem>>, %arg6: memref<1x32xf32, #tpu.memory_space<vmem>>, %arg7: memref<1x32xf32, #tpu.memory_space<vmem>>, %arg8: memref<1x8x32xf32, #tpu.memory_space<vmem>>) attributes {dimension_semantics = [#tpu.dimension_semantics<parallel>], iteration_bounds = array<i64: 2>, scalar_prefetch = 0 : i64, scratch_operands = 0 : i64, tpu.core_type = #tpu.core_type<tc>, window_params = [{transform_indices = @transform_0, window_bounds = array<i64: 1, 8, 32>}, {pipeline_mode = #tpu.pipeline_mode<synchronous>, transform_indices = @transform_1, window_bounds = array<i64: 7, 32>}, {pipeline_mode = #tpu.pipeline_mode<synchronous>, transform_indices = @transform_2, window_bounds = array<i64: 1, 32>}, {pipeline_mode = #tpu.pipeline_mode<synchronous>, transform_indices = @transform_3, window_bounds = array<i64: 1, 32>}, {pipeline_mode = #tpu.pipeline_mode<synchronous>, transform_indices = @transform_4, window_bounds = array<i64: 1, 32>}, {pipeline_mode = #tpu.pipeline_mode<synchronous>, transform_indices = @transform_5, window_bounds = array<i64: 1, 32>}, {pipeline_mode = #tpu.pipeline_mode<synchronous>, transform_indices = @transform_6, window_bounds = array<i64: 1, 32>}, {transform_indices = @transform_7, window_bounds = array<i64: 1, 8, 32>}]} {
    %c0 = arith.constant 0 : index
    %c0_0 = arith.constant 0 : index
    %c0_1 = arith.constant 0 : index
    %0 = vector.load %arg1[%c0, %c0_0, %c0_1] : memref<1x8x32xf32, #tpu.memory_space<vmem>>, vector<1x8x32xf32>
    %1 = vector.shape_cast %0 : vector<1x8x32xf32> to vector<8x32xf32>
    %cst = arith.constant 0.000000e+00 : f32
    %2 = vector.broadcast %cst : f32 to vector<3x32xf32>
    %3 = tpu.concatenate %2, %1, %2 in 0 : vector<3x32xf32>, vector<8x32xf32>, vector<3x32xf32> -> vector<14x32xf32>
    %c0_2 = arith.constant 0 : index
    %c0_3 = arith.constant 0 : index
    %4 = vector.load %arg2[%c0_2, %c0_3] : memref<7x32xf32, #tpu.memory_space<vmem>>, vector<7x32xf32>
    %cst_4 = arith.constant 0.000000e+00 : f32
    %5 = vector.broadcast %cst_4 : f32 to vector<8x32xf32>
    %6 = vector.extract_strided_slice %3 {offsets = [0, 0], sizes = [8, 32], strides = [1, 1]} : vector<14x32xf32> to vector<8x32xf32>
    %7 = vector.extract_strided_slice %4 {offsets = [0, 0], sizes = [1, 32], strides = [1, 1]} : vector<7x32xf32> to vector<1x32xf32>
    %8 = vector.shape_cast %7 : vector<1x32xf32> to vector<32xf32>
    %9 = vector.shape_cast %8 : vector<32xf32> to vector<1x32xf32>
    %10 = vector.broadcast %9 : vector<1x32xf32> to vector<8x32xf32>
    %11 = arith.mulf %6, %10 : vector<8x32xf32>
    %12 = arith.addf %5, %11 : vector<8x32xf32>
    %13 = vector.extract_strided_slice %3 {offsets = [1, 0], sizes = [8, 32], strides = [1, 1]} : vector<14x32xf32> to vector<8x32xf32>
    %14 = vector.extract_strided_slice %4 {offsets = [1, 0], sizes = [1, 32], strides = [1, 1]} : vector<7x32xf32> to vector<1x32xf32>
    %15 = vector.shape_cast %14 : vector<1x32xf32> to vector<32xf32>
    %16 = vector.shape_cast %15 : vector<32xf32> to vector<1x32xf32>
    %17 = vector.broadcast %16 : vector<1x32xf32> to vector<8x32xf32>
    %18 = arith.mulf %13, %17 : vector<8x32xf32>
    %19 = arith.addf %12, %18 : vector<8x32xf32>
    %20 = vector.extract_strided_slice %3 {offsets = [2, 0], sizes = [8, 32], strides = [1, 1]} : vector<14x32xf32> to vector<8x32xf32>
    %21 = vector.extract_strided_slice %4 {offsets = [2, 0], sizes = [1, 32], strides = [1, 1]} : vector<7x32xf32> to vector<1x32xf32>
    %22 = vector.shape_cast %21 : vector<1x32xf32> to vector<32xf32>
    %23 = vector.shape_cast %22 : vector<32xf32> to vector<1x32xf32>
    %24 = vector.broadcast %23 : vector<1x32xf32> to vector<8x32xf32>
    %25 = arith.mulf %20, %24 : vector<8x32xf32>
    %26 = arith.addf %19, %25 : vector<8x32xf32>
    %27 = vector.extract_strided_slice %3 {offsets = [3, 0], sizes = [8, 32], strides = [1, 1]} : vector<14x32xf32> to vector<8x32xf32>
    %28 = vector.extract_strided_slice %4 {offsets = [3, 0], sizes = [1, 32], strides = [1, 1]} : vector<7x32xf32> to vector<1x32xf32>
    %29 = vector.shape_cast %28 : vector<1x32xf32> to vector<32xf32>
    %30 = vector.shape_cast %29 : vector<32xf32> to vector<1x32xf32>
    %31 = vector.broadcast %30 : vector<1x32xf32> to vector<8x32xf32>
    %32 = arith.mulf %27, %31 : vector<8x32xf32>
    %33 = arith.addf %26, %32 : vector<8x32xf32>
    %34 = vector.extract_strided_slice %3 {offsets = [4, 0], sizes = [8, 32], strides = [1, 1]} : vector<14x32xf32> to vector<8x32xf32>
    %35 = vector.extract_strided_slice %4 {offsets = [4, 0], sizes = [1, 32], strides = [1, 1]} : vector<7x32xf32> to vector<1x32xf32>
    %36 = vector.shape_cast %35 : vector<1x32xf32> to vector<32xf32>
    %37 = vector.shape_cast %36 : vector<32xf32> to vector<1x32xf32>
    %38 = vector.broadcast %37 : vector<1x32xf32> to vector<8x32xf32>
    %39 = arith.mulf %34, %38 : vector<8x32xf32>
    %40 = arith.addf %33, %39 : vector<8x32xf32>
    %41 = vector.extract_strided_slice %3 {offsets = [5, 0], sizes = [8, 32], strides = [1, 1]} : vector<14x32xf32> to vector<8x32xf32>
    %42 = vector.extract_strided_slice %4 {offsets = [5, 0], sizes = [1, 32], strides = [1, 1]} : vector<7x32xf32> to vector<1x32xf32>
    %43 = vector.shape_cast %42 : vector<1x32xf32> to vector<32xf32>
    %44 = vector.shape_cast %43 : vector<32xf32> to vector<1x32xf32>
    %45 = vector.broadcast %44 : vector<1x32xf32> to vector<8x32xf32>
    %46 = arith.mulf %41, %45 : vector<8x32xf32>
    %47 = arith.addf %40, %46 : vector<8x32xf32>
    %48 = vector.extract_strided_slice %3 {offsets = [6, 0], sizes = [8, 32], strides = [1, 1]} : vector<14x32xf32> to vector<8x32xf32>
    %49 = vector.extract_strided_slice %4 {offsets = [6, 0], sizes = [1, 32], strides = [1, 1]} : vector<7x32xf32> to vector<1x32xf32>
    %50 = vector.shape_cast %49 : vector<1x32xf32> to vector<32xf32>
    %51 = vector.shape_cast %50 : vector<32xf32> to vector<1x32xf32>
    %52 = vector.broadcast %51 : vector<1x32xf32> to vector<8x32xf32>
    %53 = arith.mulf %48, %52 : vector<8x32xf32>
    %54 = arith.addf %47, %53 : vector<8x32xf32>
    %c0_5 = arith.constant 0 : index
    %c0_6 = arith.constant 0 : index
    %55 = vector.load %arg3[%c0_5, %c0_6] : memref<1x32xf32, #tpu.memory_space<vmem>>, vector<1x32xf32>
    %56 = vector.broadcast %55 : vector<1x32xf32> to vector<8x32xf32>
    %57 = arith.addf %54, %56 : vector<8x32xf32>
    %c0_7 = arith.constant 0 : index
    %c0_8 = arith.constant 0 : index
    %58 = vector.load %arg6[%c0_7, %c0_8] : memref<1x32xf32, #tpu.memory_space<vmem>>, vector<1x32xf32>
    %59 = vector.broadcast %58 : vector<1x32xf32> to vector<8x32xf32>
    %60 = arith.subf %57, %59 : vector<8x32xf32>
    %c0_9 = arith.constant 0 : index
    %c0_10 = arith.constant 0 : index
    %61 = vector.load %arg7[%c0_9, %c0_10] : memref<1x32xf32, #tpu.memory_space<vmem>>, vector<1x32xf32>
    %cst_11 = arith.constant 9.99999974E-6 : f32
    %62 = vector.broadcast %cst_11 : f32 to vector<1x32xf32>
    %63 = arith.addf %61, %62 : vector<1x32xf32>
    %64 = math.rsqrt %63 : vector<1x32xf32>
    %65 = vector.broadcast %64 : vector<1x32xf32> to vector<8x32xf32>
    %66 = arith.mulf %60, %65 : vector<8x32xf32>
    %c0_12 = arith.constant 0 : index
    %c0_13 = arith.constant 0 : index
    %67 = vector.load %arg4[%c0_12, %c0_13] : memref<1x32xf32, #tpu.memory_space<vmem>>, vector<1x32xf32>
    %68 = vector.broadcast %67 : vector<1x32xf32> to vector<8x32xf32>
    %69 = arith.mulf %66, %68 : vector<8x32xf32>
    %c0_14 = arith.constant 0 : index
    %c0_15 = arith.constant 0 : index
    %70 = vector.load %arg5[%c0_14, %c0_15] : memref<1x32xf32, #tpu.memory_space<vmem>>, vector<1x32xf32>
    %71 = vector.broadcast %70 : vector<1x32xf32> to vector<8x32xf32>
    %72 = arith.addf %69, %71 : vector<8x32xf32>
    %73 = arith.negf %72 : vector<8x32xf32>
    %74 = math.exp %73 : vector<8x32xf32>
    %cst_16 = arith.constant 1.000000e+00 : f32
    %75 = vector.broadcast %cst_16 : f32 to vector<8x32xf32>
    %76 = arith.addf %75, %74 : vector<8x32xf32>
    %77 = arith.divf %75, %76 : vector<8x32xf32>
    %78 = arith.mulf %72, %77 : vector<8x32xf32>
    %c0_17 = arith.constant 0 : index
    %c0_18 = arith.constant 0 : index
    %c0_19 = arith.constant 0 : index
    %79 = vector.load %arg8[%c0_17, %c0_18, %c0_19] : memref<1x8x32xf32, #tpu.memory_space<vmem>>, vector<1x8x32xf32>
    %80 = vector.shape_cast %79 : vector<1x8x32xf32> to vector<8x32xf32>
    %81 = vector.shape_cast %78 : vector<8x32xf32> to vector<1x8x32xf32>
    tpu.vector_store %arg8[%c0_17, %c0_18, %c0_19], %81 {strides = array<i32>} : memref<1x8x32xf32, #tpu.memory_space<vmem>>, vector<1x8x32xf32>,
    return
  }
  func.func @transform_0(%arg0: i32) -> (i32, i32, i32) {
    %c0_i32 = arith.constant 0 : i32
    %c0_i32_0 = arith.constant 0 : i32
    %c0_i32_1 = arith.constant 0 : i32
    return %arg0, %c0_i32, %c0_i32_0 : i32, i32, i32
  }
  func.func @transform_1(%arg0: i32) -> (i32, i32) {
    %c0_i32 = arith.constant 0 : i32
    %c0_i32_0 = arith.constant 0 : i32
    %c0_i32_1 = arith.constant 0 : i32
    return %c0_i32, %c0_i32_0 : i32, i32
  }
  func.func @transform_2(%arg0: i32) -> (i32, i32) {
    %c0_i32 = arith.constant 0 : i32
    %c0_i32_0 = arith.constant 0 : i32
    %c0_i32_1 = arith.constant 0 : i32
    return %c0_i32, %c0_i32_0 : i32, i32
  }
  func.func @transform_3(%arg0: i32) -> (i32, i32) {
    %c0_i32 = arith.constant 0 : i32
    %c0_i32_0 = arith.constant 0 : i32
    %c0_i32_1 = arith.constant 0 : i32
    return %c0_i32, %c0_i32_0 : i32, i32
  }
  func.func @transform_4(%arg0: i32) -> (i32, i32) {
    %c0_i32 = arith.constant 0 : i32
    %c0_i32_0 = arith.constant 0 : i32
    %c0_i32_1 = arith.constant 0 : i32
    return %c0_i32, %c0_i32_0 : i32, i32
  }
  func.func @transform_5(%arg0: i32) -> (i32, i32) {
    %c0_i32 = arith.constant 0 : i32
    %c0_i32_0 = arith.constant 0 : i32
    %c0_i32_1 = arith.constant 0 : i32
    return %c0_i32, %c0_i32_0 : i32, i32
  }
  func.func @transform_6(%arg0: i32) -> (i32, i32) {
    %c0_i32 = arith.constant 0 : i32
    %c0_i32_0 = arith.constant 0 : i32
    %c0_i32_1 = arith.constant 0 : i32
    return %c0_i32, %c0_i32_0 : i32, i32
  }
  func.func @transform_7(%arg0: i32) -> (i32, i32, i32) {
    %c0_i32 = arith.constant 0 : i32
    %c0_i32_0 = arith.constant 0 : i32
    %c0_i32_1 = arith.constant 0 : i32
    return %arg0, %c0_i32, %c0_i32_0 : i32, i32, i32
  }
}

module attributes {stable_mosaic.version = 11 : i64} {
  func.func @_ln_glu_kernel(%arg0: i32, %arg1: memref<16x32xf32, #tpu.memory_space<vmem>>, %arg2: memref<1x32xf32, #tpu.memory_space<vmem>>, %arg3: memref<1x32xf32, #tpu.memory_space<vmem>>, %arg4: memref<32x32xf32, #tpu.memory_space<vmem>>, %arg5: memref<1x32xf32, #tpu.memory_space<vmem>>, %arg6: memref<32x32xf32, #tpu.memory_space<vmem>>, %arg7: memref<1x32xf32, #tpu.memory_space<vmem>>, %arg8: memref<16x32xf32, #tpu.memory_space<vmem>>) attributes {dimension_semantics = [#tpu.dimension_semantics<parallel>], iteration_bounds = array<i64: 1>, scalar_prefetch = 0 : i64, scratch_operands = 0 : i64, tpu.core_type = #tpu.core_type<tc>, window_params = [{transform_indices = @transform_0, window_bounds = array<i64: 16, 32>}, {pipeline_mode = #tpu.pipeline_mode<synchronous>, transform_indices = @transform_1, window_bounds = array<i64: 1, 32>}, {pipeline_mode = #tpu.pipeline_mode<synchronous>, transform_indices = @transform_2, window_bounds = array<i64: 1, 32>}, {pipeline_mode = #tpu.pipeline_mode<synchronous>, transform_indices = @transform_3, window_bounds = array<i64: 32, 32>}, {pipeline_mode = #tpu.pipeline_mode<synchronous>, transform_indices = @transform_4, window_bounds = array<i64: 1, 32>}, {pipeline_mode = #tpu.pipeline_mode<synchronous>, transform_indices = @transform_5, window_bounds = array<i64: 32, 32>}, {pipeline_mode = #tpu.pipeline_mode<synchronous>, transform_indices = @transform_6, window_bounds = array<i64: 1, 32>}, {transform_indices = @transform_7, window_bounds = array<i64: 16, 32>}]} {
    %c0 = arith.constant 0 : index
    %c0_0 = arith.constant 0 : index
    %0 = vector.load %arg1[%c0, %c0_0] : memref<16x32xf32, #tpu.memory_space<vmem>>, vector<16x32xf32>
    %c0_1 = arith.constant 0 : index
    %c0_2 = arith.constant 0 : index
    %1 = vector.load %arg2[%c0_1, %c0_2] : memref<1x32xf32, #tpu.memory_space<vmem>>, vector<1x32xf32>
    %c0_3 = arith.constant 0 : index
    %c0_4 = arith.constant 0 : index
    %2 = vector.load %arg3[%c0_3, %c0_4] : memref<1x32xf32, #tpu.memory_space<vmem>>, vector<1x32xf32>
    %cst = arith.constant dense<0.000000e+00> : vector<16xf32>
    %3 = vector.multi_reduction <add>, %0, %cst [1] : vector<16x32xf32> to vector<16xf32>
    %4 = vector.shape_cast %3 : vector<16xf32> to vector<16x1xf32>
    %cst_5 = arith.constant 3.200000e+01 : f32
    %5 = vector.broadcast %cst_5 : f32 to vector<16x1xf32>
    %6 = arith.divf %4, %5 : vector<16x1xf32>
    %7 = vector.broadcast %6 : vector<16x1xf32> to vector<16x32xf32>
    %8 = arith.subf %0, %7 : vector<16x32xf32>
    %9 = arith.mulf %8, %8 : vector<16x32xf32>
    %cst_6 = arith.constant dense<0.000000e+00> : vector<16xf32>
    %10 = vector.multi_reduction <add>, %9, %cst_6 [1] : vector<16x32xf32> to vector<16xf32>
    %11 = vector.shape_cast %10 : vector<16xf32> to vector<16x1xf32>
    %cst_7 = arith.constant 3.200000e+01 : f32
    %12 = vector.broadcast %cst_7 : f32 to vector<16x1xf32>
    %13 = arith.divf %11, %12 : vector<16x1xf32>
    %14 = vector.broadcast %6 : vector<16x1xf32> to vector<16x32xf32>
    %15 = arith.subf %0, %14 : vector<16x32xf32>
    %cst_8 = arith.constant 9.99999974E-6 : f32
    %16 = vector.broadcast %cst_8 : f32 to vector<16x1xf32>
    %17 = arith.addf %13, %16 : vector<16x1xf32>
    %18 = math.rsqrt %17 : vector<16x1xf32>
    %19 = vector.broadcast %18 : vector<16x1xf32> to vector<16x32xf32>
    %20 = arith.mulf %15, %19 : vector<16x32xf32>
    %21 = vector.broadcast %1 : vector<1x32xf32> to vector<16x32xf32>
    %22 = arith.mulf %20, %21 : vector<16x32xf32>
    %23 = vector.broadcast %2 : vector<1x32xf32> to vector<16x32xf32>
    %24 = arith.addf %22, %23 : vector<16x32xf32>
    %c0_9 = arith.constant 0 : index
    %c0_10 = arith.constant 0 : index
    %25 = vector.load %arg4[%c0_9, %c0_10] : memref<32x32xf32, #tpu.memory_space<vmem>>, vector<32x32xf32>
    %cst_11 = arith.constant dense<0.000000e+00> : vector<16x32xf32>
    %26 = tpu.matmul %24, %25, %cst_11 {dimension_numbers = #tpu.dot_dimension_numbers<[1], [0], [0], [1], [0, 0, 1, 1], [], []>} : vector<16x32xf32>, vector<32x32xf32>, vector<16x32xf32> -> vector<16x32xf32>
    %c0_12 = arith.constant 0 : index
    %c0_13 = arith.constant 0 : index
    %27 = vector.load %arg5[%c0_12, %c0_13] : memref<1x32xf32, #tpu.memory_space<vmem>>, vector<1x32xf32>
    %28 = vector.broadcast %27 : vector<1x32xf32> to vector<16x32xf32>
    %29 = arith.addf %26, %28 : vector<16x32xf32>
    %c0_14 = arith.constant 0 : index
    %c0_15 = arith.constant 0 : index
    %30 = vector.load %arg6[%c0_14, %c0_15] : memref<32x32xf32, #tpu.memory_space<vmem>>, vector<32x32xf32>
    %cst_16 = arith.constant dense<0.000000e+00> : vector<16x32xf32>
    %31 = tpu.matmul %24, %30, %cst_16 {dimension_numbers = #tpu.dot_dimension_numbers<[1], [0], [0], [1], [0, 0, 1, 1], [], []>} : vector<16x32xf32>, vector<32x32xf32>, vector<16x32xf32> -> vector<16x32xf32>
    %c0_17 = arith.constant 0 : index
    %c0_18 = arith.constant 0 : index
    %32 = vector.load %arg7[%c0_17, %c0_18] : memref<1x32xf32, #tpu.memory_space<vmem>>, vector<1x32xf32>
    %33 = vector.broadcast %32 : vector<1x32xf32> to vector<16x32xf32>
    %34 = arith.addf %31, %33 : vector<16x32xf32>
    %35 = arith.negf %34 : vector<16x32xf32>
    %36 = math.exp %35 : vector<16x32xf32>
    %cst_19 = arith.constant 1.000000e+00 : f32
    %37 = vector.broadcast %cst_19 : f32 to vector<16x32xf32>
    %38 = arith.addf %37, %36 : vector<16x32xf32>
    %39 = arith.divf %37, %38 : vector<16x32xf32>
    %40 = arith.mulf %29, %39 : vector<16x32xf32>
    %c0_20 = arith.constant 0 : index
    %c0_21 = arith.constant 0 : index
    %41 = vector.load %arg8[%c0_20, %c0_21] : memref<16x32xf32, #tpu.memory_space<vmem>>, vector<16x32xf32>
    tpu.vector_store %arg8[%c0_20, %c0_21], %40 {strides = array<i32>} : memref<16x32xf32, #tpu.memory_space<vmem>>, vector<16x32xf32>,
    return
  }
  func.func @transform_0(%arg0: i32) -> (i32, i32) {
    %c0_i32 = arith.constant 0 : i32
    %c0_i32_0 = arith.constant 0 : i32
    return %arg0, %c0_i32 : i32, i32
  }
  func.func @transform_1(%arg0: i32) -> (i32, i32) {
    %c0_i32 = arith.constant 0 : i32
    %c0_i32_0 = arith.constant 0 : i32
    %c0_i32_1 = arith.constant 0 : i32
    return %c0_i32, %c0_i32_0 : i32, i32
  }
  func.func @transform_2(%arg0: i32) -> (i32, i32) {
    %c0_i32 = arith.constant 0 : i32
    %c0_i32_0 = arith.constant 0 : i32
    %c0_i32_1 = arith.constant 0 : i32
    return %c0_i32, %c0_i32_0 : i32, i32
  }
  func.func @transform_3(%arg0: i32) -> (i32, i32) {
    %c0_i32 = arith.constant 0 : i32
    %c0_i32_0 = arith.constant 0 : i32
    %c0_i32_1 = arith.constant 0 : i32
    return %c0_i32, %c0_i32_0 : i32, i32
  }
  func.func @transform_4(%arg0: i32) -> (i32, i32) {
    %c0_i32 = arith.constant 0 : i32
    %c0_i32_0 = arith.constant 0 : i32
    %c0_i32_1 = arith.constant 0 : i32
    return %c0_i32, %c0_i32_0 : i32, i32
  }
  func.func @transform_5(%arg0: i32) -> (i32, i32) {
    %c0_i32 = arith.constant 0 : i32
    %c0_i32_0 = arith.constant 0 : i32
    %c0_i32_1 = arith.constant 0 : i32
    return %c0_i32, %c0_i32_0 : i32, i32
  }
  func.func @transform_6(%arg0: i32) -> (i32, i32) {
    %c0_i32 = arith.constant 0 : i32
    %c0_i32_0 = arith.constant 0 : i32
    %c0_i32_1 = arith.constant 0 : i32
    return %c0_i32, %c0_i32_0 : i32, i32
  }
  func.func @transform_7(%arg0: i32) -> (i32, i32) {
    %c0_i32 = arith.constant 0 : i32
    %c0_i32_0 = arith.constant 0 : i32
    return %arg0, %c0_i32 : i32, i32
  }
}

module attributes {stable_mosaic.version = 11 : i64} {
  func.func @_layernorm_kernel(%arg0: i32, %arg1: memref<16x32xf32, #tpu.memory_space<vmem>>, %arg2: memref<1x32xf32, #tpu.memory_space<vmem>>, %arg3: memref<1x32xf32, #tpu.memory_space<vmem>>, %arg4: memref<16x32xf32, #tpu.memory_space<vmem>>) attributes {dimension_semantics = [#tpu.dimension_semantics<parallel>], iteration_bounds = array<i64: 1>, scalar_prefetch = 0 : i64, scratch_operands = 0 : i64, tpu.core_type = #tpu.core_type<tc>, window_params = [{transform_indices = @transform_0, window_bounds = array<i64: 16, 32>}, {pipeline_mode = #tpu.pipeline_mode<synchronous>, transform_indices = @transform_1, window_bounds = array<i64: 1, 32>}, {pipeline_mode = #tpu.pipeline_mode<synchronous>, transform_indices = @transform_2, window_bounds = array<i64: 1, 32>}, {transform_indices = @transform_3, window_bounds = array<i64: 16, 32>}]} {
    %c0 = arith.constant 0 : index
    %c0_0 = arith.constant 0 : index
    %0 = vector.load %arg1[%c0, %c0_0] : memref<16x32xf32, #tpu.memory_space<vmem>>, vector<16x32xf32>
    %c0_1 = arith.constant 0 : index
    %c0_2 = arith.constant 0 : index
    %1 = vector.load %arg2[%c0_1, %c0_2] : memref<1x32xf32, #tpu.memory_space<vmem>>, vector<1x32xf32>
    %c0_3 = arith.constant 0 : index
    %c0_4 = arith.constant 0 : index
    %2 = vector.load %arg3[%c0_3, %c0_4] : memref<1x32xf32, #tpu.memory_space<vmem>>, vector<1x32xf32>
    %cst = arith.constant dense<0.000000e+00> : vector<16xf32>
    %3 = vector.multi_reduction <add>, %0, %cst [1] : vector<16x32xf32> to vector<16xf32>
    %4 = vector.shape_cast %3 : vector<16xf32> to vector<16x1xf32>
    %cst_5 = arith.constant 3.200000e+01 : f32
    %5 = vector.broadcast %cst_5 : f32 to vector<16x1xf32>
    %6 = arith.divf %4, %5 : vector<16x1xf32>
    %7 = vector.broadcast %6 : vector<16x1xf32> to vector<16x32xf32>
    %8 = arith.subf %0, %7 : vector<16x32xf32>
    %9 = arith.mulf %8, %8 : vector<16x32xf32>
    %cst_6 = arith.constant dense<0.000000e+00> : vector<16xf32>
    %10 = vector.multi_reduction <add>, %9, %cst_6 [1] : vector<16x32xf32> to vector<16xf32>
    %11 = vector.shape_cast %10 : vector<16xf32> to vector<16x1xf32>
    %cst_7 = arith.constant 3.200000e+01 : f32
    %12 = vector.broadcast %cst_7 : f32 to vector<16x1xf32>
    %13 = arith.divf %11, %12 : vector<16x1xf32>
    %14 = vector.broadcast %6 : vector<16x1xf32> to vector<16x32xf32>
    %15 = arith.subf %0, %14 : vector<16x32xf32>
    %cst_8 = arith.constant 9.99999974E-6 : f32
    %16 = vector.broadcast %cst_8 : f32 to vector<16x1xf32>
    %17 = arith.addf %13, %16 : vector<16x1xf32>
    %18 = math.rsqrt %17 : vector<16x1xf32>
    %19 = vector.broadcast %18 : vector<16x1xf32> to vector<16x32xf32>
    %20 = arith.mulf %15, %19 : vector<16x32xf32>
    %21 = vector.broadcast %1 : vector<1x32xf32> to vector<16x32xf32>
    %22 = arith.mulf %20, %21 : vector<16x32xf32>
    %23 = vector.broadcast %2 : vector<1x32xf32> to vector<16x32xf32>
    %24 = arith.addf %22, %23 : vector<16x32xf32>
    %c0_9 = arith.constant 0 : index
    %c0_10 = arith.constant 0 : index
    %25 = vector.load %arg4[%c0_9, %c0_10] : memref<16x32xf32, #tpu.memory_space<vmem>>, vector<16x32xf32>
    tpu.vector_store %arg4[%c0_9, %c0_10], %24 {strides = array<i32>} : memref<16x32xf32, #tpu.memory_space<vmem>>, vector<16x32xf32>,
    return
  }
  func.func @transform_0(%arg0: i32) -> (i32, i32) {
    %c0_i32 = arith.constant 0 : i32
    %c0_i32_0 = arith.constant 0 : i32
    return %arg0, %c0_i32 : i32, i32
  }
  func.func @transform_1(%arg0: i32) -> (i32, i32) {
    %c0_i32 = arith.constant 0 : i32
    %c0_i32_0 = arith.constant 0 : i32
    %c0_i32_1 = arith.constant 0 : i32
    return %c0_i32, %c0_i32_0 : i32, i32
  }
  func.func @transform_2(%arg0: i32) -> (i32, i32) {
    %c0_i32 = arith.constant 0 : i32
    %c0_i32_0 = arith.constant 0 : i32
    %c0_i32_1 = arith.constant 0 : i32
    return %c0_i32, %c0_i32_0 : i32, i32
  }
  func.func @transform_3(%arg0: i32) -> (i32, i32) {
    %c0_i32 = arith.constant 0 : i32
    %c0_i32_0 = arith.constant 0 : i32
    return %arg0, %c0_i32 : i32, i32
  }
}

module attributes {stable_mosaic.version = 11 : i64} {
  func.func @_matmul_bias_kernel(%arg0: i32, %arg1: memref<16x32xf32, #tpu.memory_space<vmem>>, %arg2: memref<32x128xf32, #tpu.memory_space<vmem>>, %arg3: memref<1x128xf32, #tpu.memory_space<vmem>>, %arg4: memref<16x128xf32, #tpu.memory_space<vmem>>) attributes {dimension_semantics = [#tpu.dimension_semantics<parallel>], iteration_bounds = array<i64: 1>, scalar_prefetch = 0 : i64, scratch_operands = 0 : i64, tpu.core_type = #tpu.core_type<tc>, window_params = [{transform_indices = @transform_0, window_bounds = array<i64: 16, 32>}, {pipeline_mode = #tpu.pipeline_mode<synchronous>, transform_indices = @transform_1, window_bounds = array<i64: 32, 128>}, {pipeline_mode = #tpu.pipeline_mode<synchronous>, transform_indices = @transform_2, window_bounds = array<i64: 1, 128>}, {transform_indices = @transform_3, window_bounds = array<i64: 16, 128>}]} {
    %c0 = arith.constant 0 : index
    %c0_0 = arith.constant 0 : index
    %0 = vector.load %arg1[%c0, %c0_0] : memref<16x32xf32, #tpu.memory_space<vmem>>, vector<16x32xf32>
    %c0_1 = arith.constant 0 : index
    %c0_2 = arith.constant 0 : index
    %1 = vector.load %arg2[%c0_1, %c0_2] : memref<32x128xf32, #tpu.memory_space<vmem>>, vector<32x128xf32>
    %cst = arith.constant dense<0.000000e+00> : vector<16x128xf32>
    %2 = tpu.matmul %0, %1, %cst {dimension_numbers = #tpu.dot_dimension_numbers<[1], [0], [0], [1], [0, 0, 1, 1], [], []>} : vector<16x32xf32>, vector<32x128xf32>, vector<16x128xf32> -> vector<16x128xf32>
    %c0_3 = arith.constant 0 : index
    %c0_4 = arith.constant 0 : index
    %3 = vector.load %arg3[%c0_3, %c0_4] : memref<1x128xf32, #tpu.memory_space<vmem>>, vector<1x128xf32>
    %4 = vector.broadcast %3 : vector<1x128xf32> to vector<16x128xf32>
    %5 = arith.addf %2, %4 : vector<16x128xf32>
    %c0_5 = arith.constant 0 : index
    %c0_6 = arith.constant 0 : index
    %6 = vector.load %arg4[%c0_5, %c0_6] : memref<16x128xf32, #tpu.memory_space<vmem>>, vector<16x128xf32>
    tpu.vector_store %arg4[%c0_5, %c0_6], %5 {strides = array<i32>} : memref<16x128xf32, #tpu.memory_space<vmem>>, vector<16x128xf32>,
    return
  }
  func.func @transform_0(%arg0: i32) -> (i32, i32) {
    %c0_i32 = arith.constant 0 : i32
    %c0_i32_0 = arith.constant 0 : i32
    return %arg0, %c0_i32 : i32, i32
  }
  func.func @transform_1(%arg0: i32) -> (i32, i32) {
    %c0_i32 = arith.constant 0 : i32
    %c0_i32_0 = arith.constant 0 : i32
    %c0_i32_1 = arith.constant 0 : i32
    return %c0_i32, %c0_i32_0 : i32, i32
  }
  func.func @transform_2(%arg0: i32) -> (i32, i32) {
    %c0_i32 = arith.constant 0 : i32
    %c0_i32_0 = arith.constant 0 : i32
    %c0_i32_1 = arith.constant 0 : i32
    return %c0_i32, %c0_i32_0 : i32, i32
  }
  func.func @transform_3(%arg0: i32) -> (i32, i32) {
    %c0_i32 = arith.constant 0 : i32
    %c0_i32_0 = arith.constant 0 : i32
    return %arg0, %c0_i32 : i32, i32
  }
}

</mosaic_0001>

<llo_original>
// kernel: _lambda_.20
$region0: #{_lambda_.20}
  #allocation0 [shape = 'u32[]', space=smem, size = 0x4, offset = 0x4, fixed_abs, tag = 'smem constant byte address 0x4 - core index']
  #allocation1 [shape = 'u32[144,128]{1,0:T(1,128)}', space=vmem, size = 0x12000, scoped, tag = 'internal scratch']
  %s0 = inlined_call_operand.vmem [shape: f32[2,8,32], index: 0, kind: input, shape index: {}]
  %s1 = inlined_call_operand.vmem [shape: f32[8,32], index: 1, kind: input, shape index: {}]
  %s2 = inlined_call_operand.vmem [shape: f32[2,8,32], index: 2, kind: output, shape index: {}]
  %s3 = sld [smem:[#allocation0]]
  $region41: #{_lambda_.20} parent=0
    _
  %s5 = ssub.s32 1, %s3
  %s6 = scalar_select 0, %s5, %s3
  loop: start=0, step=1, limit=4
  $region2: #{_lambda_.20} parent=0 // loop_pre_header
    _
  $region3: #{_lambda_.20} parent=0 // loop_header
    %s8 = sphi 0, %s12
    %p9 = scmp.ge.s32.totalorder %s8, 4
    %s18 = sphi 0, %s20
    %s21 = sphi 0, %s18
    %s22 = sphi 0, %s21
    %s38 = sphi 0, %s22
    %s42 = sphi 0, %s42
    %s44 = sphi 0, %s42
    %s45 = sphi 0, %s44
    %s59 = sphi 0, %s45
    %s65 = sphi 0, %s67
    %s68 = sphi 0, %s65
    %s69 = sphi 0, %s68
    %s85 = sphi 0, %s69
  $region4: #{_lambda_.20} parent=0 // loop_header_branch
    %11 = sbr.rel (%p9) target = $region8
  $region5: #{_lambda_.20} parent=0 // loop_body
    %s13 = ssub.s32 %s8, 1
    %s14 = ssub.s32 %s8, 2
    %s15 = sadd.s32 %s8, 1
    %s16 = ssub.s32 %s8, %s15
    %p17 = scmp.eq.s32.totalorder %s16, 0
    %s19 = sadd.s32 %s18, 1
    %s20 = scalar_select %p17, %s18, %s19
    %p23 = pneg %p17
    %p24 = scmp.eq.s32.totalorder %s8, 1
    %p25 = por %p23, %p24
    %p26 = scmp.ne.s32.totalorder %s18, %s21
    %p27 = scmp.eq.s32.totalorder %s8, 0
    %p28 = por %p26, %p27
    %p29 = scmp.ne.s32.totalorder %s18, %s21
    %p30 = scmp.eq.s32.totalorder %s13, 1
    %p31 = por %p29, %p30
    %p32 = scmp.ne.s32.totalorder %s21, %s22
    %p33 = scmp.eq.s32.totalorder %s13, 0
    %p34 = por %p32, %p33
    %p35 = scmp.ne.s32.totalorder %s21, %s22
    %p36 = scmp.eq.s32.totalorder %s14, 1
    %p37 = por %p35, %p36
    %p39 = scmp.ne.s32.totalorder %s22, %s38
    %p40 = scmp.eq.s32.totalorder %s14, 0
    %p41 = por %p39, %p40
    %s43 = sadd.s32 %s42, 1
    %p46 = scmp.eq.s32.totalorder %s8, 1
    %p47 = scmp.ne.s32.totalorder %s42, %s44
    %p48 = scmp.eq.s32.totalorder %s8, 0
    %p49 = por %p47, %p48
    %p50 = scmp.ne.s32.totalorder %s42, %s44
    %p51 = scmp.eq.s32.totalorder %s13, 1
    %p52 = por %p50, %p51
    %p53 = scmp.ne.s32.totalorder %s44, %s45
    %p54 = scmp.eq.s32.totalorder %s13, 0
    %p55 = por %p53, %p54
    %p56 = scmp.ne.s32.totalorder %s44, %s45
    %p57 = scmp.eq.s32.totalorder %s14, 1
    %p58 = por %p56, %p57
    %p60 = scmp.ne.s32.totalorder %s45, %s59
    %p61 = scmp.eq.s32.totalorder %s14, 0
    %p62 = por %p60, %p61
    %s63 = ssub.s32 %s8, %s15
    %p64 = scmp.eq.s32.totalorder %s63, 0
    %s66 = sadd.s32 %s65, 1
    %s67 = scalar_select %p64, %s65, %s66
    %p70 = pneg %p64
    %p71 = scmp.eq.s32.totalorder %s8, 1
    %p72 = por %p70, %p71
    %p73 = scmp.ne.s32.totalorder %s65, %s68
    %p74 = scmp.eq.s32.totalorder %s8, 0
    %p75 = por %p73, %p74
    %p76 = scmp.ne.s32.totalorder %s65, %s68
    %p77 = scmp.eq.s32.totalorder %s13, 1
    %p78 = por %p76, %p77
    %p79 = scmp.ne.s32.totalorder %s68, %s69
    %p80 = scmp.eq.s32.totalorder %s13, 0
    %p81 = por %p79, %p80
    %p82 = scmp.ne.s32.totalorder %s68, %s69
    %p83 = scmp.eq.s32.totalorder %s14, 1
    %p84 = por %p82, %p83
    %p86 = scmp.ne.s32.totalorder %s69, %s85
    %p87 = scmp.eq.s32.totalorder %s14, 0
    %p88 = por %p86, %p87
    %p89 = scmp.le.s32.totalorder 1, %s8
    %p90 = scmp.lt.s32.totalorder %s8, 3
    %p91 = pnand %p89, %p90
    %p92 = pneg %p91
    // Predicated region
    $region9: #{_lambda_.20} parent=5 // pred_check
      _
    $region10: #{_lambda_.20} parent=5 // pred_check_branch
      %94 = sbr.rel (%p91) target = $region12
    $region11: #{_lambda_.20} parent=5 // pred_region
      %s95 = ssub.s32 %s8, 1
      // Predicated region
      $region13: #{_lambda_.20} parent=11 // pred_check
        %p96 = pneg %p55
      $region14: #{_lambda_.20} parent=11 // pred_check_branch
        %98 = sbr.rel (%p96) target = $region16
      $region15: #{_lambda_.20} parent=11 // pred_region
        _
      $region16: #{_lambda_.20} parent=11 // pred_fallthru
        _
    $region12: #{_lambda_.20} parent=5 // pred_fallthru
      _
    %p99 = scmp.lt.s32.totalorder %s8, 2
    // Predicated region
    $region17: #{_lambda_.20} parent=5 // pred_check
      %p100 = pneg %p99
    $region18: #{_lambda_.20} parent=5 // pred_check_branch
      %102 = sbr.rel (%p100) target = $region20
    $region19: #{_lambda_.20} parent=5 // pred_region
      // Predicated region
      $region21: #{_lambda_.20} parent=19 // pred_check
        %p103 = pneg %p28
      $region22: #{_lambda_.20} parent=19 // pred_check_branch
        %105 = sbr.rel (%p103) target = $region24
      $region23: #{_lambda_.20} parent=19 // pred_region
        %p106 = scmp.lt.s32.totalorder %s8, 1
        %s107 = scalar_select %p106, %s8, 1
        %s108 = smul.addr %s107, 8
        %s109 = scalar_lea.vmem %s0, %s108
      $region24: #{_lambda_.20} parent=19 // pred_fallthru
        _
    $region20: #{_lambda_.20} parent=5 // pred_fallthru
      _
    %p110 = scmp.le.s32.totalorder 1, %s8
    %p111 = scmp.lt.s32.totalorder %s8, 3
    %p112 = pnand %p110, %p111
    %p113 = pneg %p112
    // Predicated region
    $region25: #{_lambda_.20} parent=5 // pred_check
      _
    $region26: #{_lambda_.20} parent=5 // pred_check_branch
      %115 = sbr.rel (%p112) target = $region28
    $region27: #{_lambda_.20} parent=5 // pred_region
      %s116 = ssub.s32 %s8, 1
      %p117 = scmp.lt.s32.totalorder %s13, 1
      %s118 = scalar_select %p117, %s13, 1
      %s119 = smul.addr %s118, 8
      %s120 = scalar_lea.vmem %s0, %s119
      %p121 = pneg %p34
      %p122 = pneg %p31
      %p123 = pneg %p55
      %p124 = pneg %p52
      %p125 = pneg %p81
      %p126 = pneg %p78
      %p127 = scmp.lt.s32.totalorder %s13, 1
      %s128 = scalar_select %p127, %s13, 1
      %s129 = smul.addr %s128, 8
      %s130 = scalar_lea.vmem %s2, %s129
      %p131 = scmp.lt.s32.totalorder %s13, 1
      %s132 = scalar_select %p131, %s13, 1
      %s133 = smul.addr %s132, 8
      %s134 = scalar_lea.vmem %s0, %s133
      %p135 = scmp.lt.s32.totalorder %s13, 1
      %s136 = scalar_select %p135, %s13, 1
      %s137 = smul.addr %s136, 8
      %s138 = scalar_lea.vmem %s2, %s137
      %v139 = vld [vmem:[%s134] sm:$0xff]
      %v140 = vmul.f32 %v139, 5.656854
      %v141 = vld [vmem:[%s1] sm:$0xff]
      %v142 = vadd.f32 %v140, %v141
      %vm143 = vcmask 261120
      %144 = vst.msk [vmem:[%s138] sm:$0xff] %vm143, %v142
      %p145 = scmp.lt.s32.totalorder %s13, 1
      %s146 = scalar_select %p145, %s13, 1
      %s147 = smul.addr %s146, 8
      %s148 = scalar_lea.vmem %s2, %s147
      // Predicated region
      $region29: #{_lambda_.20} parent=27 // pred_check
        %p149 = pneg %p78
      $region30: #{_lambda_.20} parent=27 // pred_check_branch
        %151 = sbr.rel (%p149) target = $region32
      $region31: #{_lambda_.20} parent=27 // pred_region
        _
      $region32: #{_lambda_.20} parent=27 // pred_fallthru
        _
    $region28: #{_lambda_.20} parent=5 // pred_fallthru
      _
    %p152 = scmp.le.s32.totalorder 2, %s8
    // Predicated region
    $region33: #{_lambda_.20} parent=5 // pred_check
      %p153 = pneg %p152
    $region34: #{_lambda_.20} parent=5 // pred_check_branch
      %155 = sbr.rel (%p153) target = $region36
    $region35: #{_lambda_.20} parent=5 // pred_region
      %s156 = ssub.s32 %s8, 2
      // Predicated region
      $region37: #{_lambda_.20} parent=35 // pred_check
        %p157 = pneg %p84
      $region38: #{_lambda_.20} parent=35 // pred_check_branch
        %159 = sbr.rel (%p157) target = $region40
      $region39: #{_lambda_.20} parent=35 // pred_region
        %p160 = scmp.lt.s32.totalorder %s14, 1
        %s161 = scalar_select %p160, %s14, 1
        %s162 = smul.addr %s161, 8
        %s163 = scalar_lea.vmem %s2, %s162
      $region40: #{_lambda_.20} parent=35 // pred_fallthru
        _
    $region36: #{_lambda_.20} parent=5 // pred_fallthru
      _
  $region6: #{_lambda_.20} parent=0 // loop_footer
    %s12 = sadd.s32 1, %s8
  $region7: #{_lambda_.20} parent=0 // loop_footer_branch
    %7 = sbr.rel target = $region3
  $region8: #{_lambda_.20} parent=0 // loop_exit
    _

// kernel: _lambda_.21
$region0: #{_lambda_.21}
  #allocation0 [shape = 'u32[]', space=smem, size = 0x4, offset = 0x4, fixed_abs, tag = 'smem constant byte address 0x4 - core index']
  #allocation1 [shape = 'u32[144,128]{1,0:T(1,128)}', space=vmem, size = 0x12000, scoped, tag = 'internal scratch']
  %s0 = inlined_call_operand.vmem [shape: f32[16,32], index: 0, kind: input, shape index: {}]
  %s1 = inlined_call_operand.vmem [shape: f32[1,32], index: 1, kind: input, shape index: {}]
  %s2 = inlined_call_operand.vmem [shape: f32[1,32], index: 2, kind: input, shape index: {}]
  %s3 = inlined_call_operand.vmem [shape: f32[32,64], index: 3, kind: input, shape index: {}]
  %s4 = inlined_call_operand.vmem [shape: f32[1,64], index: 4, kind: input, shape index: {}]
  %s5 = inlined_call_operand.vmem [shape: f32[64,32], index: 5, kind: input, shape index: {}]
  %s6 = inlined_call_operand.vmem [shape: f32[1,32], index: 6, kind: input, shape index: {}]
  %s7 = inlined_call_operand.vmem [shape: f32[16,32], index: 7, kind: output, shape index: {}]
  %s8 = sld [smem:[#allocation0]]
  $region38: #{_lambda_.21} parent=0
    _
  %s10 = ssub.s32 1, %s8
  %s11 = scalar_select 0, %s10, %s8
  // Predicated region
  $region2: #{_lambda_.21} parent=0 // pred_check
    _
  $region3: #{_lambda_.21} parent=0 // pred_check_branch
    %13 = sbr.rel (0) target = $region5
  $region4: #{_lambda_.21} parent=0 // pred_region
    _
  $region5: #{_lambda_.21} parent=0 // pred_fallthru
    _
  // Predicated region
  $region6: #{_lambda_.21} parent=0 // pred_check
    _
  $region7: #{_lambda_.21} parent=0 // pred_check_branch
    %15 = sbr.rel (0) target = $region9
  $region8: #{_lambda_.21} parent=0 // pred_region
    _
  $region9: #{_lambda_.21} parent=0 // pred_fallthru
    _
  // Predicated region
  $region10: #{_lambda_.21} parent=0 // pred_check
    _
  $region11: #{_lambda_.21} parent=0 // pred_check_branch
    %17 = sbr.rel (0) target = $region13
  $region12: #{_lambda_.21} parent=0 // pred_region
    _
  $region13: #{_lambda_.21} parent=0 // pred_fallthru
    _
  // Predicated region
  $region14: #{_lambda_.21} parent=0 // pred_check
    _
  $region15: #{_lambda_.21} parent=0 // pred_check_branch
    %19 = sbr.rel (0) target = $region17
  $region16: #{_lambda_.21} parent=0 // pred_region
    _
  $region17: #{_lambda_.21} parent=0 // pred_fallthru
    _
  // Predicated region
  $region18: #{_lambda_.21} parent=0 // pred_check
    _
  $region19: #{_lambda_.21} parent=0 // pred_check_branch
    %21 = sbr.rel (0) target = $region21
  $region20: #{_lambda_.21} parent=0 // pred_region
    _
  $region21: #{_lambda_.21} parent=0 // pred_fallthru
    _
  // Predicated region
  $region22: #{_lambda_.21} parent=0 // pred_check
    _
  $region23: #{_lambda_.21} parent=0 // pred_check_branch
    %23 = sbr.rel (0) target = $region25
  $region24: #{_lambda_.21} parent=0 // pred_region
    _
  $region25: #{_lambda_.21} parent=0 // pred_fallthru
    _
  // Predicated region
  $region26: #{_lambda_.21} parent=0 // pred_check
    _
  $region27: #{_lambda_.21} parent=0 // pred_check_branch
    %25 = sbr.rel (0) target = $region29
  $region28: #{_lambda_.21} parent=0 // pred_region
    _
  $region29: #{_lambda_.21} parent=0 // pred_fallthru
    _
  %v26 = vld [vmem:[%s0] sm:$0xff]
  %v27 = vld [vmem:[%s0 + $0x8] sm:$0xff]
  %v28 = vld [vmem:[%s1] sm:$0x1]
  %v29 = vld [vmem:[%s2] sm:$0x1]
  %vm30 = vcmask 261120
  %v31 = vsel %vm30, %v26, 0.0
  %32 = vadd.xlane.f32.xlu0 %v31
  %v33 = vpop.xlane.xlu0 %32
  %v34 = vsel %vm30, %v27, 0.0
  %35 = vadd.xlane.f32.xlu0 %v34
  %v36 = vpop.xlane.xlu0 %35
  %v37 = vrcp.pop 32.0
  %v38 = vmul.f32 %v33, %v37
  %v39 = vmul.f32 %v36, %v37
  %v40 = vsub.f32 %v26, %v38
  %v41 = vsub.f32 %v27, %v39
  %v42 = vmul.f32 %v40, %v40
  %v43 = vmul.f32 %v41, %v41
  %v44 = vsel %vm30, %v42, 0.0
  %45 = vadd.xlane.f32.xlu0 %v44
  %v46 = vpop.xlane.xlu0 %45
  %v47 = vsel %vm30, %v43, 0.0
  %48 = vadd.xlane.f32.xlu0 %v47
  %v49 = vpop.xlane.xlu0 %48
  %v50 = vmul.f32 %v46, %v37
  %v51 = vmul.f32 %v49, %v37
  %v52 = vadd.f32 %v50, 1e-05
  %v53 = vadd.f32 %v51, 1e-05
  %v54 = vrsqrt.pop %v52
  %v55 = vrsqrt.pop %v53
  %v56 = vmul.f32 %v40, %v54
  %v57 = vmul.f32 %v41, %v55
  %v59 = vlaneseq
  %v60 = vshrl.u32 %v59, 7
  %v61 = vsub.s32 0, %v60
  %v62 = vrot.slane %v28, %v61
  %v64 = vmul.f32 %v56, %v62
  %v65 = vmul.f32 %v57, %v62
  %v67 = vlaneseq
  %v68 = vshrl.u32 %v67, 7
  %v69 = vsub.s32 0, %v68
  %v70 = vrot.slane %v29, %v69
  %v72 = vadd.f32 %v64, %v70
  %v73 = vadd.f32 %v65, %v70
  %v74 = vld [vmem:[%s3] sm:$0xff]
  %v75 = vld [vmem:[%s3 + $0x8] sm:$0xff]
  %v76 = vld [vmem:[%s3 + $0x10] sm:$0xff]
  %v77 = vld [vmem:[%s3 + $0x18] sm:$0xff]
  %v78 = vld [vmem:[%s4] sm:$0x1]
  %v80 = vlaneseq
  %v81 = vshrl.u32 %v80, 7
  %v82 = vsub.s32 0, %v81
  %v83 = vrot.slane %v78, %v82
  %v86 = vsel %vm30, %v72, 0
  %v89 = vsel %vm30, %v73, 0
  %91 = vmatprep.subr.mxu0 0.0
  %92 = vmatpush1.msra.mxu0 %v74
  %93 = vmatprep.subr.mxu0 0.0
  %94 = vmatpush1.msra.mxu0 %v75
  %95 = vmatprep.subr.mxu0 0.0
  %96 = vmatpush1.msra.mxu0 %v76
  %97 = vmatprep.subr.mxu0 0.0
  %98 = vmatpush1.msra.mxu0 %v77
  %99 = vmatprep.subr.mxu0 0.0
  %100 = vmatpush1.msra.mxu0 0.0
  %101 = vmatprep.subr.mxu0 0.0
  %102 = vmatpush1.msra.mxu0 0.0
  %103 = vmatprep.subr.mxu0 0.0
  %104 = vmatpush1.msra.mxu0 0.0
  %105 = vmatprep.subr.mxu0 0.0
  %106 = vmatpush1.msra.mxu0 0.0
  %107 = vmatprep.subr.mxu0 0.0
  %108 = vmatpush1.msra.mxu0 0.0
  %109 = vmatprep.subr.mxu0 0.0
  %110 = vmatpush1.msra.mxu0 0.0
  %111 = vmatprep.subr.mxu0 0.0
  %112 = vmatpush1.msra.mxu0 0.0
  %113 = vmatprep.subr.mxu0 0.0
  %114 = vmatpush1.msra.mxu0 0.0
  %115 = vmatprep.subr.mxu0 0.0
  %116 = vmatpush1.msra.mxu0 0.0
  %117 = vmatprep.subr.mxu0 0.0
  %118 = vmatpush1.msra.mxu0 0.0
  %119 = vmatprep.subr.mxu0 0.0
  %120 = vmatpush1.msra.mxu0 0.0
  %121 = vmatprep.subr.mxu0 0.0
  %122 = vmatpush1.msra.mxu0 0.0
  %123 = vmatprep.subr.mxu0 0.0
  %124 = vmatpush1.msra.mxu0 0.0
  %125 = vmatprep.subr.mxu0 0.0
  %126 = vmatpush1.msra.mxu0 0.0
  %127 = vmatprep.subr.mxu0 0.0
  %128 = vmatpush1.msra.mxu0 0.0
  %129 = vmatprep.subr.mxu0 0.0
  %130 = vmatpush1.msra.mxu0 0.0
  %131 = vmatprep.subr.mxu0 0.0
  %132 = vmatpush1.msra.mxu0 0.0
  %133 = vmatprep.subr.mxu0 0.0
  %134 = vmatpush1.msra.mxu0 0.0
  %135 = vmatprep.subr.mxu0 0.0
  %136 = vmatpush1.msra.mxu0 0.0
  %137 = vmatprep.subr.mxu0 0.0
  %138 = vmatpush1.msra.mxu0 0.0
  %139 = vmatprep.subr.mxu0 0.0
  %140 = vmatpush1.msra.mxu0 0.0
  %141 = vmatprep.subr.mxu0 0.0
  %142 = vmatpush1.msra.mxu0 0.0
  %143 = vmatprep.subr.mxu0 0.0
  %144 = vmatpush1.msra.mxu0 0.0
  %145 = vmatprep.subr.mxu0 0.0
  %146 = vmatpush1.msra.mxu0 0.0
  %147 = vmatprep.subr.mxu0 0.0
  %148 = vmatpush1.msra.mxu0 0.0
  %149 = vmatprep.subr.mxu0 0.0
  %150 = vmatpush1.msra.mxu0 0.0
  %151 = vmatprep.subr.mxu0 0.0
  %152 = vmatpush1.msra.mxu0 0.0
  %153 = vmatprep.subr.mxu0 0.0
  %154 = vmatpush1.msra.mxu0 0.0
  %155 = vmatprep.mubr.f32.mxu0 0.0
  %156 = vmatmul.mubr.f32.gmra.mrb[0].mxu0 %v86
  %v157 = vpop.f32.mrb[0].mxu0
  %v158 = vadd.f32 %v83, %v157
  %v159 = vpop.f32.mrb[0].mxu0
  %160 = vmatprep.mubr.f32.mxu0 0.0
  %161 = vmatmul.mubr.f32.gmra.mrb[0].mxu0 %v89
  %v162 = vpop.f32.mrb[0].mxu0
  %v163 = vadd.f32 %v83, %v162
  %v164 = vpop.f32.mrb[0].mxu0
  %165 = vdwg.mxu0
  %v166 = vxor.u32 %v158, 2147483648
  %v167 = vxor.u32 %v163, 2147483648
  %v168 = vmul.f32 %v166, 1.442695
  %v169 = vpow.pop %v168
  %v170 = vmul.f32 %v167, 1.442695
  %v171 = vpow.pop %v170
  %v172 = vadd.f32 %v169, 1.0
  %v173 = vadd.f32 %v171, 1.0
  %v174 = vrcp.pop %v172
  %v175 = vmul.f32 1.0, %v174
  %v176 = vrcp.pop %v173
  %v177 = vmul.f32 1.0, %v176
  %v178 = vmul.f32 %v158, %v175
  %v179 = vmul.f32 %v163, %v177
  %v180 = vld [vmem:[%s5] sm:$0xff]
  %v181 = vld [vmem:[%s5 + $0x8] sm:$0xff]
  %v182 = vld [vmem:[%s5 + $0x10] sm:$0xff]
  %v183 = vld [vmem:[%s5 + $0x18] sm:$0xff]
  %v184 = vld [vmem:[%s5 + $0x20] sm:$0xff]
  %v185 = vld [vmem:[%s5 + $0x28] sm:$0xff]
  %v186 = vld [vmem:[%s5 + $0x30] sm:$0xff]
  %v187 = vld [vmem:[%s5 + $0x38] sm:$0xff]
  %v188 = vld [vmem:[%s6] sm:$0x1]
  %v190 = vlaneseq
  %v191 = vshrl.u32 %v190, 7
  %v192 = vsub.s32 0, %v191
  %v193 = vrot.slane %v188, %v192
  %vm195 = vcmask 523264
  %v197 = vsel %vm195, %v178, 0
  %v200 = vsel %vm195, %v179, 0
  %202 = vmatprep.subr.mxu0 0.0
  %203 = vmatpush1.msra.mxu0 %v180
  %204 = vmatprep.subr.mxu0 0.0
  %205 = vmatpush1.msra.mxu0 %v181
  %206 = vmatprep.subr.mxu0 0.0
  %207 = vmatpush1.msra.mxu0 %v182
  %208 = vmatprep.subr.mxu0 0.0
  %209 = vmatpush1.msra.mxu0 %v183
  %210 = vmatprep.subr.mxu0 0.0
  %211 = vmatpush1.msra.mxu0 %v184
  %212 = vmatprep.subr.mxu0 0.0
  %213 = vmatpush1.msra.mxu0 %v185
  %214 = vmatprep.subr.mxu0 0.0
  %215 = vmatpush1.msra.mxu0 %v186
  %216 = vmatprep.subr.mxu0 0.0
  %217 = vmatpush1.msra.mxu0 %v187
  %218 = vmatprep.subr.mxu0 0.0
  %219 = vmatpush1.msra.mxu0 0.0
  %220 = vmatprep.subr.mxu0 0.0
  %221 = vmatpush1.msra.mxu0 0.0
  %222 = vmatprep.subr.mxu0 0.0
  %223 = vmatpush1.msra.mxu0 0.0
  %224 = vmatprep.subr.mxu0 0.0
  %225 = vmatpush1.msra.mxu0 0.0
  %226 = vmatprep.subr.mxu0 0.0
  %227 = vmatpush1.msra.mxu0 0.0
  %228 = vmatprep.subr.mxu0 0.0
  %229 = vmatpush1.msra.mxu0 0.0
  %230 = vmatprep.subr.mxu0 0.0
  %231 = vmatpush1.msra.mxu0 0.0
  %232 = vmatprep.subr.mxu0 0.0
  %233 = vmatpush1.msra.mxu0 0.0
  %234 = vmatprep.subr.mxu0 0.0
  %235 = vmatpush1.msra.mxu0 0.0
  %236 = vmatprep.subr.mxu0 0.0
  %237 = vmatpush1.msra.mxu0 0.0
  %238 = vmatprep.subr.mxu0 0.0
  %239 = vmatpush1.msra.mxu0 0.0
  %240 = vmatprep.subr.mxu0 0.0
  %241 = vmatpush1.msra.mxu0 0.0
  %242 = vmatprep.subr.mxu0 0.0
  %243 = vmatpush1.msra.mxu0 0.0
  %244 = vmatprep.subr.mxu0 0.0
  %245 = vmatpush1.msra.mxu0 0.0
  %246 = vmatprep.subr.mxu0 0.0
  %247 = vmatpush1.msra.mxu0 0.0
  %248 = vmatprep.subr.mxu0 0.0
  %249 = vmatpush1.msra.mxu0 0.0
  %250 = vmatprep.subr.mxu0 0.0
  %251 = vmatpush1.msra.mxu0 0.0
  %252 = vmatprep.subr.mxu0 0.0
  %253 = vmatpush1.msra.mxu0 0.0
  %254 = vmatprep.subr.mxu0 0.0
  %255 = vmatpush1.msra.mxu0 0.0
  %256 = vmatprep.subr.mxu0 0.0
  %257 = vmatpush1.msra.mxu0 0.0
  %258 = vmatprep.subr.mxu0 0.0
  %259 = vmatpush1.msra.mxu0 0.0
  %260 = vmatprep.subr.mxu0 0.0
  %261 = vmatpush1.msra.mxu0 0.0
  %262 = vmatprep.subr.mxu0 0.0
  %263 = vmatpush1.msra.mxu0 0.0
  %264 = vmatprep.subr.mxu0 0.0
  %265 = vmatpush1.msra.mxu0 0.0
  %266 = vmatprep.mubr.f32.mxu0 0.0
  %267 = vmatmul.mubr.f32.gmra.mrb[0].mxu0 %v197
  %v268 = vpop.f32.mrb[0].mxu0
  %v269 = vadd.f32 %v193, %v268
  %v270 = vpop.f32.mrb[0].mxu0
  %271 = vmatprep.mubr.f32.mxu0 0.0
  %272 = vmatmul.mubr.f32.gmra.mrb[0].mxu0 %v200
  %v273 = vpop.f32.mrb[0].mxu0
  %v274 = vadd.f32 %v193, %v273
  %v275 = vpop.f32.mrb[0].mxu0
  %276 = vdwg.mxu0
  %v277 = vmul.f32 %v269, 0.5
  %v278 = vmul.f32 %v274, 0.5
  %v279 = vadd.f32 %v26, %v277
  %v280 = vadd.f32 %v27, %v278
  %281 = vst.msk [vmem:[%s7] sm:$0xff] %vm30, %v279
  %282 = vst.msk [vmem:[%s7 + $0x8] sm:$0xff] %vm30, %v280
  // Predicated region
  $region30: #{_lambda_.21} parent=0 // pred_check
    _
  $region31: #{_lambda_.21} parent=0 // pred_check_branch
    %284 = sbr.rel (0) target = $region33
  $region32: #{_lambda_.21} parent=0 // pred_region
    _
  $region33: #{_lambda_.21} parent=0 // pred_fallthru
    _
  // Predicated region
  $region34: #{_lambda_.21} parent=0 // pred_check
    _
  $region35: #{_lambda_.21} parent=0 // pred_check_branch
    %286 = sbr.rel (0) target = $region37
  $region36: #{_lambda_.21} parent=0 // pred_region
    _
  $region37: #{_lambda_.21} parent=0 // pred_fallthru
    _

// kernel: _lambda_.22
$region0: #{_lambda_.22}
  #allocation0 [shape = 'u32[]', space=smem, size = 0x4, offset = 0x4, fixed_abs, tag = 'smem constant byte address 0x4 - core index']
  #allocation1 [shape = 'u32[144,128]{1,0:T(1,128)}', space=vmem, size = 0x12000, scoped, tag = 'internal scratch']
  %s0 = inlined_call_operand.vmem [shape: f32[16,32], index: 0, kind: input, shape index: {}]
  %s1 = inlined_call_operand.vmem [shape: f32[1,32], index: 1, kind: input, shape index: {}]
  %s2 = inlined_call_operand.vmem [shape: f32[1,32], index: 2, kind: input, shape index: {}]
  %s3 = inlined_call_operand.vmem [shape: f32[32,96], index: 3, kind: input, shape index: {}]
  %s4 = inlined_call_operand.vmem [shape: f32[1,96], index: 4, kind: input, shape index: {}]
  %s5 = inlined_call_operand.vmem [shape: f32[16,96], index: 5, kind: output, shape index: {}]
  %s6 = sld [smem:[#allocation0]]
  $region30: #{_lambda_.22} parent=0
    _
  %s8 = ssub.s32 1, %s6
  %s9 = scalar_select 0, %s8, %s6
  // Predicated region
  $region2: #{_lambda_.22} parent=0 // pred_check
    _
  $region3: #{_lambda_.22} parent=0 // pred_check_branch
    %11 = sbr.rel (0) target = $region5
  $region4: #{_lambda_.22} parent=0 // pred_region
    _
  $region5: #{_lambda_.22} parent=0 // pred_fallthru
    _
  // Predicated region
  $region6: #{_lambda_.22} parent=0 // pred_check
    _
  $region7: #{_lambda_.22} parent=0 // pred_check_branch
    %13 = sbr.rel (0) target = $region9
  $region8: #{_lambda_.22} parent=0 // pred_region
    _
  $region9: #{_lambda_.22} parent=0 // pred_fallthru
    _
  // Predicated region
  $region10: #{_lambda_.22} parent=0 // pred_check
    _
  $region11: #{_lambda_.22} parent=0 // pred_check_branch
    %15 = sbr.rel (0) target = $region13
  $region12: #{_lambda_.22} parent=0 // pred_region
    _
  $region13: #{_lambda_.22} parent=0 // pred_fallthru
    _
  // Predicated region
  $region14: #{_lambda_.22} parent=0 // pred_check
    _
  $region15: #{_lambda_.22} parent=0 // pred_check_branch
    %17 = sbr.rel (0) target = $region17
  $region16: #{_lambda_.22} parent=0 // pred_region
    _
  $region17: #{_lambda_.22} parent=0 // pred_fallthru
    _
  // Predicated region
  $region18: #{_lambda_.22} parent=0 // pred_check
    _
  $region19: #{_lambda_.22} parent=0 // pred_check_branch
    %19 = sbr.rel (0) target = $region21
  $region20: #{_lambda_.22} parent=0 // pred_region
    _
  $region21: #{_lambda_.22} parent=0 // pred_fallthru
    _
  %v20 = vld [vmem:[%s0] sm:$0xff]
  %v21 = vld [vmem:[%s0 + $0x8] sm:$0xff]
  %v22 = vld [vmem:[%s1] sm:$0x1]
  %v23 = vld [vmem:[%s2] sm:$0x1]
  %vm24 = vcmask 261120
  %v25 = vsel %vm24, %v20, 0.0
  %26 = vadd.xlane.f32.xlu0 %v25
  %v27 = vpop.xlane.xlu0 %26
  %v28 = vsel %vm24, %v21, 0.0
  %29 = vadd.xlane.f32.xlu0 %v28
  %v30 = vpop.xlane.xlu0 %29
  %v31 = vrcp.pop 32.0
  %v32 = vmul.f32 %v27, %v31
  %v33 = vmul.f32 %v30, %v31
  %v34 = vsub.f32 %v20, %v32
  %v35 = vsub.f32 %v21, %v33
  %v36 = vmul.f32 %v34, %v34
  %v37 = vmul.f32 %v35, %v35
  %v38 = vsel %vm24, %v36, 0.0
  %39 = vadd.xlane.f32.xlu0 %v38
  %v40 = vpop.xlane.xlu0 %39
  %v41 = vsel %vm24, %v37, 0.0
  %42 = vadd.xlane.f32.xlu0 %v41
  %v43 = vpop.xlane.xlu0 %42
  %v44 = vmul.f32 %v40, %v31
  %v45 = vmul.f32 %v43, %v31
  %v46 = vadd.f32 %v44, 1e-05
  %v47 = vadd.f32 %v45, 1e-05
  %v48 = vrsqrt.pop %v46
  %v49 = vrsqrt.pop %v47
  %v50 = vmul.f32 %v34, %v48
  %v51 = vmul.f32 %v35, %v49
  %v53 = vlaneseq
  %v54 = vshrl.u32 %v53, 7
  %v55 = vsub.s32 0, %v54
  %v56 = vrot.slane %v22, %v55
  %v58 = vmul.f32 %v50, %v56
  %v59 = vmul.f32 %v51, %v56
  %v61 = vlaneseq
  %v62 = vshrl.u32 %v61, 7
  %v63 = vsub.s32 0, %v62
  %v64 = vrot.slane %v23, %v63
  %v66 = vadd.f32 %v58, %v64
  %v67 = vadd.f32 %v59, %v64
  %v68 = vld [vmem:[%s3] sm:$0xff]
  %v69 = vld [vmem:[%s3 + $0x8] sm:$0xff]
  %v70 = vld [vmem:[%s3 + $0x10] sm:$0xff]
  %v71 = vld [vmem:[%s3 + $0x18] sm:$0xff]
  %v72 = vld [vmem:[%s4] sm:$0x1]
  %v74 = vlaneseq
  %v75 = vshrl.u32 %v74, 7
  %v76 = vsub.s32 0, %v75
  %v77 = vrot.slane %v72, %v76
  %v80 = vsel %vm24, %v66, 0
  %v83 = vsel %vm24, %v67, 0
  %85 = vmatprep.subr.mxu0 0.0
  %86 = vmatpush1.msra.mxu0 %v68
  %87 = vmatprep.subr.mxu0 0.0
  %88 = vmatpush1.msra.mxu0 %v69
  %89 = vmatprep.subr.mxu0 0.0
  %90 = vmatpush1.msra.mxu0 %v70
  %91 = vmatprep.subr.mxu0 0.0
  %92 = vmatpush1.msra.mxu0 %v71
  %93 = vmatprep.subr.mxu0 0.0
  %94 = vmatpush1.msra.mxu0 0.0
  %95 = vmatprep.subr.mxu0 0.0
  %96 = vmatpush1.msra.mxu0 0.0
  %97 = vmatprep.subr.mxu0 0.0
  %98 = vmatpush1.msra.mxu0 0.0
  %99 = vmatprep.subr.mxu0 0.0
  %100 = vmatpush1.msra.mxu0 0.0
  %101 = vmatprep.subr.mxu0 0.0
  %102 = vmatpush1.msra.mxu0 0.0
  %103 = vmatprep.subr.mxu0 0.0
  %104 = vmatpush1.msra.mxu0 0.0
  %105 = vmatprep.subr.mxu0 0.0
  %106 = vmatpush1.msra.mxu0 0.0
  %107 = vmatprep.subr.mxu0 0.0
  %108 = vmatpush1.msra.mxu0 0.0
  %109 = vmatprep.subr.mxu0 0.0
  %110 = vmatpush1.msra.mxu0 0.0
  %111 = vmatprep.subr.mxu0 0.0
  %112 = vmatpush1.msra.mxu0 0.0
  %113 = vmatprep.subr.mxu0 0.0
  %114 = vmatpush1.msra.mxu0 0.0
  %115 = vmatprep.subr.mxu0 0.0
  %116 = vmatpush1.msra.mxu0 0.0
  %117 = vmatprep.subr.mxu0 0.0
  %118 = vmatpush1.msra.mxu0 0.0
  %119 = vmatprep.subr.mxu0 0.0
  %120 = vmatpush1.msra.mxu0 0.0
  %121 = vmatprep.subr.mxu0 0.0
  %122 = vmatpush1.msra.mxu0 0.0
  %123 = vmatprep.subr.mxu0 0.0
  %124 = vmatpush1.msra.mxu0 0.0
  %125 = vmatprep.subr.mxu0 0.0
  %126 = vmatpush1.msra.mxu0 0.0
  %127 = vmatprep.subr.mxu0 0.0
  %128 = vmatpush1.msra.mxu0 0.0
  %129 = vmatprep.subr.mxu0 0.0
  %130 = vmatpush1.msra.mxu0 0.0
  %131 = vmatprep.subr.mxu0 0.0
  %132 = vmatpush1.msra.mxu0 0.0
  %133 = vmatprep.subr.mxu0 0.0
  %134 = vmatpush1.msra.mxu0 0.0
  %135 = vmatprep.subr.mxu0 0.0
  %136 = vmatpush1.msra.mxu0 0.0
  %137 = vmatprep.subr.mxu0 0.0
  %138 = vmatpush1.msra.mxu0 0.0
  %139 = vmatprep.subr.mxu0 0.0
  %140 = vmatpush1.msra.mxu0 0.0
  %141 = vmatprep.subr.mxu0 0.0
  %142 = vmatpush1.msra.mxu0 0.0
  %143 = vmatprep.subr.mxu0 0.0
  %144 = vmatpush1.msra.mxu0 0.0
  %145 = vmatprep.subr.mxu0 0.0
  %146 = vmatpush1.msra.mxu0 0.0
  %147 = vmatprep.subr.mxu0 0.0
  %148 = vmatpush1.msra.mxu0 0.0
  %149 = vmatprep.mubr.f32.mxu0 0.0
  %150 = vmatmul.mubr.f32.gmra.mrb[0].mxu0 %v80
  %v151 = vpop.f32.mrb[0].mxu0
  %v152 = vadd.f32 %v77, %v151
  %v153 = vpop.f32.mrb[0].mxu0
  %154 = vmatprep.mubr.f32.mxu0 0.0
  %155 = vmatmul.mubr.f32.gmra.mrb[0].mxu0 %v83
  %v156 = vpop.f32.mrb[0].mxu0
  %v157 = vadd.f32 %v77, %v156
  %v158 = vpop.f32.mrb[0].mxu0
  %159 = vdwg.mxu0
  %vm160 = vcmask 785408
  %161 = vst.msk [vmem:[%s5] sm:$0xff] %vm160, %v152
  %162 = vst.msk [vmem:[%s5 + $0x8] sm:$0xff] %vm160, %v157
  // Predicated region
  $region22: #{_lambda_.22} parent=0 // pred_check
    _
  $region23: #{_lambda_.22} parent=0 // pred_check_branch
    %164 = sbr.rel (0) target = $region25
  $region24: #{_lambda_.22} parent=0 // pred_region
    _
  $region25: #{_lambda_.22} parent=0 // pred_fallthru
    _
  // Predicated region
  $region26: #{_lambda_.22} parent=0 // pred_check
    _
  $region27: #{_lambda_.22} parent=0 // pred_check_branch
    %166 = sbr.rel (0) target = $region29
  $region28: #{_lambda_.22} parent=0 // pred_region
    _
  $region29: #{_lambda_.22} parent=0 // pred_fallthru
    _

// kernel: _lambda_.23
$region0: #{_lambda_.23}
  #allocation0 [shape = 'u32[]', space=smem, size = 0x4, offset = 0x4, fixed_abs, tag = 'smem constant byte address 0x4 - core index']
  #allocation1 [shape = 'u32[144,128]{1,0:T(1,128)}', space=vmem, size = 0x12000, scoped, tag = 'internal scratch']
  %s0 = inlined_call_operand.vmem [shape: f32[2,8,96], index: 0, kind: input, shape index: {}]
  %s1 = inlined_call_operand.vmem [shape: f32[2,8,32], index: 1, kind: output, shape index: {}]
  %s2 = sld [smem:[#allocation0]]
  $region37: #{_lambda_.23} parent=0
    _
  %s4 = ssub.s32 1, %s2
  %s5 = scalar_select 0, %s4, %s2
  loop: start=0, step=1, limit=4
  $region2: #{_lambda_.23} parent=0 // loop_pre_header
    _
  $region3: #{_lambda_.23} parent=0 // loop_header
    %s7 = sphi 0, %s11
    %p8 = scmp.ge.s32.totalorder %s7, 4
    %s17 = sphi 0, %s19
    %s20 = sphi 0, %s17
    %s21 = sphi 0, %s20
    %s37 = sphi 0, %s21
    %s43 = sphi 0, %s45
    %s46 = sphi 0, %s43
    %s47 = sphi 0, %s46
    %s63 = sphi 0, %s47
  $region4: #{_lambda_.23} parent=0 // loop_header_branch
    %10 = sbr.rel (%p8) target = $region8
  $region5: #{_lambda_.23} parent=0 // loop_body
    %s12 = ssub.s32 %s7, 1
    %s13 = ssub.s32 %s7, 2
    %s14 = sadd.s32 %s7, 1
    %s15 = ssub.s32 %s7, %s14
    %p16 = scmp.eq.s32.totalorder %s15, 0
    %s18 = sadd.s32 %s17, 1
    %s19 = scalar_select %p16, %s17, %s18
    %p22 = pneg %p16
    %p23 = scmp.eq.s32.totalorder %s7, 1
    %p24 = por %p22, %p23
    %p25 = scmp.ne.s32.totalorder %s17, %s20
    %p26 = scmp.eq.s32.totalorder %s7, 0
    %p27 = por %p25, %p26
    %p28 = scmp.ne.s32.totalorder %s17, %s20
    %p29 = scmp.eq.s32.totalorder %s12, 1
    %p30 = por %p28, %p29
    %p31 = scmp.ne.s32.totalorder %s20, %s21
    %p32 = scmp.eq.s32.totalorder %s12, 0
    %p33 = por %p31, %p32
    %p34 = scmp.ne.s32.totalorder %s20, %s21
    %p35 = scmp.eq.s32.totalorder %s13, 1
    %p36 = por %p34, %p35
    %p38 = scmp.ne.s32.totalorder %s21, %s37
    %p39 = scmp.eq.s32.totalorder %s13, 0
    %p40 = por %p38, %p39
    %s41 = ssub.s32 %s7, %s14
    %p42 = scmp.eq.s32.totalorder %s41, 0
    %s44 = sadd.s32 %s43, 1
    %s45 = scalar_select %p42, %s43, %s44
    %p48 = pneg %p42
    %p49 = scmp.eq.s32.totalorder %s7, 1
    %p50 = por %p48, %p49
    %p51 = scmp.ne.s32.totalorder %s43, %s46
    %p52 = scmp.eq.s32.totalorder %s7, 0
    %p53 = por %p51, %p52
    %p54 = scmp.ne.s32.totalorder %s43, %s46
    %p55 = scmp.eq.s32.totalorder %s12, 1
    %p56 = por %p54, %p55
    %p57 = scmp.ne.s32.totalorder %s46, %s47
    %p58 = scmp.eq.s32.totalorder %s12, 0
    %p59 = por %p57, %p58
    %p60 = scmp.ne.s32.totalorder %s46, %s47
    %p61 = scmp.eq.s32.totalorder %s13, 1
    %p62 = por %p60, %p61
    %p64 = scmp.ne.s32.totalorder %s47, %s63
    %p65 = scmp.eq.s32.totalorder %s13, 0
    %p66 = por %p64, %p65
    %p67 = scmp.le.s32.totalorder 1, %s7
    %p68 = scmp.lt.s32.totalorder %s7, 3
    %p69 = pnand %p67, %p68
    %p70 = pneg %p69
    // Predicated region
    $region9: #{_lambda_.23} parent=5 // pred_check
      _
    $region10: #{_lambda_.23} parent=5 // pred_check_branch
      %72 = sbr.rel (%p69) target = $region12
    $region11: #{_lambda_.23} parent=5 // pred_region
      %s73 = ssub.s32 %s7, 1
    $region12: #{_lambda_.23} parent=5 // pred_fallthru
      _
    %p74 = scmp.lt.s32.totalorder %s7, 2
    // Predicated region
    $region13: #{_lambda_.23} parent=5 // pred_check
      %p75 = pneg %p74
    $region14: #{_lambda_.23} parent=5 // pred_check_branch
      %77 = sbr.rel (%p75) target = $region16
    $region15: #{_lambda_.23} parent=5 // pred_region
      // Predicated region
      $region17: #{_lambda_.23} parent=15 // pred_check
        %p78 = pneg %p27
      $region18: #{_lambda_.23} parent=15 // pred_check_branch
        %80 = sbr.rel (%p78) target = $region20
      $region19: #{_lambda_.23} parent=15 // pred_region
        %p81 = scmp.lt.s32.totalorder %s7, 1
        %s82 = scalar_select %p81, %s7, 1
        %s83 = smul.addr %s82, 8
        %s84 = scalar_lea.vmem %s0, %s83
      $region20: #{_lambda_.23} parent=15 // pred_fallthru
        _
    $region16: #{_lambda_.23} parent=5 // pred_fallthru
      _
    %p85 = scmp.le.s32.totalorder 1, %s7
    %p86 = scmp.lt.s32.totalorder %s7, 3
    %p87 = pnand %p85, %p86
    %p88 = pneg %p87
    // Predicated region
    $region21: #{_lambda_.23} parent=5 // pred_check
      _
    $region22: #{_lambda_.23} parent=5 // pred_check_branch
      %90 = sbr.rel (%p87) target = $region24
    $region23: #{_lambda_.23} parent=5 // pred_region
      %s91 = ssub.s32 %s7, 1
      %p92 = scmp.lt.s32.totalorder %s12, 1
      %s93 = scalar_select %p92, %s12, 1
      %s94 = smul.addr %s93, 8
      %s95 = scalar_lea.vmem %s0, %s94
      %p96 = pneg %p33
      %p97 = pneg %p30
      %p98 = pneg %p59
      %p99 = pneg %p56
      %p100 = scmp.lt.s32.totalorder %s12, 1
      %s101 = scalar_select %p100, %s12, 1
      %s102 = smul.addr %s101, 8
      %s103 = scalar_lea.vmem %s1, %s102
      %p104 = scmp.lt.s32.totalorder %s12, 1
      %s105 = scalar_select %p104, %s12, 1
      %s106 = smul.addr %s105, 8
      %s107 = scalar_lea.vmem %s0, %s106
      %p108 = scmp.lt.s32.totalorder %s12, 1
      %s109 = scalar_select %p108, %s12, 1
      %s110 = smul.addr %s109, 8
      %s111 = scalar_lea.vmem %s1, %s110
      %v112 = vld [vmem:[%s107] sm:$0xff]
      %v113 = vmul.f32 %v112, 0.35355338
      %115 = vrot.lane.b32.xlu0 %v112, 96
      %v116 = vpop.permute.xlu0 %115
      %vm117 = vcmask 64512
      %v119 = vsel %vm117, %v113, 0
      %v121 = vsel %vm117, %v116, 0
      %123 = vmatprep.subr.mxu0 0.0
      %124 = vmatpush1.xpose.msra.mxu0 %v121
      %125 = vmatprep.subr.mxu0 0.0
      %126 = vmatpush1.xpose.msra.mxu0 0.0
      %127 = vmatprep.subr.mxu0 0.0
      %128 = vmatpush1.xpose.msra.mxu0 0.0
      %129 = vmatprep.subr.mxu0 0.0
      %130 = vmatpush1.xpose.msra.mxu0 0.0
      %131 = vmatprep.subr.mxu0 0.0
      %132 = vmatpush1.xpose.msra.mxu0 0.0
      %133 = vmatprep.subr.mxu0 0.0
      %134 = vmatpush1.xpose.msra.mxu0 0.0
      %135 = vmatprep.subr.mxu0 0.0
      %136 = vmatpush1.xpose.msra.mxu0 0.0
      %137 = vmatprep.subr.mxu0 0.0
      %138 = vmatpush1.xpose.msra.mxu0 0.0
      %139 = vmatprep.subr.mxu0 0.0
      %140 = vmatpush1.xpose.msra.mxu0 0.0
      %141 = vmatprep.subr.mxu0 0.0
      %142 = vmatpush1.xpose.msra.mxu0 0.0
      %143 = vmatprep.subr.mxu0 0.0
      %144 = vmatpush1.xpose.msra.mxu0 0.0
      %145 = vmatprep.subr.mxu0 0.0
      %146 = vmatpush1.xpose.msra.mxu0 0.0
      %147 = vmatprep.subr.mxu0 0.0
      %148 = vmatpush1.xpose.msra.mxu0 0.0
      %149 = vmatprep.subr.mxu0 0.0
      %150 = vmatpush1.xpose.msra.mxu0 0.0
      %151 = vmatprep.subr.mxu0 0.0
      %152 = vmatpush1.xpose.msra.mxu0 0.0
      %153 = vmatprep.subr.mxu0 0.0
      %154 = vmatpush1.xpose.msra.mxu0 0.0
      %155 = vmatprep.subr.mxu0 0.0
      %156 = vmatpush1.xpose.msra.mxu0 0.0
      %157 = vmatprep.subr.mxu0 0.0
      %158 = vmatpush1.xpose.msra.mxu0 0.0
      %159 = vmatprep.subr.mxu0 0.0
      %160 = vmatpush1.xpose.msra.mxu0 0.0
      %161 = vmatprep.subr.mxu0 0.0
      %162 = vmatpush1.xpose.msra.mxu0 0.0
      %163 = vmatprep.subr.mxu0 0.0
      %164 = vmatpush1.xpose.msra.mxu0 0.0
      %165 = vmatprep.subr.mxu0 0.0
      %166 = vmatpush1.xpose.msra.mxu0 0.0
      %167 = vmatprep.subr.mxu0 0.0
      %168 = vmatpush1.xpose.msra.mxu0 0.0
      %169 = vmatprep.subr.mxu0 0.0
      %170 = vmatpush1.xpose.msra.mxu0 0.0
      %171 = vmatprep.subr.mxu0 0.0
      %172 = vmatpush1.xpose.msra.mxu0 0.0
      %173 = vmatprep.subr.mxu0 0.0
      %174 = vmatpush1.xpose.msra.mxu0 0.0
      %175 = vmatprep.subr.mxu0 0.0
      %176 = vmatpush1.xpose.msra.mxu0 0.0
      %177 = vmatprep.subr.mxu0 0.0
      %178 = vmatpush1.xpose.msra.mxu0 0.0
      %179 = vmatprep.subr.mxu0 0.0
      %180 = vmatpush1.xpose.msra.mxu0 0.0
      %181 = vmatprep.subr.mxu0 0.0
      %182 = vmatpush1.xpose.msra.mxu0 0.0
      %183 = vmatprep.subr.mxu0 0.0
      %184 = vmatpush1.xpose.msra.mxu0 0.0
      %185 = vmatprep.subr.mxu0 0.0
      %186 = vmatpush1.xpose.msra.mxu0 0.0
      %187 = vmatprep.mubr.f32.mxu0 0.0
      %188 = vmatmul.mubr.f32.gmra.mrb[0].mxu0 %v119
      %v189 = vpop.f32.mrb[0].mxu0
      %v190 = vadd.f32 0.0, %v189
      %v191 = vpop.f32.mrb[0].mxu0
      %192 = vdwg.mxu0
      %v193 = vsel %vm117, %v190, -inf
      %194 = vmax.xlane.f32.xlu0 %v193
      %v195 = vpop.xlane.xlu0 %194
      %v196 = vsub.f32 %v190, %v195
      %v197 = vmul.f32 %v196, 1.442695
      %v198 = vpow.pop %v197
      %v199 = vsel %vm117, %v198, 0.0
      %200 = vadd.xlane.f32.xlu0 %v199
      %v201 = vpop.xlane.xlu0 %200
      %v202 = vrcp.pop %v201
      %v203 = vmul.f32 %v198, %v202
      %204 = vrot.lane.b32.xlu0 %v112, 64
      %v205 = vpop.permute.xlu0 %204
      %v208 = vsel %vm117, %v203, 0
      %210 = vmatprep.subr.mxu0 0.0
      %211 = vmatpush1.msra.mxu0 %v205
      %212 = vmatprep.subr.mxu0 0.0
      %213 = vmatpush1.msra.mxu0 0.0
      %214 = vmatprep.subr.mxu0 0.0
      %215 = vmatpush1.msra.mxu0 0.0
      %216 = vmatprep.subr.mxu0 0.0
      %217 = vmatpush1.msra.mxu0 0.0
      %218 = vmatprep.subr.mxu0 0.0
      %219 = vmatpush1.msra.mxu0 0.0
      %220 = vmatprep.subr.mxu0 0.0
      %221 = vmatpush1.msra.mxu0 0.0
      %222 = vmatprep.subr.mxu0 0.0
      %223 = vmatpush1.msra.mxu0 0.0
      %224 = vmatprep.subr.mxu0 0.0
      %225 = vmatpush1.msra.mxu0 0.0
      %226 = vmatprep.subr.mxu0 0.0
      %227 = vmatpush1.msra.mxu0 0.0
      %228 = vmatprep.subr.mxu0 0.0
      %229 = vmatpush1.msra.mxu0 0.0
      %230 = vmatprep.subr.mxu0 0.0
      %231 = vmatpush1.msra.mxu0 0.0
      %232 = vmatprep.subr.mxu0 0.0
      %233 = vmatpush1.msra.mxu0 0.0
      %234 = vmatprep.subr.mxu0 0.0
      %235 = vmatpush1.msra.mxu0 0.0
      %236 = vmatprep.subr.mxu0 0.0
      %237 = vmatpush1.msra.mxu0 0.0
      %238 = vmatprep.subr.mxu0 0.0
      %239 = vmatpush1.msra.mxu0 0.0
      %240 = vmatprep.subr.mxu0 0.0
      %241 = vmatpush1.msra.mxu0 0.0
      %242 = vmatprep.subr.mxu0 0.0
      %243 = vmatpush1.msra.mxu0 0.0
      %244 = vmatprep.subr.mxu0 0.0
      %245 = vmatpush1.msra.mxu0 0.0
      %246 = vmatprep.subr.mxu0 0.0
      %247 = vmatpush1.msra.mxu0 0.0
      %248 = vmatprep.subr.mxu0 0.0
      %249 = vmatpush1.msra.mxu0 0.0
      %250 = vmatprep.subr.mxu0 0.0
      %251 = vmatpush1.msra.mxu0 0.0
      %252 = vmatprep.subr.mxu0 0.0
      %253 = vmatpush1.msra.mxu0 0.0
      %254 = vmatprep.subr.mxu0 0.0
      %255 = vmatpush1.msra.mxu0 0.0
      %256 = vmatprep.subr.mxu0 0.0
      %257 = vmatpush1.msra.mxu0 0.0
      %258 = vmatprep.subr.mxu0 0.0
      %259 = vmatpush1.msra.mxu0 0.0
      %260 = vmatprep.subr.mxu0 0.0
      %261 = vmatpush1.msra.mxu0 0.0
      %262 = vmatprep.subr.mxu0 0.0
      %263 = vmatpush1.msra.mxu0 0.0
      %264 = vmatprep.subr.mxu0 0.0
      %265 = vmatpush1.msra.mxu0 0.0
      %266 = vmatprep.subr.mxu0 0.0
      %267 = vmatpush1.msra.mxu0 0.0
      %268 = vmatprep.subr.mxu0 0.0
      %269 = vmatpush1.msra.mxu0 0.0
      %270 = vmatprep.subr.mxu0 0.0
      %271 = vmatpush1.msra.mxu0 0.0
      %272 = vmatprep.subr.mxu0 0.0
      %273 = vmatpush1.msra.mxu0 0.0
      %274 = vmatprep.mubr.f32.mxu0 0.0
      %275 = vmatmul.mubr.f32.gmra.mrb[0].mxu0 %v208
      %v276 = vpop.f32.mrb[0].mxu0
      %v277 = vadd.f32 0.0, %v276
      %v278 = vpop.f32.mrb[0].mxu0
      %279 = vdwg.mxu0
      %280 = vrot.lane.b32.xlu0 %v113, 120
      %v281 = vpop.permute.xlu0 %280
      %282 = vrot.lane.b32.xlu0 %v112, 88
      %v283 = vpop.permute.xlu0 %282
      %v284 = vsel %vm117, %v281, 0
      %v286 = vsel %vm117, %v283, 0
      %288 = vmatprep.subr.mxu0 0.0
      %289 = vmatpush1.xpose.msra.mxu0 %v286
      %290 = vmatprep.subr.mxu0 0.0
      %291 = vmatpush1.xpose.msra.mxu0 0.0
      %292 = vmatprep.subr.mxu0 0.0
      %293 = vmatpush1.xpose.msra.mxu0 0.0
      %294 = vmatprep.subr.mxu0 0.0
      %295 = vmatpush1.xpose.msra.mxu0 0.0
      %296 = vmatprep.subr.mxu0 0.0
      %297 = vmatpush1.xpose.msra.mxu0 0.0
      %298 = vmatprep.subr.mxu0 0.0
      %299 = vmatpush1.xpose.msra.mxu0 0.0
      %300 = vmatprep.subr.mxu0 0.0
      %301 = vmatpush1.xpose.msra.mxu0 0.0
      %302 = vmatprep.subr.mxu0 0.0
      %303 = vmatpush1.xpose.msra.mxu0 0.0
      %304 = vmatprep.subr.mxu0 0.0
      %305 = vmatpush1.xpose.msra.mxu0 0.0
      %306 = vmatprep.subr.mxu0 0.0
      %307 = vmatpush1.xpose.msra.mxu0 0.0
      %308 = vmatprep.subr.mxu0 0.0
      %309 = vmatpush1.xpose.msra.mxu0 0.0
      %310 = vmatprep.subr.mxu0 0.0
      %311 = vmatpush1.xpose.msra.mxu0 0.0
      %312 = vmatprep.subr.mxu0 0.0
      %313 = vmatpush1.xpose.msra.mxu0 0.0
      %314 = vmatprep.subr.mxu0 0.0
      %315 = vmatpush1.xpose.msra.mxu0 0.0
      %316 = vmatprep.subr.mxu0 0.0
      %317 = vmatpush1.xpose.msra.mxu0 0.0
      %318 = vmatprep.subr.mxu0 0.0
      %319 = vmatpush1.xpose.msra.mxu0 0.0
      %320 = vmatprep.subr.mxu0 0.0
      %321 = vmatpush1.xpose.msra.mxu0 0.0
      %322 = vmatprep.subr.mxu0 0.0
      %323 = vmatpush1.xpose.msra.mxu0 0.0
      %324 = vmatprep.subr.mxu0 0.0
      %325 = vmatpush1.xpose.msra.mxu0 0.0
      %326 = vmatprep.subr.mxu0 0.0
      %327 = vmatpush1.xpose.msra.mxu0 0.0
      %328 = vmatprep.subr.mxu0 0.0
      %329 = vmatpush1.xpose.msra.mxu0 0.0
      %330 = vmatprep.subr.mxu0 0.0
      %331 = vmatpush1.xpose.msra.mxu0 0.0
      %332 = vmatprep.subr.mxu0 0.0
      %333 = vmatpush1.xpose.msra.mxu0 0.0
      %334 = vmatprep.subr.mxu0 0.0
      %335 = vmatpush1.xpose.msra.mxu0 0.0
      %336 = vmatprep.subr.mxu0 0.0
      %337 = vmatpush1.xpose.msra.mxu0 0.0
      %338 = vmatprep.subr.mxu0 0.0
      %339 = vmatpush1.xpose.msra.mxu0 0.0
      %340 = vmatprep.subr.mxu0 0.0
      %341 = vmatpush1.xpose.msra.mxu0 0.0
      %342 = vmatprep.subr.mxu0 0.0
      %343 = vmatpush1.xpose.msra.mxu0 0.0
      %344 = vmatprep.subr.mxu0 0.0
      %345 = vmatpush1.xpose.msra.mxu0 0.0
      %346 = vmatprep.subr.mxu0 0.0
      %347 = vmatpush1.xpose.msra.mxu0 0.0
      %348 = vmatprep.subr.mxu0 0.0
      %349 = vmatpush1.xpose.msra.mxu0 0.0
      %350 = vmatprep.subr.mxu0 0.0
      %351 = vmatpush1.xpose.msra.mxu0 0.0
      %352 = vmatprep.mubr.f32.mxu0 0.0
      %353 = vmatmul.mubr.f32.gmra.mrb[0].mxu0 %v284
      %v354 = vpop.f32.mrb[0].mxu0
      %v355 = vadd.f32 0.0, %v354
      %v356 = vpop.f32.mrb[0].mxu0
      %357 = vdwg.mxu0
      %v358 = vsel %vm117, %v355, -inf
      %359 = vmax.xlane.f32.xlu0 %v358
      %v360 = vpop.xlane.xlu0 %359
      %v361 = vsub.f32 %v355, %v360
      %v362 = vmul.f32 %v361, 1.442695
      %v363 = vpow.pop %v362
      %v364 = vsel %vm117, %v363, 0.0
      %365 = vadd.xlane.f32.xlu0 %v364
      %v366 = vpop.xlane.xlu0 %365
      %v367 = vrcp.pop %v366
      %v368 = vmul.f32 %v363, %v367
      %369 = vrot.lane.b32.xlu0 %v112, 56
      %v370 = vpop.permute.xlu0 %369
      %v373 = vsel %vm117, %v368, 0
      %375 = vmatprep.subr.mxu0 0.0
      %376 = vmatpush1.msra.mxu0 %v370
      %377 = vmatprep.subr.mxu0 0.0
      %378 = vmatpush1.msra.mxu0 0.0
      %379 = vmatprep.subr.mxu0 0.0
      %380 = vmatpush1.msra.mxu0 0.0
      %381 = vmatprep.subr.mxu0 0.0
      %382 = vmatpush1.msra.mxu0 0.0
      %383 = vmatprep.subr.mxu0 0.0
      %384 = vmatpush1.msra.mxu0 0.0
      %385 = vmatprep.subr.mxu0 0.0
      %386 = vmatpush1.msra.mxu0 0.0
      %387 = vmatprep.subr.mxu0 0.0
      %388 = vmatpush1.msra.mxu0 0.0
      %389 = vmatprep.subr.mxu0 0.0
      %390 = vmatpush1.msra.mxu0 0.0
      %391 = vmatprep.subr.mxu0 0.0
      %392 = vmatpush1.msra.mxu0 0.0
      %393 = vmatprep.subr.mxu0 0.0
      %394 = vmatpush1.msra.mxu0 0.0
      %395 = vmatprep.subr.mxu0 0.0
      %396 = vmatpush1.msra.mxu0 0.0
      %397 = vmatprep.subr.mxu0 0.0
      %398 = vmatpush1.msra.mxu0 0.0
      %399 = vmatprep.subr.mxu0 0.0
      %400 = vmatpush1.msra.mxu0 0.0
      %401 = vmatprep.subr.mxu0 0.0
      %402 = vmatpush1.msra.mxu0 0.0
      %403 = vmatprep.subr.mxu0 0.0
      %404 = vmatpush1.msra.mxu0 0.0
      %405 = vmatprep.subr.mxu0 0.0
      %406 = vmatpush1.msra.mxu0 0.0
      %407 = vmatprep.subr.mxu0 0.0
      %408 = vmatpush1.msra.mxu0 0.0
      %409 = vmatprep.subr.mxu0 0.0
      %410 = vmatpush1.msra.mxu0 0.0
      %411 = vmatprep.subr.mxu0 0.0
      %412 = vmatpush1.msra.mxu0 0.0
      %413 = vmatprep.subr.mxu0 0.0
      %414 = vmatpush1.msra.mxu0 0.0
      %415 = vmatprep.subr.mxu0 0.0
      %416 = vmatpush1.msra.mxu0 0.0
      %417 = vmatprep.subr.mxu0 0.0
      %418 = vmatpush1.msra.mxu0 0.0
      %419 = vmatprep.subr.mxu0 0.0
      %420 = vmatpush1.msra.mxu0 0.0
      %421 = vmatprep.subr.mxu0 0.0
      %422 = vmatpush1.msra.mxu0 0.0
      %423 = vmatprep.subr.mxu0 0.0
      %424 = vmatpush1.msra.mxu0 0.0
      %425 = vmatprep.subr.mxu0 0.0
      %426 = vmatpush1.msra.mxu0 0.0
      %427 = vmatprep.subr.mxu0 0.0
      %428 = vmatpush1.msra.mxu0 0.0
      %429 = vmatprep.subr.mxu0 0.0
      %430 = vmatpush1.msra.mxu0 0.0
      %431 = vmatprep.subr.mxu0 0.0
      %432 = vmatpush1.msra.mxu0 0.0
      %433 = vmatprep.subr.mxu0 0.0
      %434 = vmatpush1.msra.mxu0 0.0
      %435 = vmatprep.subr.mxu0 0.0
      %436 = vmatpush1.msra.mxu0 0.0
      %437 = vmatprep.subr.mxu0 0.0
      %438 = vmatpush1.msra.mxu0 0.0
      %439 = vmatprep.mubr.f32.mxu0 0.0
      %440 = vmatmul.mubr.f32.gmra.mrb[0].mxu0 %v373
      %v441 = vpop.f32.mrb[0].mxu0
      %v442 = vadd.f32 0.0, %v441
      %v443 = vpop.f32.mrb[0].mxu0
      %444 = vdwg.mxu0
      %445 = vrot.lane.b32.xlu0 %v113, 112
      %v446 = vpop.permute.xlu0 %445
      %447 = vrot.lane.b32.xlu0 %v112, 80
      %v448 = vpop.permute.xlu0 %447
      %v449 = vsel %vm117, %v446, 0
      %v451 = vsel %vm117, %v448, 0
      %453 = vmatprep.subr.mxu0 0.0
      %454 = vmatpush1.xpose.msra.mxu0 %v451
      %455 = vmatprep.subr.mxu0 0.0
      %456 = vmatpush1.xpose.msra.mxu0 0.0
      %457 = vmatprep.subr.mxu0 0.0
      %458 = vmatpush1.xpose.msra.mxu0 0.0
      %459 = vmatprep.subr.mxu0 0.0
      %460 = vmatpush1.xpose.msra.mxu0 0.0
      %461 = vmatprep.subr.mxu0 0.0
      %462 = vmatpush1.xpose.msra.mxu0 0.0
      %463 = vmatprep.subr.mxu0 0.0
      %464 = vmatpush1.xpose.msra.mxu0 0.0
      %465 = vmatprep.subr.mxu0 0.0
      %466 = vmatpush1.xpose.msra.mxu0 0.0
      %467 = vmatprep.subr.mxu0 0.0
      %468 = vmatpush1.xpose.msra.mxu0 0.0
      %469 = vmatprep.subr.mxu0 0.0
      %470 = vmatpush1.xpose.msra.mxu0 0.0
      %471 = vmatprep.subr.mxu0 0.0
      %472 = vmatpush1.xpose.msra.mxu0 0.0
      %473 = vmatprep.subr.mxu0 0.0
      %474 = vmatpush1.xpose.msra.mxu0 0.0
      %475 = vmatprep.subr.mxu0 0.0
      %476 = vmatpush1.xpose.msra.mxu0 0.0
      %477 = vmatprep.subr.mxu0 0.0
      %478 = vmatpush1.xpose.msra.mxu0 0.0
      %479 = vmatprep.subr.mxu0 0.0
      %480 = vmatpush1.xpose.msra.mxu0 0.0
      %481 = vmatprep.subr.mxu0 0.0
      %482 = vmatpush1.xpose.msra.mxu0 0.0
      %483 = vmatprep.subr.mxu0 0.0
      %484 = vmatpush1.xpose.msra.mxu0 0.0
      %485 = vmatprep.subr.mxu0 0.0
      %486 = vmatpush1.xpose.msra.mxu0 0.0
      %487 = vmatprep.subr.mxu0 0.0
      %488 = vmatpush1.xpose.msra.mxu0 0.0
      %489 = vmatprep.subr.mxu0 0.0
      %490 = vmatpush1.xpose.msra.mxu0 0.0
      %491 = vmatprep.subr.mxu0 0.0
      %492 = vmatpush1.xpose.msra.mxu0 0.0
      %493 = vmatprep.subr.mxu0 0.0
      %494 = vmatpush1.xpose.msra.mxu0 0.0
      %495 = vmatprep.subr.mxu0 0.0
      %496 = vmatpush1.xpose.msra.mxu0 0.0
      %497 = vmatprep.subr.mxu0 0.0
      %498 = vmatpush1.xpose.msra.mxu0 0.0
      %499 = vmatprep.subr.mxu0 0.0
      %500 = vmatpush1.xpose.msra.mxu0 0.0
      %501 = vmatprep.subr.mxu0 0.0
      %502 = vmatpush1.xpose.msra.mxu0 0.0
      %503 = vmatprep.subr.mxu0 0.0
      %504 = vmatpush1.xpose.msra.mxu0 0.0
      %505 = vmatprep.subr.mxu0 0.0
      %506 = vmatpush1.xpose.msra.mxu0 0.0
      %507 = vmatprep.subr.mxu0 0.0
      %508 = vmatpush1.xpose.msra.mxu0 0.0
      %509 = vmatprep.subr.mxu0 0.0
      %510 = vmatpush1.xpose.msra.mxu0 0.0
      %511 = vmatprep.subr.mxu0 0.0
      %512 = vmatpush1.xpose.msra.mxu0 0.0
      %513 = vmatprep.subr.mxu0 0.0
      %514 = vmatpush1.xpose.msra.mxu0 0.0
      %515 = vmatprep.subr.mxu0 0.0
      %516 = vmatpush1.xpose.msra.mxu0 0.0
      %517 = vmatprep.mubr.f32.mxu0 0.0
      %518 = vmatmul.mubr.f32.gmra.mrb[0].mxu0 %v449
      %v519 = vpop.f32.mrb[0].mxu0
      %v520 = vadd.f32 0.0, %v519
      %v521 = vpop.f32.mrb[0].mxu0
      %522 = vdwg.mxu0
      %v523 = vsel %vm117, %v520, -inf
      %524 = vmax.xlane.f32.xlu0 %v523
      %v525 = vpop.xlane.xlu0 %524
      %v526 = vsub.f32 %v520, %v525
      %v527 = vmul.f32 %v526, 1.442695
      %v528 = vpow.pop %v527
      %v529 = vsel %vm117, %v528, 0.0
      %530 = vadd.xlane.f32.xlu0 %v529
      %v531 = vpop.xlane.xlu0 %530
      %v532 = vrcp.pop %v531
      %v533 = vmul.f32 %v528, %v532
      %534 = vrot.lane.b32.xlu0 %v112, 48
      %v535 = vpop.permute.xlu0 %534
      %v538 = vsel %vm117, %v533, 0
      %540 = vmatprep.subr.mxu0 0.0
      %541 = vmatpush1.msra.mxu0 %v535
      %542 = vmatprep.subr.mxu0 0.0
      %543 = vmatpush1.msra.mxu0 0.0
      %544 = vmatprep.subr.mxu0 0.0
      %545 = vmatpush1.msra.mxu0 0.0
      %546 = vmatprep.subr.mxu0 0.0
      %547 = vmatpush1.msra.mxu0 0.0
      %548 = vmatprep.subr.mxu0 0.0
      %549 = vmatpush1.msra.mxu0 0.0
      %550 = vmatprep.subr.mxu0 0.0
      %551 = vmatpush1.msra.mxu0 0.0
      %552 = vmatprep.subr.mxu0 0.0
      %553 = vmatpush1.msra.mxu0 0.0
      %554 = vmatprep.subr.mxu0 0.0
      %555 = vmatpush1.msra.mxu0 0.0
      %556 = vmatprep.subr.mxu0 0.0
      %557 = vmatpush1.msra.mxu0 0.0
      %558 = vmatprep.subr.mxu0 0.0
      %559 = vmatpush1.msra.mxu0 0.0
      %560 = vmatprep.subr.mxu0 0.0
      %561 = vmatpush1.msra.mxu0 0.0
      %562 = vmatprep.subr.mxu0 0.0
      %563 = vmatpush1.msra.mxu0 0.0
      %564 = vmatprep.subr.mxu0 0.0
      %565 = vmatpush1.msra.mxu0 0.0
      %566 = vmatprep.subr.mxu0 0.0
      %567 = vmatpush1.msra.mxu0 0.0
      %568 = vmatprep.subr.mxu0 0.0
      %569 = vmatpush1.msra.mxu0 0.0
      %570 = vmatprep.subr.mxu0 0.0
      %571 = vmatpush1.msra.mxu0 0.0
      %572 = vmatprep.subr.mxu0 0.0
      %573 = vmatpush1.msra.mxu0 0.0
      %574 = vmatprep.subr.mxu0 0.0
      %575 = vmatpush1.msra.mxu0 0.0
      %576 = vmatprep.subr.mxu0 0.0
      %577 = vmatpush1.msra.mxu0 0.0
      %578 = vmatprep.subr.mxu0 0.0
      %579 = vmatpush1.msra.mxu0 0.0
      %580 = vmatprep.subr.mxu0 0.0
      %581 = vmatpush1.msra.mxu0 0.0
      %582 = vmatprep.subr.mxu0 0.0
      %583 = vmatpush1.msra.mxu0 0.0
      %584 = vmatprep.subr.mxu0 0.0
      %585 = vmatpush1.msra.mxu0 0.0
      %586 = vmatprep.subr.mxu0 0.0
      %587 = vmatpush1.msra.mxu0 0.0
      %588 = vmatprep.subr.mxu0 0.0
      %589 = vmatpush1.msra.mxu0 0.0
      %590 = vmatprep.subr.mxu0 0.0
      %591 = vmatpush1.msra.mxu0 0.0
      %592 = vmatprep.subr.mxu0 0.0
      %593 = vmatpush1.msra.mxu0 0.0
      %594 = vmatprep.subr.mxu0 0.0
      %595 = vmatpush1.msra.mxu0 0.0
      %596 = vmatprep.subr.mxu0 0.0
      %597 = vmatpush1.msra.mxu0 0.0
      %598 = vmatprep.subr.mxu0 0.0
      %599 = vmatpush1.msra.mxu0 0.0
      %600 = vmatprep.subr.mxu0 0.0
      %601 = vmatpush1.msra.mxu0 0.0
      %602 = vmatprep.subr.mxu0 0.0
      %603 = vmatpush1.msra.mxu0 0.0
      %604 = vmatprep.mubr.f32.mxu0 0.0
      %605 = vmatmul.mubr.f32.gmra.mrb[0].mxu0 %v538
      %v606 = vpop.f32.mrb[0].mxu0
      %v607 = vadd.f32 0.0, %v606
      %v608 = vpop.f32.mrb[0].mxu0
      %609 = vdwg.mxu0
      %610 = vrot.lane.b32.xlu0 %v113, 104
      %v611 = vpop.permute.xlu0 %610
      %612 = vrot.lane.b32.xlu0 %v112, 72
      %v613 = vpop.permute.xlu0 %612
      %v614 = vsel %vm117, %v611, 0
      %v616 = vsel %vm117, %v613, 0
      %618 = vmatprep.subr.mxu0 0.0
      %619 = vmatpush1.xpose.msra.mxu0 %v616
      %620 = vmatprep.subr.mxu0 0.0
      %621 = vmatpush1.xpose.msra.mxu0 0.0
      %622 = vmatprep.subr.mxu0 0.0
      %623 = vmatpush1.xpose.msra.mxu0 0.0
      %624 = vmatprep.subr.mxu0 0.0
      %625 = vmatpush1.xpose.msra.mxu0 0.0
      %626 = vmatprep.subr.mxu0 0.0
      %627 = vmatpush1.xpose.msra.mxu0 0.0
      %628 = vmatprep.subr.mxu0 0.0
      %629 = vmatpush1.xpose.msra.mxu0 0.0
      %630 = vmatprep.subr.mxu0 0.0
      %631 = vmatpush1.xpose.msra.mxu0 0.0
      %632 = vmatprep.subr.mxu0 0.0
      %633 = vmatpush1.xpose.msra.mxu0 0.0
      %634 = vmatprep.subr.mxu0 0.0
      %635 = vmatpush1.xpose.msra.mxu0 0.0
      %636 = vmatprep.subr.mxu0 0.0
      %637 = vmatpush1.xpose.msra.mxu0 0.0
      %638 = vmatprep.subr.mxu0 0.0
      %639 = vmatpush1.xpose.msra.mxu0 0.0
      %640 = vmatprep.subr.mxu0 0.0
      %641 = vmatpush1.xpose.msra.mxu0 0.0
      %642 = vmatprep.subr.mxu0 0.0
      %643 = vmatpush1.xpose.msra.mxu0 0.0
      %644 = vmatprep.subr.mxu0 0.0
      %645 = vmatpush1.xpose.msra.mxu0 0.0
      %646 = vmatprep.subr.mxu0 0.0
      %647 = vmatpush1.xpose.msra.mxu0 0.0
      %648 = vmatprep.subr.mxu0 0.0
      %649 = vmatpush1.xpose.msra.mxu0 0.0
      %650 = vmatprep.subr.mxu0 0.0
      %651 = vmatpush1.xpose.msra.mxu0 0.0
      %652 = vmatprep.subr.mxu0 0.0
      %653 = vmatpush1.xpose.msra.mxu0 0.0
      %654 = vmatprep.subr.mxu0 0.0
      %655 = vmatpush1.xpose.msra.mxu0 0.0
      %656 = vmatprep.subr.mxu0 0.0
      %657 = vmatpush1.xpose.msra.mxu0 0.0
      %658 = vmatprep.subr.mxu0 0.0
      %659 = vmatpush1.xpose.msra.mxu0 0.0
      %660 = vmatprep.subr.mxu0 0.0
      %661 = vmatpush1.xpose.msra.mxu0 0.0
      %662 = vmatprep.subr.mxu0 0.0
      %663 = vmatpush1.xpose.msra.mxu0 0.0
      %664 = vmatprep.subr.mxu0 0.0
      %665 = vmatpush1.xpose.msra.mxu0 0.0
      %666 = vmatprep.subr.mxu0 0.0
      %667 = vmatpush1.xpose.msra.mxu0 0.0
      %668 = vmatprep.subr.mxu0 0.0
      %669 = vmatpush1.xpose.msra.mxu0 0.0
      %670 = vmatprep.subr.mxu0 0.0
      %671 = vmatpush1.xpose.msra.mxu0 0.0
      %672 = vmatprep.subr.mxu0 0.0
      %673 = vmatpush1.xpose.msra.mxu0 0.0
      %674 = vmatprep.subr.mxu0 0.0
      %675 = vmatpush1.xpose.msra.mxu0 0.0
      %676 = vmatprep.subr.mxu0 0.0
      %677 = vmatpush1.xpose.msra.mxu0 0.0
      %678 = vmatprep.subr.mxu0 0.0
      %679 = vmatpush1.xpose.msra.mxu0 0.0
      %680 = vmatprep.subr.mxu0 0.0
      %681 = vmatpush1.xpose.msra.mxu0 0.0
      %682 = vmatprep.mubr.f32.mxu0 0.0
      %683 = vmatmul.mubr.f32.gmra.mrb[0].mxu0 %v614
      %v684 = vpop.f32.mrb[0].mxu0
      %v685 = vadd.f32 0.0, %v684
      %v686 = vpop.f32.mrb[0].mxu0
      %687 = vdwg.mxu0
      %v688 = vsel %vm117, %v685, -inf
      %689 = vmax.xlane.f32.xlu0 %v688
      %v690 = vpop.xlane.xlu0 %689
      %v691 = vsub.f32 %v685, %v690
      %v692 = vmul.f32 %v691, 1.442695
      %v693 = vpow.pop %v692
      %v694 = vsel %vm117, %v693, 0.0
      %695 = vadd.xlane.f32.xlu0 %v694
      %v696 = vpop.xlane.xlu0 %695
      %v697 = vrcp.pop %v696
      %v698 = vmul.f32 %v693, %v697
      %699 = vrot.lane.b32.xlu0 %v112, 40
      %v700 = vpop.permute.xlu0 %699
      %v703 = vsel %vm117, %v698, 0
      %705 = vmatprep.subr.mxu0 0.0
      %706 = vmatpush1.msra.mxu0 %v700
      %707 = vmatprep.subr.mxu0 0.0
      %708 = vmatpush1.msra.mxu0 0.0
      %709 = vmatprep.subr.mxu0 0.0
      %710 = vmatpush1.msra.mxu0 0.0
      %711 = vmatprep.subr.mxu0 0.0
      %712 = vmatpush1.msra.mxu0 0.0
      %713 = vmatprep.subr.mxu0 0.0
      %714 = vmatpush1.msra.mxu0 0.0
      %715 = vmatprep.subr.mxu0 0.0
      %716 = vmatpush1.msra.mxu0 0.0
      %717 = vmatprep.subr.mxu0 0.0
      %718 = vmatpush1.msra.mxu0 0.0
      %719 = vmatprep.subr.mxu0 0.0
      %720 = vmatpush1.msra.mxu0 0.0
      %721 = vmatprep.subr.mxu0 0.0
      %722 = vmatpush1.msra.mxu0 0.0
      %723 = vmatprep.subr.mxu0 0.0
      %724 = vmatpush1.msra.mxu0 0.0
      %725 = vmatprep.subr.mxu0 0.0
      %726 = vmatpush1.msra.mxu0 0.0
      %727 = vmatprep.subr.mxu0 0.0
      %728 = vmatpush1.msra.mxu0 0.0
      %729 = vmatprep.subr.mxu0 0.0
      %730 = vmatpush1.msra.mxu0 0.0
      %731 = vmatprep.subr.mxu0 0.0
      %732 = vmatpush1.msra.mxu0 0.0
      %733 = vmatprep.subr.mxu0 0.0
      %734 = vmatpush1.msra.mxu0 0.0
      %735 = vmatprep.subr.mxu0 0.0
      %736 = vmatpush1.msra.mxu0 0.0
      %737 = vmatprep.subr.mxu0 0.0
      %738 = vmatpush1.msra.mxu0 0.0
      %739 = vmatprep.subr.mxu0 0.0
      %740 = vmatpush1.msra.mxu0 0.0
      %741 = vmatprep.subr.mxu0 0.0
      %742 = vmatpush1.msra.mxu0 0.0
      %743 = vmatprep.subr.mxu0 0.0
      %744 = vmatpush1.msra.mxu0 0.0
      %745 = vmatprep.subr.mxu0 0.0
      %746 = vmatpush1.msra.mxu0 0.0
      %747 = vmatprep.subr.mxu0 0.0
      %748 = vmatpush1.msra.mxu0 0.0
      %749 = vmatprep.subr.mxu0 0.0
      %750 = vmatpush1.msra.mxu0 0.0
      %751 = vmatprep.subr.mxu0 0.0
      %752 = vmatpush1.msra.mxu0 0.0
      %753 = vmatprep.subr.mxu0 0.0
      %754 = vmatpush1.msra.mxu0 0.0
      %755 = vmatprep.subr.mxu0 0.0
      %756 = vmatpush1.msra.mxu0 0.0
      %757 = vmatprep.subr.mxu0 0.0
      %758 = vmatpush1.msra.mxu0 0.0
      %759 = vmatprep.subr.mxu0 0.0
      %760 = vmatpush1.msra.mxu0 0.0
      %761 = vmatprep.subr.mxu0 0.0
      %762 = vmatpush1.msra.mxu0 0.0
      %763 = vmatprep.subr.mxu0 0.0
      %764 = vmatpush1.msra.mxu0 0.0
      %765 = vmatprep.subr.mxu0 0.0
      %766 = vmatpush1.msra.mxu0 0.0
      %767 = vmatprep.subr.mxu0 0.0
      %768 = vmatpush1.msra.mxu0 0.0
      %769 = vmatprep.mubr.f32.mxu0 0.0
      %770 = vmatmul.mubr.f32.gmra.mrb[0].mxu0 %v703
      %v771 = vpop.f32.mrb[0].mxu0
      %v772 = vadd.f32 0.0, %v771
      %v773 = vpop.f32.mrb[0].mxu0
      %774 = vdwg.mxu0
      %776 = vrot.lane.b32.xlu0 %v442, 8
      %v777 = vpop.permute.xlu0 %776
      %780 = vrot.lane.b32.xlu0 %v607, 16
      %v781 = vpop.permute.xlu0 %780
      %784 = vrot.lane.b32.xlu0 %v772, 24
      %v785 = vpop.permute.xlu0 %784
      %v787 = vsel %vm117, %v277, %v777
      %vm788 = vcmask 130048
      %v789 = vsel %vm788, %v787, %v781
      %vm790 = vcmask 195584
      %v791 = vsel %vm790, %v789, %v785
      %vm792 = vcmask 261120
      %793 = vst.msk [vmem:[%s111] sm:$0xff] %vm792, %v791
      %p794 = scmp.lt.s32.totalorder %s12, 1
      %s795 = scalar_select %p794, %s12, 1
      %s796 = smul.addr %s795, 8
      %s797 = scalar_lea.vmem %s1, %s796
      // Predicated region
      $region25: #{_lambda_.23} parent=23 // pred_check
        %p798 = pneg %p56
      $region26: #{_lambda_.23} parent=23 // pred_check_branch
        %800 = sbr.rel (%p798) target = $region28
      $region27: #{_lambda_.23} parent=23 // pred_region
        _
      $region28: #{_lambda_.23} parent=23 // pred_fallthru
        _
    $region24: #{_lambda_.23} parent=5 // pred_fallthru
      _
    %p801 = scmp.le.s32.totalorder 2, %s7
    // Predicated region
    $region29: #{_lambda_.23} parent=5 // pred_check
      %p802 = pneg %p801
    $region30: #{_lambda_.23} parent=5 // pred_check_branch
      %804 = sbr.rel (%p802) target = $region32
    $region31: #{_lambda_.23} parent=5 // pred_region
      %s805 = ssub.s32 %s7, 2
      // Predicated region
      $region33: #{_lambda_.23} parent=31 // pred_check
        %p806 = pneg %p62
      $region34: #{_lambda_.23} parent=31 // pred_check_branch
        %808 = sbr.rel (%p806) target = $region36
      $region35: #{_lambda_.23} parent=31 // pred_region
        %p809 = scmp.lt.s32.totalorder %s13, 1
        %s810 = scalar_select %p809, %s13, 1
        %s811 = smul.addr %s810, 8
        %s812 = scalar_lea.vmem %s1, %s811
      $region36: #{_lambda_.23} parent=31 // pred_fallthru
        _
    $region32: #{_lambda_.23} parent=5 // pred_fallthru
      _
  $region6: #{_lambda_.23} parent=0 // loop_footer
    %s11 = sadd.s32 1, %s7
  $region7: #{_lambda_.23} parent=0 // loop_footer_branch
    %6 = sbr.rel target = $region3
  $region8: #{_lambda_.23} parent=0 // loop_exit
    _

// kernel: _lambda_.24
$region0: #{_lambda_.24}
  #allocation0 [shape = 'u32[]', space=smem, size = 0x4, offset = 0x4, fixed_abs, tag = 'smem constant byte address 0x4 - core index']
  #allocation1 [shape = 'u32[144,128]{1,0:T(1,128)}', space=vmem, size = 0x12000, scoped, tag = 'internal scratch']
  %s0 = inlined_call_operand.vmem [shape: f32[16,32], index: 0, kind: input, shape index: {}]
  %s1 = inlined_call_operand.vmem [shape: f32[16,32], index: 1, kind: input, shape index: {}]
  %s2 = inlined_call_operand.vmem [shape: f32[32,32], index: 2, kind: input, shape index: {}]
  %s3 = inlined_call_operand.vmem [shape: f32[1,32], index: 3, kind: input, shape index: {}]
  %s4 = inlined_call_operand.vmem [shape: f32[16,32], index: 4, kind: output, shape index: {}]
  %s5 = sld [smem:[#allocation0]]
  $region26: #{_lambda_.24} parent=0
    _
  %s7 = ssub.s32 1, %s5
  %s8 = scalar_select 0, %s7, %s5
  // Predicated region
  $region2: #{_lambda_.24} parent=0 // pred_check
    _
  $region3: #{_lambda_.24} parent=0 // pred_check_branch
    %10 = sbr.rel (0) target = $region5
  $region4: #{_lambda_.24} parent=0 // pred_region
    _
  $region5: #{_lambda_.24} parent=0 // pred_fallthru
    _
  // Predicated region
  $region6: #{_lambda_.24} parent=0 // pred_check
    _
  $region7: #{_lambda_.24} parent=0 // pred_check_branch
    %12 = sbr.rel (0) target = $region9
  $region8: #{_lambda_.24} parent=0 // pred_region
    _
  $region9: #{_lambda_.24} parent=0 // pred_fallthru
    _
  // Predicated region
  $region10: #{_lambda_.24} parent=0 // pred_check
    _
  $region11: #{_lambda_.24} parent=0 // pred_check_branch
    %14 = sbr.rel (0) target = $region13
  $region12: #{_lambda_.24} parent=0 // pred_region
    _
  $region13: #{_lambda_.24} parent=0 // pred_fallthru
    _
  // Predicated region
  $region14: #{_lambda_.24} parent=0 // pred_check
    _
  $region15: #{_lambda_.24} parent=0 // pred_check_branch
    %16 = sbr.rel (0) target = $region17
  $region16: #{_lambda_.24} parent=0 // pred_region
    _
  $region17: #{_lambda_.24} parent=0 // pred_fallthru
    _
  %v17 = vld [vmem:[%s0] sm:$0xff]
  %v18 = vld [vmem:[%s0 + $0x8] sm:$0xff]
  %v19 = vld [vmem:[%s2] sm:$0xff]
  %v20 = vld [vmem:[%s2 + $0x8] sm:$0xff]
  %v21 = vld [vmem:[%s2 + $0x10] sm:$0xff]
  %v22 = vld [vmem:[%s2 + $0x18] sm:$0xff]
  %v23 = vld [vmem:[%s3] sm:$0x1]
  %v25 = vlaneseq
  %v26 = vshrl.u32 %v25, 7
  %v27 = vsub.s32 0, %v26
  %v28 = vrot.slane %v23, %v27
  %vm30 = vcmask 261120
  %v32 = vsel %vm30, %v17, 0
  %v35 = vsel %vm30, %v18, 0
  %37 = vmatprep.subr.mxu0 0.0
  %38 = vmatpush1.msra.mxu0 %v19
  %39 = vmatprep.subr.mxu0 0.0
  %40 = vmatpush1.msra.mxu0 %v20
  %41 = vmatprep.subr.mxu0 0.0
  %42 = vmatpush1.msra.mxu0 %v21
  %43 = vmatprep.subr.mxu0 0.0
  %44 = vmatpush1.msra.mxu0 %v22
  %45 = vmatprep.subr.mxu0 0.0
  %46 = vmatpush1.msra.mxu0 0.0
  %47 = vmatprep.subr.mxu0 0.0
  %48 = vmatpush1.msra.mxu0 0.0
  %49 = vmatprep.subr.mxu0 0.0
  %50 = vmatpush1.msra.mxu0 0.0
  %51 = vmatprep.subr.mxu0 0.0
  %52 = vmatpush1.msra.mxu0 0.0
  %53 = vmatprep.subr.mxu0 0.0
  %54 = vmatpush1.msra.mxu0 0.0
  %55 = vmatprep.subr.mxu0 0.0
  %56 = vmatpush1.msra.mxu0 0.0
  %57 = vmatprep.subr.mxu0 0.0
  %58 = vmatpush1.msra.mxu0 0.0
  %59 = vmatprep.subr.mxu0 0.0
  %60 = vmatpush1.msra.mxu0 0.0
  %61 = vmatprep.subr.mxu0 0.0
  %62 = vmatpush1.msra.mxu0 0.0
  %63 = vmatprep.subr.mxu0 0.0
  %64 = vmatpush1.msra.mxu0 0.0
  %65 = vmatprep.subr.mxu0 0.0
  %66 = vmatpush1.msra.mxu0 0.0
  %67 = vmatprep.subr.mxu0 0.0
  %68 = vmatpush1.msra.mxu0 0.0
  %69 = vmatprep.subr.mxu0 0.0
  %70 = vmatpush1.msra.mxu0 0.0
  %71 = vmatprep.subr.mxu0 0.0
  %72 = vmatpush1.msra.mxu0 0.0
  %73 = vmatprep.subr.mxu0 0.0
  %74 = vmatpush1.msra.mxu0 0.0
  %75 = vmatprep.subr.mxu0 0.0
  %76 = vmatpush1.msra.mxu0 0.0
  %77 = vmatprep.subr.mxu0 0.0
  %78 = vmatpush1.msra.mxu0 0.0
  %79 = vmatprep.subr.mxu0 0.0
  %80 = vmatpush1.msra.mxu0 0.0
  %81 = vmatprep.subr.mxu0 0.0
  %82 = vmatpush1.msra.mxu0 0.0
  %83 = vmatprep.subr.mxu0 0.0
  %84 = vmatpush1.msra.mxu0 0.0
  %85 = vmatprep.subr.mxu0 0.0
  %86 = vmatpush1.msra.mxu0 0.0
  %87 = vmatprep.subr.mxu0 0.0
  %88 = vmatpush1.msra.mxu0 0.0
  %89 = vmatprep.subr.mxu0 0.0
  %90 = vmatpush1.msra.mxu0 0.0
  %91 = vmatprep.subr.mxu0 0.0
  %92 = vmatpush1.msra.mxu0 0.0
  %93 = vmatprep.subr.mxu0 0.0
  %94 = vmatpush1.msra.mxu0 0.0
  %95 = vmatprep.subr.mxu0 0.0
  %96 = vmatpush1.msra.mxu0 0.0
  %97 = vmatprep.subr.mxu0 0.0
  %98 = vmatpush1.msra.mxu0 0.0
  %99 = vmatprep.subr.mxu0 0.0
  %100 = vmatpush1.msra.mxu0 0.0
  %101 = vmatprep.mubr.f32.mxu0 0.0
  %102 = vmatmul.mubr.f32.gmra.mrb[0].mxu0 %v32
  %v103 = vpop.f32.mrb[0].mxu0
  %v104 = vadd.f32 %v28, %v103
  %v105 = vpop.f32.mrb[0].mxu0
  %106 = vmatprep.mubr.f32.mxu0 0.0
  %107 = vmatmul.mubr.f32.gmra.mrb[0].mxu0 %v35
  %v108 = vpop.f32.mrb[0].mxu0
  %v109 = vadd.f32 %v28, %v108
  %v110 = vpop.f32.mrb[0].mxu0
  %111 = vdwg.mxu0
  %v112 = vld [vmem:[%s1] sm:$0xff]
  %v113 = vld [vmem:[%s1 + $0x8] sm:$0xff]
  %v114 = vadd.f32 %v112, %v104
  %v115 = vadd.f32 %v113, %v109
  %116 = vst.msk [vmem:[%s4] sm:$0xff] %vm30, %v114
  %117 = vst.msk [vmem:[%s4 + $0x8] sm:$0xff] %vm30, %v115
  // Predicated region
  $region18: #{_lambda_.24} parent=0 // pred_check
    _
  $region19: #{_lambda_.24} parent=0 // pred_check_branch
    %119 = sbr.rel (0) target = $region21
  $region20: #{_lambda_.24} parent=0 // pred_region
    _
  $region21: #{_lambda_.24} parent=0 // pred_fallthru
    _
  // Predicated region
  $region22: #{_lambda_.24} parent=0 // pred_check
    _
  $region23: #{_lambda_.24} parent=0 // pred_check_branch
    %121 = sbr.rel (0) target = $region25
  $region24: #{_lambda_.24} parent=0 // pred_region
    _
  $region25: #{_lambda_.24} parent=0 // pred_fallthru
    _

// kernel: _lambda_.26
$region0: #{_lambda_.26}
  #allocation0 [shape = 'u32[]', space=smem, size = 0x4, offset = 0x4, fixed_abs, tag = 'smem constant byte address 0x4 - core index']
  #allocation1 [shape = 'u32[144,128]{1,0:T(1,128)}', space=vmem, size = 0x12000, scoped, tag = 'internal scratch']
  %s0 = inlined_call_operand.vmem [shape: f32[2,8,32], index: 0, kind: input, shape index: {}]
  %s1 = inlined_call_operand.vmem [shape: f32[7,32], index: 1, kind: input, shape index: {}]
  %s2 = inlined_call_operand.vmem [shape: f32[1,32], index: 2, kind: input, shape index: {}]
  %s3 = inlined_call_operand.vmem [shape: f32[1,32], index: 3, kind: input, shape index: {}]
  %s4 = inlined_call_operand.vmem [shape: f32[1,32], index: 4, kind: input, shape index: {}]
  %s5 = inlined_call_operand.vmem [shape: f32[1,32], index: 5, kind: input, shape index: {}]
  %s6 = inlined_call_operand.vmem [shape: f32[1,32], index: 6, kind: input, shape index: {}]
  %s7 = inlined_call_operand.vmem [shape: f32[2,8,32], index: 7, kind: output, shape index: {}]
  %s8 = sld [smem:[#allocation0]]
  $region61: #{_lambda_.26} parent=0
    _
  %s10 = ssub.s32 1, %s8
  %s11 = scalar_select 0, %s10, %s8
  loop: start=0, step=1, limit=4
  $region2: #{_lambda_.26} parent=0 // loop_pre_header
    _
  $region3: #{_lambda_.26} parent=0 // loop_header
    %s13 = sphi 0, %s17
    %p14 = scmp.ge.s32.totalorder %s13, 4
    %s23 = sphi 0, %s25
    %s26 = sphi 0, %s23
    %s27 = sphi 0, %s26
    %s43 = sphi 0, %s27
    %s47 = sphi 0, %s47
    %s49 = sphi 0, %s47
    %s50 = sphi 0, %s49
    %s64 = sphi 0, %s50
    %s68 = sphi 0, %s68
    %s70 = sphi 0, %s68
    %s71 = sphi 0, %s70
    %s85 = sphi 0, %s71
    %s89 = sphi 0, %s89
    %s91 = sphi 0, %s89
    %s92 = sphi 0, %s91
    %s106 = sphi 0, %s92
    %s110 = sphi 0, %s110
    %s112 = sphi 0, %s110
    %s113 = sphi 0, %s112
    %s127 = sphi 0, %s113
    %s131 = sphi 0, %s131
    %s133 = sphi 0, %s131
    %s134 = sphi 0, %s133
    %s148 = sphi 0, %s134
    %s152 = sphi 0, %s152
    %s154 = sphi 0, %s152
    %s155 = sphi 0, %s154
    %s169 = sphi 0, %s155
    %s175 = sphi 0, %s177
    %s178 = sphi 0, %s175
    %s179 = sphi 0, %s178
    %s195 = sphi 0, %s179
  $region4: #{_lambda_.26} parent=0 // loop_header_branch
    %16 = sbr.rel (%p14) target = $region8
  $region5: #{_lambda_.26} parent=0 // loop_body
    %s18 = ssub.s32 %s13, 1
    %s19 = ssub.s32 %s13, 2
    %s20 = sadd.s32 %s13, 1
    %s21 = ssub.s32 %s13, %s20
    %p22 = scmp.eq.s32.totalorder %s21, 0
    %s24 = sadd.s32 %s23, 1
    %s25 = scalar_select %p22, %s23, %s24
    %p28 = pneg %p22
    %p29 = scmp.eq.s32.totalorder %s13, 1
    %p30 = por %p28, %p29
    %p31 = scmp.ne.s32.totalorder %s23, %s26
    %p32 = scmp.eq.s32.totalorder %s13, 0
    %p33 = por %p31, %p32
    %p34 = scmp.ne.s32.totalorder %s23, %s26
    %p35 = scmp.eq.s32.totalorder %s18, 1
    %p36 = por %p34, %p35
    %p37 = scmp.ne.s32.totalorder %s26, %s27
    %p38 = scmp.eq.s32.totalorder %s18, 0
    %p39 = por %p37, %p38
    %p40 = scmp.ne.s32.totalorder %s26, %s27
    %p41 = scmp.eq.s32.totalorder %s19, 1
    %p42 = por %p40, %p41
    %p44 = scmp.ne.s32.totalorder %s27, %s43
    %p45 = scmp.eq.s32.totalorder %s19, 0
    %p46 = por %p44, %p45
    %s48 = sadd.s32 %s47, 1
    %p51 = scmp.eq.s32.totalorder %s13, 1
    %p52 = scmp.ne.s32.totalorder %s47, %s49
    %p53 = scmp.eq.s32.totalorder %s13, 0
    %p54 = por %p52, %p53
    %p55 = scmp.ne.s32.totalorder %s47, %s49
    %p56 = scmp.eq.s32.totalorder %s18, 1
    %p57 = por %p55, %p56
    %p58 = scmp.ne.s32.totalorder %s49, %s50
    %p59 = scmp.eq.s32.totalorder %s18, 0
    %p60 = por %p58, %p59
    %p61 = scmp.ne.s32.totalorder %s49, %s50
    %p62 = scmp.eq.s32.totalorder %s19, 1
    %p63 = por %p61, %p62
    %p65 = scmp.ne.s32.totalorder %s50, %s64
    %p66 = scmp.eq.s32.totalorder %s19, 0
    %p67 = por %p65, %p66
    %s69 = sadd.s32 %s68, 1
    %p72 = scmp.eq.s32.totalorder %s13, 1
    %p73 = scmp.ne.s32.totalorder %s68, %s70
    %p74 = scmp.eq.s32.totalorder %s13, 0
    %p75 = por %p73, %p74
    %p76 = scmp.ne.s32.totalorder %s68, %s70
    %p77 = scmp.eq.s32.totalorder %s18, 1
    %p78 = por %p76, %p77
    %p79 = scmp.ne.s32.totalorder %s70, %s71
    %p80 = scmp.eq.s32.totalorder %s18, 0
    %p81 = por %p79, %p80
    %p82 = scmp.ne.s32.totalorder %s70, %s71
    %p83 = scmp.eq.s32.totalorder %s19, 1
    %p84 = por %p82, %p83
    %p86 = scmp.ne.s32.totalorder %s71, %s85
    %p87 = scmp.eq.s32.totalorder %s19, 0
    %p88 = por %p86, %p87
    %s90 = sadd.s32 %s89, 1
    %p93 = scmp.eq.s32.totalorder %s13, 1
    %p94 = scmp.ne.s32.totalorder %s89, %s91
    %p95 = scmp.eq.s32.totalorder %s13, 0
    %p96 = por %p94, %p95
    %p97 = scmp.ne.s32.totalorder %s89, %s91
    %p98 = scmp.eq.s32.totalorder %s18, 1
    %p99 = por %p97, %p98
    %p100 = scmp.ne.s32.totalorder %s91, %s92
    %p101 = scmp.eq.s32.totalorder %s18, 0
    %p102 = por %p100, %p101
    %p103 = scmp.ne.s32.totalorder %s91, %s92
    %p104 = scmp.eq.s32.totalorder %s19, 1
    %p105 = por %p103, %p104
    %p107 = scmp.ne.s32.totalorder %s92, %s106
    %p108 = scmp.eq.s32.totalorder %s19, 0
    %p109 = por %p107, %p108
    %s111 = sadd.s32 %s110, 1
    %p114 = scmp.eq.s32.totalorder %s13, 1
    %p115 = scmp.ne.s32.totalorder %s110, %s112
    %p116 = scmp.eq.s32.totalorder %s13, 0
    %p117 = por %p115, %p116
    %p118 = scmp.ne.s32.totalorder %s110, %s112
    %p119 = scmp.eq.s32.totalorder %s18, 1
    %p120 = por %p118, %p119
    %p121 = scmp.ne.s32.totalorder %s112, %s113
    %p122 = scmp.eq.s32.totalorder %s18, 0
    %p123 = por %p121, %p122
    %p124 = scmp.ne.s32.totalorder %s112, %s113
    %p125 = scmp.eq.s32.totalorder %s19, 1
    %p126 = por %p124, %p125
    %p128 = scmp.ne.s32.totalorder %s113, %s127
    %p129 = scmp.eq.s32.totalorder %s19, 0
    %p130 = por %p128, %p129
    %s132 = sadd.s32 %s131, 1
    %p135 = scmp.eq.s32.totalorder %s13, 1
    %p136 = scmp.ne.s32.totalorder %s131, %s133
    %p137 = scmp.eq.s32.totalorder %s13, 0
    %p138 = por %p136, %p137
    %p139 = scmp.ne.s32.totalorder %s131, %s133
    %p140 = scmp.eq.s32.totalorder %s18, 1
    %p141 = por %p139, %p140
    %p142 = scmp.ne.s32.totalorder %s133, %s134
    %p143 = scmp.eq.s32.totalorder %s18, 0
    %p144 = por %p142, %p143
    %p145 = scmp.ne.s32.totalorder %s133, %s134
    %p146 = scmp.eq.s32.totalorder %s19, 1
    %p147 = por %p145, %p146
    %p149 = scmp.ne.s32.totalorder %s134, %s148
    %p150 = scmp.eq.s32.totalorder %s19, 0
    %p151 = por %p149, %p150
    %s153 = sadd.s32 %s152, 1
    %p156 = scmp.eq.s32.totalorder %s13, 1
    %p157 = scmp.ne.s32.totalorder %s152, %s154
    %p158 = scmp.eq.s32.totalorder %s13, 0
    %p159 = por %p157, %p158
    %p160 = scmp.ne.s32.totalorder %s152, %s154
    %p161 = scmp.eq.s32.totalorder %s18, 1
    %p162 = por %p160, %p161
    %p163 = scmp.ne.s32.totalorder %s154, %s155
    %p164 = scmp.eq.s32.totalorder %s18, 0
    %p165 = por %p163, %p164
    %p166 = scmp.ne.s32.totalorder %s154, %s155
    %p167 = scmp.eq.s32.totalorder %s19, 1
    %p168 = por %p166, %p167
    %p170 = scmp.ne.s32.totalorder %s155, %s169
    %p171 = scmp.eq.s32.totalorder %s19, 0
    %p172 = por %p170, %p171
    %s173 = ssub.s32 %s13, %s20
    %p174 = scmp.eq.s32.totalorder %s173, 0
    %s176 = sadd.s32 %s175, 1
    %s177 = scalar_select %p174, %s175, %s176
    %p180 = pneg %p174
    %p181 = scmp.eq.s32.totalorder %s13, 1
    %p182 = por %p180, %p181
    %p183 = scmp.ne.s32.totalorder %s175, %s178
    %p184 = scmp.eq.s32.totalorder %s13, 0
    %p185 = por %p183, %p184
    %p186 = scmp.ne.s32.totalorder %s175, %s178
    %p187 = scmp.eq.s32.totalorder %s18, 1
    %p188 = por %p186, %p187
    %p189 = scmp.ne.s32.totalorder %s178, %s179
    %p190 = scmp.eq.s32.totalorder %s18, 0
    %p191 = por %p189, %p190
    %p192 = scmp.ne.s32.totalorder %s178, %s179
    %p193 = scmp.eq.s32.totalorder %s19, 1
    %p194 = por %p192, %p193
    %p196 = scmp.ne.s32.totalorder %s179, %s195
    %p197 = scmp.eq.s32.totalorder %s19, 0
    %p198 = por %p196, %p197
    %p199 = scmp.le.s32.totalorder 1, %s13
    %p200 = scmp.lt.s32.totalorder %s13, 3
    %p201 = pnand %p199, %p200
    %p202 = pneg %p201
    // Predicated region
    $region9: #{_lambda_.26} parent=5 // pred_check
      _
    $region10: #{_lambda_.26} parent=5 // pred_check_branch
      %204 = sbr.rel (%p201) target = $region12
    $region11: #{_lambda_.26} parent=5 // pred_region
      %s205 = ssub.s32 %s13, 1
      // Predicated region
      $region13: #{_lambda_.26} parent=11 // pred_check
        %p206 = pneg %p60
      $region14: #{_lambda_.26} parent=11 // pred_check_branch
        %208 = sbr.rel (%p206) target = $region16
      $region15: #{_lambda_.26} parent=11 // pred_region
        _
      $region16: #{_lambda_.26} parent=11 // pred_fallthru
        _
      // Predicated region
      $region17: #{_lambda_.26} parent=11 // pred_check
        %p209 = pneg %p81
      $region18: #{_lambda_.26} parent=11 // pred_check_branch
        %211 = sbr.rel (%p209) target = $region20
      $region19: #{_lambda_.26} parent=11 // pred_region
        _
      $region20: #{_lambda_.26} parent=11 // pred_fallthru
        _
      // Predicated region
      $region21: #{_lambda_.26} parent=11 // pred_check
        %p212 = pneg %p102
      $region22: #{_lambda_.26} parent=11 // pred_check_branch
        %214 = sbr.rel (%p212) target = $region24
      $region23: #{_lambda_.26} parent=11 // pred_region
        _
      $region24: #{_lambda_.26} parent=11 // pred_fallthru
        _
      // Predicated region
      $region25: #{_lambda_.26} parent=11 // pred_check
        %p215 = pneg %p123
      $region26: #{_lambda_.26} parent=11 // pred_check_branch
        %217 = sbr.rel (%p215) target = $region28
      $region27: #{_lambda_.26} parent=11 // pred_region
        _
      $region28: #{_lambda_.26} parent=11 // pred_fallthru
        _
      // Predicated region
      $region29: #{_lambda_.26} parent=11 // pred_check
        %p218 = pneg %p144
      $region30: #{_lambda_.26} parent=11 // pred_check_branch
        %220 = sbr.rel (%p218) target = $region32
      $region31: #{_lambda_.26} parent=11 // pred_region
        _
      $region32: #{_lambda_.26} parent=11 // pred_fallthru
        _
      // Predicated region
      $region33: #{_lambda_.26} parent=11 // pred_check
        %p221 = pneg %p165
      $region34: #{_lambda_.26} parent=11 // pred_check_branch
        %223 = sbr.rel (%p221) target = $region36
      $region35: #{_lambda_.26} parent=11 // pred_region
        _
      $region36: #{_lambda_.26} parent=11 // pred_fallthru
        _
    $region12: #{_lambda_.26} parent=5 // pred_fallthru
      _
    %p224 = scmp.lt.s32.totalorder %s13, 2
    // Predicated region
    $region37: #{_lambda_.26} parent=5 // pred_check
      %p225 = pneg %p224
    $region38: #{_lambda_.26} parent=5 // pred_check_branch
      %227 = sbr.rel (%p225) target = $region40
    $region39: #{_lambda_.26} parent=5 // pred_region
      // Predicated region
      $region41: #{_lambda_.26} parent=39 // pred_check
        %p228 = pneg %p33
      $region42: #{_lambda_.26} parent=39 // pred_check_branch
        %230 = sbr.rel (%p228) target = $region44
      $region43: #{_lambda_.26} parent=39 // pred_region
        %p231 = scmp.lt.s32.totalorder %s13, 1
        %s232 = scalar_select %p231, %s13, 1
        %s233 = smul.addr %s232, 8
        %s234 = scalar_lea.vmem %s0, %s233
      $region44: #{_lambda_.26} parent=39 // pred_fallthru
        _
    $region40: #{_lambda_.26} parent=5 // pred_fallthru
      _
    %p235 = scmp.le.s32.totalorder 1, %s13
    %p236 = scmp.lt.s32.totalorder %s13, 3
    %p237 = pnand %p235, %p236
    %p238 = pneg %p237
    // Predicated region
    $region45: #{_lambda_.26} parent=5 // pred_check
      _
    $region46: #{_lambda_.26} parent=5 // pred_check_branch
      %240 = sbr.rel (%p237) target = $region48
    $region47: #{_lambda_.26} parent=5 // pred_region
      %s241 = ssub.s32 %s13, 1
      %p242 = scmp.lt.s32.totalorder %s18, 1
      %s243 = scalar_select %p242, %s18, 1
      %s244 = smul.addr %s243, 8
      %s245 = scalar_lea.vmem %s0, %s244
      %p246 = pneg %p39
      %p247 = pneg %p36
      %p248 = pneg %p60
      %p249 = pneg %p57
      %p250 = pneg %p81
      %p251 = pneg %p78
      %p252 = pneg %p102
      %p253 = pneg %p99
      %p254 = pneg %p123
      %p255 = pneg %p120
      %p256 = pneg %p144
      %p257 = pneg %p141
      %p258 = pneg %p165
      %p259 = pneg %p162
      %p260 = pneg %p191
      %p261 = pneg %p188
      %p262 = scmp.lt.s32.totalorder %s18, 1
      %s263 = scalar_select %p262, %s18, 1
      %s264 = smul.addr %s263, 8
      %s265 = scalar_lea.vmem %s7, %s264
      %p266 = scmp.lt.s32.totalorder %s18, 1
      %s267 = scalar_select %p266, %s18, 1
      %s268 = smul.addr %s267, 8
      %s269 = scalar_lea.vmem %s0, %s268
      %p270 = scmp.lt.s32.totalorder %s18, 1
      %s271 = scalar_select %p270, %s18, 1
      %s272 = smul.addr %s271, 8
      %s273 = scalar_lea.vmem %s7, %s272
      %v274 = vld [vmem:[%s269] sm:$0xff]
      %v276 = vrot.slane %v274, 5
      %vm278 = vcmask 1042432
      %v279 = vsel %vm278, 0.0, %v276
      %v280 = vsel %vm278, %v276, 0.0
      %v281 = vld [vmem:[%s1] sm:$0x7f]
      %v282 = vlaneseq
      %v283 = vshrl.u32 %v282, 7
      %v284 = vsub.s32 0, %v283
      %v285 = vrot.slane %v281, %v284
      %v286 = vmul.f32 %v279, %v285
      %v287 = vadd.f32 %v286, 0.0
      %v288 = vlaneseq
      %v289 = vshrl.u32 %v288, 7
      %v290 = vsub.s32 1, %v289
      %v291 = vrot.slane %v281, %v290
      %v292 = vmul.f32 %v279, %v291
      %v293 = vmul.f32 %v280, %v291
      %vm296 = vcmask 1046528
      %v297 = vrot.slane %v292, 1
      %v298 = vrot.slane %v293, 1
      %v299 = vsel %vm296, %v297, %v298
      %v301 = vadd.f32 %v287, %v299
      %v302 = vlaneseq
      %v303 = vshrl.u32 %v302, 7
      %v304 = vsub.s32 2, %v303
      %v305 = vrot.slane %v281, %v304
      %v306 = vmul.f32 %v279, %v305
      %v307 = vmul.f32 %v280, %v305
      %vm310 = vcmask 1045504
      %v311 = vrot.slane %v306, 2
      %v312 = vrot.slane %v307, 2
      %v313 = vsel %vm310, %v311, %v312
      %v315 = vadd.f32 %v301, %v313
      %v316 = vlaneseq
      %v317 = vshrl.u32 %v316, 7
      %v318 = vsub.s32 3, %v317
      %v319 = vrot.slane %v281, %v318
      %v320 = vmul.f32 %v279, %v319
      %v321 = vmul.f32 %v280, %v319
      %vm324 = vcmask 1044480
      %v325 = vrot.slane %v320, 3
      %v326 = vrot.slane %v321, 3
      %v327 = vsel %vm324, %v325, %v326
      %v329 = vadd.f32 %v315, %v327
      %v330 = vlaneseq
      %v331 = vshrl.u32 %v330, 7
      %v332 = vsub.s32 4, %v331
      %v333 = vrot.slane %v281, %v332
      %v334 = vmul.f32 %v279, %v333
      %v335 = vmul.f32 %v280, %v333
      %vm338 = vcmask 1043456
      %v339 = vrot.slane %v334, 4
      %v340 = vrot.slane %v335, 4
      %v341 = vsel %vm338, %v339, %v340
      %v343 = vadd.f32 %v329, %v341
      %v344 = vlaneseq
      %v345 = vshrl.u32 %v344, 7
      %v346 = vsub.s32 5, %v345
      %v347 = vrot.slane %v281, %v346
      %v348 = vmul.f32 %v279, %v347
      %v349 = vmul.f32 %v280, %v347
      %v352 = vrot.slane %v348, 5
      %v353 = vrot.slane %v349, 5
      %v354 = vsel %vm278, %v352, %v353
      %v356 = vadd.f32 %v343, %v354
      %v357 = vlaneseq
      %v358 = vshrl.u32 %v357, 7
      %v359 = vsub.s32 6, %v358
      %v360 = vrot.slane %v281, %v359
      %v361 = vmul.f32 %v279, %v360
      %v362 = vmul.f32 %v280, %v360
      %vm365 = vcmask 1041408
      %v366 = vrot.slane %v361, 6
      %v367 = vrot.slane %v362, 6
      %v368 = vsel %vm365, %v366, %v367
      %v370 = vadd.f32 %v356, %v368
      %v371 = vld [vmem:[%s2] sm:$0x1]
      %v373 = vlaneseq
      %v374 = vshrl.u32 %v373, 7
      %v375 = vsub.s32 0, %v374
      %v376 = vrot.slane %v371, %v375
      %v378 = vadd.f32 %v370, %v376
      %v379 = vld [vmem:[%s5] sm:$0x1]
      %v381 = vlaneseq
      %v382 = vshrl.u32 %v381, 7
      %v383 = vsub.s32 0, %v382
      %v384 = vrot.slane %v379, %v383
      %v386 = vsub.f32 %v378, %v384
      %v387 = vld [vmem:[%s6] sm:$0x1]
      %v388 = vadd.f32 %v387, 1e-05
      %v389 = vrsqrt.pop %v388
      %v391 = vlaneseq
      %v392 = vshrl.u32 %v391, 7
      %v393 = vsub.s32 0, %v392
      %v394 = vrot.slane %v389, %v393
      %v396 = vmul.f32 %v386, %v394
      %v397 = vld [vmem:[%s3] sm:$0x1]
      %v399 = vlaneseq
      %v400 = vshrl.u32 %v399, 7
      %v401 = vsub.s32 0, %v400
      %v402 = vrot.slane %v397, %v401
      %v404 = vmul.f32 %v396, %v402
      %v405 = vld [vmem:[%s4] sm:$0x1]
      %v407 = vlaneseq
      %v408 = vshrl.u32 %v407, 7
      %v409 = vsub.s32 0, %v408
      %v410 = vrot.slane %v405, %v409
      %v412 = vadd.f32 %v404, %v410
      %v413 = vxor.u32 %v412, 2147483648
      %v414 = vmul.f32 %v413, 1.442695
      %v415 = vpow.pop %v414
      %v416 = vadd.f32 %v415, 1.0
      %v417 = vrcp.pop %v416
      %v418 = vmul.f32 1.0, %v417
      %v419 = vmul.f32 %v412, %v418
      %vm420 = vcmask 261120
      %421 = vst.msk [vmem:[%s273] sm:$0xff] %vm420, %v419
      %p422 = scmp.lt.s32.totalorder %s18, 1
      %s423 = scalar_select %p422, %s18, 1
      %s424 = smul.addr %s423, 8
      %s425 = scalar_lea.vmem %s7, %s424
      // Predicated region
      $region49: #{_lambda_.26} parent=47 // pred_check
        %p426 = pneg %p188
      $region50: #{_lambda_.26} parent=47 // pred_check_branch
        %428 = sbr.rel (%p426) target = $region52
      $region51: #{_lambda_.26} parent=47 // pred_region
        _
      $region52: #{_lambda_.26} parent=47 // pred_fallthru
        _
    $region48: #{_lambda_.26} parent=5 // pred_fallthru
      _
    %p429 = scmp.le.s32.totalorder 2, %s13
    // Predicated region
    $region53: #{_lambda_.26} parent=5 // pred_check
      %p430 = pneg %p429
    $region54: #{_lambda_.26} parent=5 // pred_check_branch
      %432 = sbr.rel (%p430) target = $region56
    $region55: #{_lambda_.26} parent=5 // pred_region
      %s433 = ssub.s32 %s13, 2
      // Predicated region
      $region57: #{_lambda_.26} parent=55 // pred_check
        %p434 = pneg %p194
      $region58: #{_lambda_.26} parent=55 // pred_check_branch
        %436 = sbr.rel (%p434) target = $region60
      $region59: #{_lambda_.26} parent=55 // pred_region
        %p437 = scmp.lt.s32.totalorder %s19, 1
        %s438 = scalar_select %p437, %s19, 1
        %s439 = smul.addr %s438, 8
        %s440 = scalar_lea.vmem %s7, %s439
      $region60: #{_lambda_.26} parent=55 // pred_fallthru
        _
    $region56: #{_lambda_.26} parent=5 // pred_fallthru
      _
  $region6: #{_lambda_.26} parent=0 // loop_footer
    %s17 = sadd.s32 1, %s13
  $region7: #{_lambda_.26} parent=0 // loop_footer_branch
    %12 = sbr.rel target = $region3
  $region8: #{_lambda_.26} parent=0 // loop_exit
    _

// kernel: _lambda_.29
$region0: #{_lambda_.29}
  #allocation0 [shape = 'u32[]', space=smem, size = 0x4, offset = 0x4, fixed_abs, tag = 'smem constant byte address 0x4 - core index']
  #allocation1 [shape = 'u32[144,128]{1,0:T(1,128)}', space=vmem, size = 0x12000, scoped, tag = 'internal scratch']
  %s0 = inlined_call_operand.vmem [shape: f32[16,32], index: 0, kind: input, shape index: {}]
  %s1 = inlined_call_operand.vmem [shape: f32[1,32], index: 1, kind: input, shape index: {}]
  %s2 = inlined_call_operand.vmem [shape: f32[1,32], index: 2, kind: input, shape index: {}]
  %s3 = inlined_call_operand.vmem [shape: f32[16,32], index: 3, kind: output, shape index: {}]
  %s4 = sld [smem:[#allocation0]]
  $region22: #{_lambda_.29} parent=0
    _
  %s6 = ssub.s32 1, %s4
  %s7 = scalar_select 0, %s6, %s4
  // Predicated region
  $region2: #{_lambda_.29} parent=0 // pred_check
    _
  $region3: #{_lambda_.29} parent=0 // pred_check_branch
    %9 = sbr.rel (0) target = $region5
  $region4: #{_lambda_.29} parent=0 // pred_region
    _
  $region5: #{_lambda_.29} parent=0 // pred_fallthru
    _
  // Predicated region
  $region6: #{_lambda_.29} parent=0 // pred_check
    _
  $region7: #{_lambda_.29} parent=0 // pred_check_branch
    %11 = sbr.rel (0) target = $region9
  $region8: #{_lambda_.29} parent=0 // pred_region
    _
  $region9: #{_lambda_.29} parent=0 // pred_fallthru
    _
  // Predicated region
  $region10: #{_lambda_.29} parent=0 // pred_check
    _
  $region11: #{_lambda_.29} parent=0 // pred_check_branch
    %13 = sbr.rel (0) target = $region13
  $region12: #{_lambda_.29} parent=0 // pred_region
    _
  $region13: #{_lambda_.29} parent=0 // pred_fallthru
    _
  %v14 = vld [vmem:[%s0] sm:$0xff]
  %v15 = vld [vmem:[%s0 + $0x8] sm:$0xff]
  %v16 = vld [vmem:[%s1] sm:$0x1]
  %v17 = vld [vmem:[%s2] sm:$0x1]
  %vm18 = vcmask 261120
  %v19 = vsel %vm18, %v14, 0.0
  %20 = vadd.xlane.f32.xlu0 %v19
  %v21 = vpop.xlane.xlu0 %20
  %v22 = vsel %vm18, %v15, 0.0
  %23 = vadd.xlane.f32.xlu0 %v22
  %v24 = vpop.xlane.xlu0 %23
  %v25 = vrcp.pop 32.0
  %v26 = vmul.f32 %v21, %v25
  %v27 = vmul.f32 %v24, %v25
  %v28 = vsub.f32 %v14, %v26
  %v29 = vsub.f32 %v15, %v27
  %v30 = vmul.f32 %v28, %v28
  %v31 = vmul.f32 %v29, %v29
  %v32 = vsel %vm18, %v30, 0.0
  %33 = vadd.xlane.f32.xlu0 %v32
  %v34 = vpop.xlane.xlu0 %33
  %v35 = vsel %vm18, %v31, 0.0
  %36 = vadd.xlane.f32.xlu0 %v35
  %v37 = vpop.xlane.xlu0 %36
  %v38 = vmul.f32 %v34, %v25
  %v39 = vmul.f32 %v37, %v25
  %v40 = vadd.f32 %v38, 1e-05
  %v41 = vadd.f32 %v39, 1e-05
  %v42 = vrsqrt.pop %v40
  %v43 = vrsqrt.pop %v41
  %v44 = vmul.f32 %v28, %v42
  %v45 = vmul.f32 %v29, %v43
  %v47 = vlaneseq
  %v48 = vshrl.u32 %v47, 7
  %v49 = vsub.s32 0, %v48
  %v50 = vrot.slane %v16, %v49
  %v52 = vmul.f32 %v44, %v50
  %v53 = vmul.f32 %v45, %v50
  %v55 = vlaneseq
  %v56 = vshrl.u32 %v55, 7
  %v57 = vsub.s32 0, %v56
  %v58 = vrot.slane %v17, %v57
  %v60 = vadd.f32 %v52, %v58
  %v61 = vadd.f32 %v53, %v58
  %62 = vst.msk [vmem:[%s3] sm:$0xff] %vm18, %v60
  %63 = vst.msk [vmem:[%s3 + $0x8] sm:$0xff] %vm18, %v61
  // Predicated region
  $region14: #{_lambda_.29} parent=0 // pred_check
    _
  $region15: #{_lambda_.29} parent=0 // pred_check_branch
    %65 = sbr.rel (0) target = $region17
  $region16: #{_lambda_.29} parent=0 // pred_region
    _
  $region17: #{_lambda_.29} parent=0 // pred_fallthru
    _
  // Predicated region
  $region18: #{_lambda_.29} parent=0 // pred_check
    _
  $region19: #{_lambda_.29} parent=0 // pred_check_branch
    %67 = sbr.rel (0) target = $region21
  $region20: #{_lambda_.29} parent=0 // pred_region
    _
  $region21: #{_lambda_.29} parent=0 // pred_fallthru
    _

// kernel: _lambda_.25
$region0: #{_lambda_.25}
  #allocation0 [shape = 'u32[]', space=smem, size = 0x4, offset = 0x4, fixed_abs, tag = 'smem constant byte address 0x4 - core index']
  #allocation1 [shape = 'u32[144,128]{1,0:T(1,128)}', space=vmem, size = 0x12000, scoped, tag = 'internal scratch']
  %s0 = inlined_call_operand.vmem [shape: f32[16,32], index: 0, kind: input, shape index: {}]
  %s1 = inlined_call_operand.vmem [shape: f32[1,32], index: 1, kind: input, shape index: {}]
  %s2 = inlined_call_operand.vmem [shape: f32[1,32], index: 2, kind: input, shape index: {}]
  %s3 = inlined_call_operand.vmem [shape: f32[32,32], index: 3, kind: input, shape index: {}]
  %s4 = inlined_call_operand.vmem [shape: f32[1,32], index: 4, kind: input, shape index: {}]
  %s5 = inlined_call_operand.vmem [shape: f32[32,32], index: 5, kind: input, shape index: {}]
  %s6 = inlined_call_operand.vmem [shape: f32[1,32], index: 6, kind: input, shape index: {}]
  %s7 = inlined_call_operand.vmem [shape: f32[16,32], index: 7, kind: output, shape index: {}]
  %s8 = sld [smem:[#allocation0]]
  $region38: #{_lambda_.25} parent=0
    _
  %s10 = ssub.s32 1, %s8
  %s11 = scalar_select 0, %s10, %s8
  // Predicated region
  $region2: #{_lambda_.25} parent=0 // pred_check
    _
  $region3: #{_lambda_.25} parent=0 // pred_check_branch
    %13 = sbr.rel (0) target = $region5
  $region4: #{_lambda_.25} parent=0 // pred_region
    _
  $region5: #{_lambda_.25} parent=0 // pred_fallthru
    _
  // Predicated region
  $region6: #{_lambda_.25} parent=0 // pred_check
    _
  $region7: #{_lambda_.25} parent=0 // pred_check_branch
    %15 = sbr.rel (0) target = $region9
  $region8: #{_lambda_.25} parent=0 // pred_region
    _
  $region9: #{_lambda_.25} parent=0 // pred_fallthru
    _
  // Predicated region
  $region10: #{_lambda_.25} parent=0 // pred_check
    _
  $region11: #{_lambda_.25} parent=0 // pred_check_branch
    %17 = sbr.rel (0) target = $region13
  $region12: #{_lambda_.25} parent=0 // pred_region
    _
  $region13: #{_lambda_.25} parent=0 // pred_fallthru
    _
  // Predicated region
  $region14: #{_lambda_.25} parent=0 // pred_check
    _
  $region15: #{_lambda_.25} parent=0 // pred_check_branch
    %19 = sbr.rel (0) target = $region17
  $region16: #{_lambda_.25} parent=0 // pred_region
    _
  $region17: #{_lambda_.25} parent=0 // pred_fallthru
    _
  // Predicated region
  $region18: #{_lambda_.25} parent=0 // pred_check
    _
  $region19: #{_lambda_.25} parent=0 // pred_check_branch
    %21 = sbr.rel (0) target = $region21
  $region20: #{_lambda_.25} parent=0 // pred_region
    _
  $region21: #{_lambda_.25} parent=0 // pred_fallthru
    _
  // Predicated region
  $region22: #{_lambda_.25} parent=0 // pred_check
    _
  $region23: #{_lambda_.25} parent=0 // pred_check_branch
    %23 = sbr.rel (0) target = $region25
  $region24: #{_lambda_.25} parent=0 // pred_region
    _
  $region25: #{_lambda_.25} parent=0 // pred_fallthru
    _
  // Predicated region
  $region26: #{_lambda_.25} parent=0 // pred_check
    _
  $region27: #{_lambda_.25} parent=0 // pred_check_branch
    %25 = sbr.rel (0) target = $region29
  $region28: #{_lambda_.25} parent=0 // pred_region
    _
  $region29: #{_lambda_.25} parent=0 // pred_fallthru
    _
  %v26 = vld [vmem:[%s0] sm:$0xff]
  %v27 = vld [vmem:[%s0 + $0x8] sm:$0xff]
  %v28 = vld [vmem:[%s1] sm:$0x1]
  %v29 = vld [vmem:[%s2] sm:$0x1]
  %vm30 = vcmask 261120
  %v31 = vsel %vm30, %v26, 0.0
  %32 = vadd.xlane.f32.xlu0 %v31
  %v33 = vpop.xlane.xlu0 %32
  %v34 = vsel %vm30, %v27, 0.0
  %35 = vadd.xlane.f32.xlu0 %v34
  %v36 = vpop.xlane.xlu0 %35
  %v37 = vrcp.pop 32.0
  %v38 = vmul.f32 %v33, %v37
  %v39 = vmul.f32 %v36, %v37
  %v40 = vsub.f32 %v26, %v38
  %v41 = vsub.f32 %v27, %v39
  %v42 = vmul.f32 %v40, %v40
  %v43 = vmul.f32 %v41, %v41
  %v44 = vsel %vm30, %v42, 0.0
  %45 = vadd.xlane.f32.xlu0 %v44
  %v46 = vpop.xlane.xlu0 %45
  %v47 = vsel %vm30, %v43, 0.0
  %48 = vadd.xlane.f32.xlu0 %v47
  %v49 = vpop.xlane.xlu0 %48
  %v50 = vmul.f32 %v46, %v37
  %v51 = vmul.f32 %v49, %v37
  %v52 = vadd.f32 %v50, 1e-05
  %v53 = vadd.f32 %v51, 1e-05
  %v54 = vrsqrt.pop %v52
  %v55 = vrsqrt.pop %v53
  %v56 = vmul.f32 %v40, %v54
  %v57 = vmul.f32 %v41, %v55
  %v59 = vlaneseq
  %v60 = vshrl.u32 %v59, 7
  %v61 = vsub.s32 0, %v60
  %v62 = vrot.slane %v28, %v61
  %v64 = vmul.f32 %v56, %v62
  %v65 = vmul.f32 %v57, %v62
  %v67 = vlaneseq
  %v68 = vshrl.u32 %v67, 7
  %v69 = vsub.s32 0, %v68
  %v70 = vrot.slane %v29, %v69
  %v72 = vadd.f32 %v64, %v70
  %v73 = vadd.f32 %v65, %v70
  %v74 = vld [vmem:[%s3] sm:$0xff]
  %v75 = vld [vmem:[%s3 + $0x8] sm:$0xff]
  %v76 = vld [vmem:[%s3 + $0x10] sm:$0xff]
  %v77 = vld [vmem:[%s3 + $0x18] sm:$0xff]
  %v78 = vld [vmem:[%s4] sm:$0x1]
  %v80 = vlaneseq
  %v81 = vshrl.u32 %v80, 7
  %v82 = vsub.s32 0, %v81
  %v83 = vrot.slane %v78, %v82
  %v86 = vsel %vm30, %v72, 0
  %v89 = vsel %vm30, %v73, 0
  %91 = vmatprep.subr.mxu0 0.0
  %92 = vmatpush1.msra.mxu0 %v74
  %93 = vmatprep.subr.mxu0 0.0
  %94 = vmatpush1.msra.mxu0 %v75
  %95 = vmatprep.subr.mxu0 0.0
  %96 = vmatpush1.msra.mxu0 %v76
  %97 = vmatprep.subr.mxu0 0.0
  %98 = vmatpush1.msra.mxu0 %v77
  %99 = vmatprep.subr.mxu0 0.0
  %100 = vmatpush1.msra.mxu0 0.0
  %101 = vmatprep.subr.mxu0 0.0
  %102 = vmatpush1.msra.mxu0 0.0
  %103 = vmatprep.subr.mxu0 0.0
  %104 = vmatpush1.msra.mxu0 0.0
  %105 = vmatprep.subr.mxu0 0.0
  %106 = vmatpush1.msra.mxu0 0.0
  %107 = vmatprep.subr.mxu0 0.0
  %108 = vmatpush1.msra.mxu0 0.0
  %109 = vmatprep.subr.mxu0 0.0
  %110 = vmatpush1.msra.mxu0 0.0
  %111 = vmatprep.subr.mxu0 0.0
  %112 = vmatpush1.msra.mxu0 0.0
  %113 = vmatprep.subr.mxu0 0.0
  %114 = vmatpush1.msra.mxu0 0.0
  %115 = vmatprep.subr.mxu0 0.0
  %116 = vmatpush1.msra.mxu0 0.0
  %117 = vmatprep.subr.mxu0 0.0
  %118 = vmatpush1.msra.mxu0 0.0
  %119 = vmatprep.subr.mxu0 0.0
  %120 = vmatpush1.msra.mxu0 0.0
  %121 = vmatprep.subr.mxu0 0.0
  %122 = vmatpush1.msra.mxu0 0.0
  %123 = vmatprep.subr.mxu0 0.0
  %124 = vmatpush1.msra.mxu0 0.0
  %125 = vmatprep.subr.mxu0 0.0
  %126 = vmatpush1.msra.mxu0 0.0
  %127 = vmatprep.subr.mxu0 0.0
  %128 = vmatpush1.msra.mxu0 0.0
  %129 = vmatprep.subr.mxu0 0.0
  %130 = vmatpush1.msra.mxu0 0.0
  %131 = vmatprep.subr.mxu0 0.0
  %132 = vmatpush1.msra.mxu0 0.0
  %133 = vmatprep.subr.mxu0 0.0
  %134 = vmatpush1.msra.mxu0 0.0
  %135 = vmatprep.subr.mxu0 0.0
  %136 = vmatpush1.msra.mxu0 0.0
  %137 = vmatprep.subr.mxu0 0.0
  %138 = vmatpush1.msra.mxu0 0.0
  %139 = vmatprep.subr.mxu0 0.0
  %140 = vmatpush1.msra.mxu0 0.0
  %141 = vmatprep.subr.mxu0 0.0
  %142 = vmatpush1.msra.mxu0 0.0
  %143 = vmatprep.subr.mxu0 0.0
  %144 = vmatpush1.msra.mxu0 0.0
  %145 = vmatprep.subr.mxu0 0.0
  %146 = vmatpush1.msra.mxu0 0.0
  %147 = vmatprep.subr.mxu0 0.0
  %148 = vmatpush1.msra.mxu0 0.0
  %149 = vmatprep.subr.mxu0 0.0
  %150 = vmatpush1.msra.mxu0 0.0
  %151 = vmatprep.subr.mxu0 0.0
  %152 = vmatpush1.msra.mxu0 0.0
  %153 = vmatprep.subr.mxu0 0.0
  %154 = vmatpush1.msra.mxu0 0.0
  %155 = vmatprep.mubr.f32.mxu0 0.0
  %156 = vmatmul.mubr.f32.gmra.mrb[0].mxu0 %v86
  %v157 = vpop.f32.mrb[0].mxu0
  %v158 = vadd.f32 %v83, %v157
  %v159 = vpop.f32.mrb[0].mxu0
  %160 = vmatprep.mubr.f32.mxu0 0.0
  %161 = vmatmul.mubr.f32.gmra.mrb[0].mxu0 %v89
  %v162 = vpop.f32.mrb[0].mxu0
  %v163 = vadd.f32 %v83, %v162
  %v164 = vpop.f32.mrb[0].mxu0
  %165 = vdwg.mxu0
  %v166 = vld [vmem:[%s5] sm:$0xff]
  %v167 = vld [vmem:[%s5 + $0x8] sm:$0xff]
  %v168 = vld [vmem:[%s5 + $0x10] sm:$0xff]
  %v169 = vld [vmem:[%s5 + $0x18] sm:$0xff]
  %v170 = vld [vmem:[%s6] sm:$0x1]
  %v172 = vlaneseq
  %v173 = vshrl.u32 %v172, 7
  %v174 = vsub.s32 0, %v173
  %v175 = vrot.slane %v170, %v174
  %177 = vmatprep.subr.mxu0 0.0
  %178 = vmatpush1.msra.mxu0 %v166
  %179 = vmatprep.subr.mxu0 0.0
  %180 = vmatpush1.msra.mxu0 %v167
  %181 = vmatprep.subr.mxu0 0.0
  %182 = vmatpush1.msra.mxu0 %v168
  %183 = vmatprep.subr.mxu0 0.0
  %184 = vmatpush1.msra.mxu0 %v169
  %185 = vmatprep.subr.mxu0 0.0
  %186 = vmatpush1.msra.mxu0 0.0
  %187 = vmatprep.subr.mxu0 0.0
  %188 = vmatpush1.msra.mxu0 0.0
  %189 = vmatprep.subr.mxu0 0.0
  %190 = vmatpush1.msra.mxu0 0.0
  %191 = vmatprep.subr.mxu0 0.0
  %192 = vmatpush1.msra.mxu0 0.0
  %193 = vmatprep.subr.mxu0 0.0
  %194 = vmatpush1.msra.mxu0 0.0
  %195 = vmatprep.subr.mxu0 0.0
  %196 = vmatpush1.msra.mxu0 0.0
  %197 = vmatprep.subr.mxu0 0.0
  %198 = vmatpush1.msra.mxu0 0.0
  %199 = vmatprep.subr.mxu0 0.0
  %200 = vmatpush1.msra.mxu0 0.0
  %201 = vmatprep.subr.mxu0 0.0
  %202 = vmatpush1.msra.mxu0 0.0
  %203 = vmatprep.subr.mxu0 0.0
  %204 = vmatpush1.msra.mxu0 0.0
  %205 = vmatprep.subr.mxu0 0.0
  %206 = vmatpush1.msra.mxu0 0.0
  %207 = vmatprep.subr.mxu0 0.0
  %208 = vmatpush1.msra.mxu0 0.0
  %209 = vmatprep.subr.mxu0 0.0
  %210 = vmatpush1.msra.mxu0 0.0
  %211 = vmatprep.subr.mxu0 0.0
  %212 = vmatpush1.msra.mxu0 0.0
  %213 = vmatprep.subr.mxu0 0.0
  %214 = vmatpush1.msra.mxu0 0.0
  %215 = vmatprep.subr.mxu0 0.0
  %216 = vmatpush1.msra.mxu0 0.0
  %217 = vmatprep.subr.mxu0 0.0
  %218 = vmatpush1.msra.mxu0 0.0
  %219 = vmatprep.subr.mxu0 0.0
  %220 = vmatpush1.msra.mxu0 0.0
  %221 = vmatprep.subr.mxu0 0.0
  %222 = vmatpush1.msra.mxu0 0.0
  %223 = vmatprep.subr.mxu0 0.0
  %224 = vmatpush1.msra.mxu0 0.0
  %225 = vmatprep.subr.mxu0 0.0
  %226 = vmatpush1.msra.mxu0 0.0
  %227 = vmatprep.subr.mxu0 0.0
  %228 = vmatpush1.msra.mxu0 0.0
  %229 = vmatprep.subr.mxu0 0.0
  %230 = vmatpush1.msra.mxu0 0.0
  %231 = vmatprep.subr.mxu0 0.0
  %232 = vmatpush1.msra.mxu0 0.0
  %233 = vmatprep.subr.mxu0 0.0
  %234 = vmatpush1.msra.mxu0 0.0
  %235 = vmatprep.subr.mxu0 0.0
  %236 = vmatpush1.msra.mxu0 0.0
  %237 = vmatprep.subr.mxu0 0.0
  %238 = vmatpush1.msra.mxu0 0.0
  %239 = vmatprep.subr.mxu0 0.0
  %240 = vmatpush1.msra.mxu0 0.0
  %241 = vmatprep.mubr.f32.mxu0 0.0
  %242 = vmatmul.mubr.f32.gmra.mrb[0].mxu0 %v86
  %v243 = vpop.f32.mrb[0].mxu0
  %v244 = vadd.f32 %v175, %v243
  %v245 = vpop.f32.mrb[0].mxu0
  %246 = vmatprep.mubr.f32.mxu0 0.0
  %247 = vmatmul.mubr.f32.gmra.mrb[0].mxu0 %v89
  %v248 = vpop.f32.mrb[0].mxu0
  %v249 = vadd.f32 %v175, %v248
  %v250 = vpop.f32.mrb[0].mxu0
  %251 = vdwg.mxu0
  %v252 = vxor.u32 %v244, 2147483648
  %v253 = vxor.u32 %v249, 2147483648
  %v254 = vmul.f32 %v252, 1.442695
  %v255 = vpow.pop %v254
  %v256 = vmul.f32 %v253, 1.442695
  %v257 = vpow.pop %v256
  %v258 = vadd.f32 %v255, 1.0
  %v259 = vadd.f32 %v257, 1.0
  %v260 = vrcp.pop %v258
  %v261 = vmul.f32 1.0, %v260
  %v262 = vrcp.pop %v259
  %v263 = vmul.f32 1.0, %v262
  %v264 = vmul.f32 %v158, %v261
  %v265 = vmul.f32 %v163, %v263
  %266 = vst.msk [vmem:[%s7] sm:$0xff] %vm30, %v264
  %267 = vst.msk [vmem:[%s7 + $0x8] sm:$0xff] %vm30, %v265
  // Predicated region
  $region30: #{_lambda_.25} parent=0 // pred_check
    _
  $region31: #{_lambda_.25} parent=0 // pred_check_branch
    %269 = sbr.rel (0) target = $region33
  $region32: #{_lambda_.25} parent=0 // pred_region
    _
  $region33: #{_lambda_.25} parent=0 // pred_fallthru
    _
  // Predicated region
  $region34: #{_lambda_.25} parent=0 // pred_check
    _
  $region35: #{_lambda_.25} parent=0 // pred_check_branch
    %271 = sbr.rel (0) target = $region37
  $region36: #{_lambda_.25} parent=0 // pred_region
    _
  $region37: #{_lambda_.25} parent=0 // pred_fallthru
    _

// kernel: _lambda_.39
$region0: #{_lambda_.39}
  #allocation0 [shape = 'u32[]', space=smem, size = 0x4, offset = 0x4, fixed_abs, tag = 'smem constant byte address 0x4 - core index']
  #allocation1 [shape = 'u32[144,128]{1,0:T(1,128)}', space=vmem, size = 0x12000, scoped, tag = 'internal scratch']
  %s0 = inlined_call_operand.vmem [shape: f32[16,32], index: 0, kind: input, shape index: {}]
  %s1 = inlined_call_operand.vmem [shape: f32[32,128], index: 1, kind: input, shape index: {}]
  %s2 = inlined_call_operand.vmem [shape: f32[1,128], index: 2, kind: input, shape index: {}]
  %s3 = inlined_call_operand.vmem [shape: f32[16,128], index: 3, kind: output, shape index: {}]
  %s4 = sld [smem:[#allocation0]]
  $region22: #{_lambda_.39} parent=0
    _
  %s6 = ssub.s32 1, %s4
  %s7 = scalar_select 0, %s6, %s4
  // Predicated region
  $region2: #{_lambda_.39} parent=0 // pred_check
    _
  $region3: #{_lambda_.39} parent=0 // pred_check_branch
    %9 = sbr.rel (0) target = $region5
  $region4: #{_lambda_.39} parent=0 // pred_region
    _
  $region5: #{_lambda_.39} parent=0 // pred_fallthru
    _
  // Predicated region
  $region6: #{_lambda_.39} parent=0 // pred_check
    _
  $region7: #{_lambda_.39} parent=0 // pred_check_branch
    %11 = sbr.rel (0) target = $region9
  $region8: #{_lambda_.39} parent=0 // pred_region
    _
  $region9: #{_lambda_.39} parent=0 // pred_fallthru
    _
  // Predicated region
  $region10: #{_lambda_.39} parent=0 // pred_check
    _
  $region11: #{_lambda_.39} parent=0 // pred_check_branch
    %13 = sbr.rel (0) target = $region13
  $region12: #{_lambda_.39} parent=0 // pred_region
    _
  $region13: #{_lambda_.39} parent=0 // pred_fallthru
    _
  %v14 = vld [vmem:[%s0] sm:$0xff]
  %v15 = vld [vmem:[%s0 + $0x8] sm:$0xff]
  %v16 = vld [vmem:[%s1] sm:$0xff]
  %v17 = vld [vmem:[%s1 + $0x8] sm:$0xff]
  %v18 = vld [vmem:[%s1 + $0x10] sm:$0xff]
  %v19 = vld [vmem:[%s1 + $0x18] sm:$0xff]
  %v20 = vld [vmem:[%s2] sm:$0x1]
  %v22 = vlaneseq
  %v23 = vshrl.u32 %v22, 7
  %v24 = vsub.s32 0, %v23
  %v25 = vrot.slane %v20, %v24
  %vm27 = vcmask 261120
  %v29 = vsel %vm27, %v14, 0
  %v32 = vsel %vm27, %v15, 0
  %34 = vmatprep.subr.mxu0 0.0
  %35 = vmatpush1.msra.mxu0 %v16
  %36 = vmatprep.subr.mxu0 0.0
  %37 = vmatpush1.msra.mxu0 %v17
  %38 = vmatprep.subr.mxu0 0.0
  %39 = vmatpush1.msra.mxu0 %v18
  %40 = vmatprep.subr.mxu0 0.0
  %41 = vmatpush1.msra.mxu0 %v19
  %42 = vmatprep.subr.mxu0 0.0
  %43 = vmatpush1.msra.mxu0 0.0
  %44 = vmatprep.subr.mxu0 0.0
  %45 = vmatpush1.msra.mxu0 0.0
  %46 = vmatprep.subr.mxu0 0.0
  %47 = vmatpush1.msra.mxu0 0.0
  %48 = vmatprep.subr.mxu0 0.0
  %49 = vmatpush1.msra.mxu0 0.0
  %50 = vmatprep.subr.mxu0 0.0
  %51 = vmatpush1.msra.mxu0 0.0
  %52 = vmatprep.subr.mxu0 0.0
  %53 = vmatpush1.msra.mxu0 0.0
  %54 = vmatprep.subr.mxu0 0.0
  %55 = vmatpush1.msra.mxu0 0.0
  %56 = vmatprep.subr.mxu0 0.0
  %57 = vmatpush1.msra.mxu0 0.0
  %58 = vmatprep.subr.mxu0 0.0
  %59 = vmatpush1.msra.mxu0 0.0
  %60 = vmatprep.subr.mxu0 0.0
  %61 = vmatpush1.msra.mxu0 0.0
  %62 = vmatprep.subr.mxu0 0.0
  %63 = vmatpush1.msra.mxu0 0.0
  %64 = vmatprep.subr.mxu0 0.0
  %65 = vmatpush1.msra.mxu0 0.0
  %66 = vmatprep.subr.mxu0 0.0
  %67 = vmatpush1.msra.mxu0 0.0
  %68 = vmatprep.subr.mxu0 0.0
  %69 = vmatpush1.msra.mxu0 0.0
  %70 = vmatprep.subr.mxu0 0.0
  %71 = vmatpush1.msra.mxu0 0.0
  %72 = vmatprep.subr.mxu0 0.0
  %73 = vmatpush1.msra.mxu0 0.0
  %74 = vmatprep.subr.mxu0 0.0
  %75 = vmatpush1.msra.mxu0 0.0
  %76 = vmatprep.subr.mxu0 0.0
  %77 = vmatpush1.msra.mxu0 0.0
  %78 = vmatprep.subr.mxu0 0.0
  %79 = vmatpush1.msra.mxu0 0.0
  %80 = vmatprep.subr.mxu0 0.0
  %81 = vmatpush1.msra.mxu0 0.0
  %82 = vmatprep.subr.mxu0 0.0
  %83 = vmatpush1.msra.mxu0 0.0
  %84 = vmatprep.subr.mxu0 0.0
  %85 = vmatpush1.msra.mxu0 0.0
  %86 = vmatprep.subr.mxu0 0.0
  %87 = vmatpush1.msra.mxu0 0.0
  %88 = vmatprep.subr.mxu0 0.0
  %89 = vmatpush1.msra.mxu0 0.0
  %90 = vmatprep.subr.mxu0 0.0
  %91 = vmatpush1.msra.mxu0 0.0
  %92 = vmatprep.subr.mxu0 0.0
  %93 = vmatpush1.msra.mxu0 0.0
  %94 = vmatprep.subr.mxu0 0.0
  %95 = vmatpush1.msra.mxu0 0.0
  %96 = vmatprep.subr.mxu0 0.0
  %97 = vmatpush1.msra.mxu0 0.0
  %98 = vmatprep.mubr.f32.mxu0 0.0
  %99 = vmatmul.mubr.f32.gmra.mrb[0].mxu0 %v29
  %v100 = vpop.f32.mrb[0].mxu0
  %v101 = vadd.f32 %v25, %v100
  %v102 = vpop.f32.mrb[0].mxu0
  %103 = vmatprep.mubr.f32.mxu0 0.0
  %104 = vmatmul.mubr.f32.gmra.mrb[0].mxu0 %v32
  %v105 = vpop.f32.mrb[0].mxu0
  %v106 = vadd.f32 %v25, %v105
  %v107 = vpop.f32.mrb[0].mxu0
  %108 = vdwg.mxu0
  %109 = vst [vmem:[%s3] sm:$0xff] %v101
  %110 = vst [vmem:[%s3 + $0x8] sm:$0xff] %v106
  // Predicated region
  $region14: #{_lambda_.39} parent=0 // pred_check
    _
  $region15: #{_lambda_.39} parent=0 // pred_check_branch
    %112 = sbr.rel (0) target = $region17
  $region16: #{_lambda_.39} parent=0 // pred_region
    _
  $region17: #{_lambda_.39} parent=0 // pred_fallthru
    _
  // Predicated region
  $region18: #{_lambda_.39} parent=0 // pred_check
    _
  $region19: #{_lambda_.39} parent=0 // pred_check_branch
    %114 = sbr.rel (0) target = $region21
  $region20: #{_lambda_.39} parent=0 // pred_region
    _
  $region21: #{_lambda_.39} parent=0 // pred_fallthru
    _

</llo_original>
